<compile_context>
chip_gen: v7x
topology: tpu7x:2x2x1
jax: 0.10.0
libtpu: 0.0.40
codegen_flags: <defaults>
</compile_context>

<pallas_src>
import numpy as np
import jax
import jax.numpy as jnp
from jax import lax
from jax.experimental import pallas as pl
from jax.experimental.pallas import tpu as pltpu


def _cbam_kernel(x_ref, w1t_ref, w2t_ref, wconv_ref, bias_ref, out_ref,
                 pad_ref):
    Bt, H, W, C = x_ref.shape
    Cs = pad_ref.shape[-1]          # min(C, 128) when C % 128 == 0, else C
    n_ct = C // Cs

    inv_hw = 1.0 / float(H * W)
    inv_c = 1.0 / float(C)

    # ------------- Channel attention (fused over Bt images & both pools) -----
    xf = x_ref[...].astype(jnp.float32)                          # (Bt, H, W, C)
    sum_hw = jnp.sum(jnp.sum(xf, axis=1), axis=1)                # (Bt, C)
    max_hw = jnp.max(jnp.max(xf, axis=1), axis=1)                # (Bt, C)
    pooled = jnp.concatenate([sum_hw * inv_hw, max_hw], axis=0)  # (2Bt, C)

    hid = jnp.maximum(
        jnp.dot(pooled, w1t_ref[...], preferred_element_type=jnp.float32),
        0.0)                                                     # (2Bt, hidden)
    y = jnp.dot(hid, w2t_ref[...], preferred_element_type=jnp.float32)
    ca = jax.nn.sigmoid(y[0:Bt, :] + y[Bt:2 * Bt, :])            # (Bt, C)

    # ------------- b-invariant hoists ----------------------------------------
    bias = bias_ref[0]
    w_avg = [wconv_ref[k] for k in range(9)]        # taps, avg-map channel
    w_max = [wconv_ref[9 + k] for k in range(9)]    # taps, max-map channel
    acc_init = jnp.zeros((H, W, Cs), jnp.float32) + bias

    # Zero only the 1-element border of the padded conv maps, once per grid
    # step; the interior is fully overwritten for every image below.
    zrow = jnp.zeros((2, 1, W + 2, Cs), jnp.float32)
    zcol = jnp.zeros((2, H, 1, Cs), jnp.float32)
    pad_ref[:, 0:1, :, :] = zrow
    pad_ref[:, H + 1:H + 2, :, :] = zrow
    pad_ref[:, 1:H + 1, 0:1, :] = zcol
    pad_ref[:, 1:H + 1, W + 1:W + 2, :] = zcol

    # ------------- Per-image spatial attention + single output write ---------
    for b in range(Bt):                      # short static unrolled loop
        ca_row = ca[b:b + 1, :].reshape(1, 1, C)                 # (1, 1, C)

        # Channel reductions of out1 = x*ca, per 128-lane C tile.  out1 is
        # never stored; the output is written exactly once at the end.
        avg_s = None
        max_s = None
        for t in range(n_ct):
            c0 = t * Cs
            o1 = (x_ref[b, :, :, c0:c0 + Cs].astype(jnp.float32)
                  * ca_row[:, :, c0:c0 + Cs])                    # (H, W, Cs)
            s_t = jnp.sum(o1, axis=2, keepdims=True)
            m_t = jnp.max(o1, axis=2, keepdims=True)
            avg_s = s_t if avg_s is None else avg_s + s_t
            max_s = m_t if max_s is None else jnp.maximum(max_s, m_t)
        avg_s = avg_s * inv_c                                    # (H, W, 1)

        # Interior of the padded maps, broadcast over only Cs lanes.
        pad_ref[0, 1:H + 1, 1:W + 1, :] = jnp.broadcast_to(avg_s, (H, W, Cs))
        pad_ref[1, 1:H + 1, 1:W + 1, :] = jnp.broadcast_to(max_s, (H, W, Cs))

        # 3x3 conv (padding=1): 9 taps x 2 maps accumulated in registers,
        # no VMEM read-modify-write.
        acc = acc_init
        for ki in range(3):
            for kj in range(3):
                k = ki * 3 + kj
                acc = (acc
                       + w_avg[k] * pad_ref[0, ki:ki + H, kj:kj + W, :]
                       + w_max[k] * pad_ref[1, ki:ki + H, kj:kj + W, :])
        sa = jax.nn.sigmoid(acc)             # (H, W, Cs), identical on all lanes

        # Single write of the output: x * ca * sa, reusing the same sa vregs
        # for every 128-lane C tile.
        for t in range(n_ct):
            c0 = t * Cs
            out_ref[b, :, :, c0:c0 + Cs] = (
                x_ref[b, :, :, c0:c0 + Cs].astype(jnp.float32)
                * ca_row[:, :, c0:c0 + Cs] * sa
            ).astype(out_ref.dtype)


def _vmem_need_bytes(bt, H, W, C, Cs, hidden, esize_in, esize_out):
    in_block = bt * H * W * C * esize_in
    out_block = bt * H * W * C * esize_out
    weights = 2 * C * hidden * 4
    pad = 2 * (H + 2) * (W + 2) * Cs * 4
    # double-buffered in/out blocks + double-buffered weight blocks + scratch
    return 2 * (in_block + out_block) + 2 * weights + pad


def _pick_block_b(B, H, W, C, Cs, hidden, esize_in, esize_out, budget,
                  prefer_multi_step):
    """Largest divisor of B whose blocks + scratch fit the VMEM budget.  On
    ~64 MiB/TC parts (v7x, 2 TensorCores) keep >= 2 grid steps so the
    'parallel' batch axis can shard across cores."""
    divisors = [d for d in range(1, B + 1) if B % d == 0]
    bt = 1
    for d in divisors:
        if _vmem_need_bytes(d, H, W, C, Cs, hidden, esize_in, esize_out) <= budget:
            bt = d
    if prefer_multi_step and bt == B and B > 1:
        bt = max(d for d in divisors if d < B)
    return bt


def cbam_pallas_nhwc(x_nhwc, w1, w2, wconv, bias, *, block_b=None):
    """NHWC entry point (preferred: avoids NCHW<->NHWC HBM round trips).
    x_nhwc: (B, H, W, C) in f32 or bf16; w1: (hidden, C); w2: (C, hidden);
    wconv: (1, 2, 3, 3); bias: (1,).  Returns (B, H, W, C) in x's dtype."""
    B, H, W, C = x_nhwc.shape
    hidden = w1.shape[0]

    # Spatial-attention maps are broadcast over only min(C, 128) lanes.
    if C > 128 and C % 128 == 0:
        Cs = 128
    else:
        Cs = C

    esize_in = jnp.dtype(x_nhwc.dtype).itemsize
    esize_out = esize_in

    try:
        vmem_cap = int(pltpu.get_tpu_info().vmem_capacity_bytes)
    except Exception:
        vmem_cap = 64 << 20        # conservative: v7x per-TensorCore VMEM

    prefer_multi_step = vmem_cap <= (96 << 20)   # ~64 MiB parts have 2 TCs
    budget = int(vmem_cap * 0.7)

    if block_b is None:
        block_b = _pick_block_b(B, H, W, C, Cs, hidden, esize_in, esize_out,
                                budget, prefer_multi_step)
    assert B % block_b == 0, (B, block_b)
    Bt = block_b

    w1t = jnp.transpose(w1).astype(jnp.float32)          # (C, hidden)
    w2t = jnp.transpose(w2).astype(jnp.float32)          # (hidden, C)
    wconv_flat = wconv.astype(jnp.float32).reshape(-1)   # (18,), ic*9 + ki*3 + kj
    bias = bias.astype(jnp.float32)

    need = _vmem_need_bytes(Bt, H, W, C, Cs, hidden, esize_in, esize_out)
    vmem_limit = int(min(vmem_cap, max(need + (4 << 20), 32 << 20)))

    grid_spec = pltpu.PrefetchScalarGridSpec(
        num_scalar_prefetch=0,
        grid=(B // Bt,),
        in_specs=[
            pl.BlockSpec((Bt, H, W, C), lambda g: (g, 0, 0, 0)),
            pl.BlockSpec((C, hidden), lambda g: (0, 0)),
            pl.BlockSpec((hidden, C), lambda g: (0, 0)),
            pl.BlockSpec(memory_space=pltpu.MemorySpace.SMEM),   # wconv (18,)
            pl.BlockSpec(memory_space=pltpu.MemorySpace.SMEM),   # bias (1,)
        ],
        out_specs=pl.BlockSpec((Bt, H, W, C), lambda g: (g, 0, 0, 0)),
        scratch_shapes=[
            pltpu.VMEM((2, H + 2, W + 2, Cs), jnp.float32),   # padded conv maps
        ],
    )

    return pl.pallas_call(
        _cbam_kernel,
        out_shape=jax.ShapeDtypeStruct((B, H, W, C), x_nhwc.dtype),
        grid_spec=grid_spec,
        compiler_params=pltpu.CompilerParams(
            dimension_semantics=("parallel",),
            vmem_limit_bytes=vmem_limit),
    )(x_nhwc, w1t, w2t, wconv_flat, bias)


def cbam_pallas(x_nchw, w1, w2, wconv, bias, *, block_b=None):
    """NCHW wrapper matching the PyTorch module.  If the surrounding model can
    produce/consume NHWC (and bf16), call cbam_pallas_nhwc directly and skip
    these two transposes (an extra HBM round trip around a mem-bound kernel)."""
    x_nhwc = jnp.transpose(x_nchw, (0, 2, 3, 1))
    out_nhwc = cbam_pallas_nhwc(x_nhwc, w1, w2, wconv, bias, block_b=block_b)
    return jnp.transpose(out_nhwc, (0, 3, 1, 2))


def cbam_ref(x, w1, w2, wconv, bias):
    """Pure-JAX reference matching the PyTorch module (NCHW)."""
    avg = jnp.mean(x, axis=(2, 3))                   # (B, C)
    mx = jnp.max(x, axis=(2, 3))                     # (B, C)

    def mlp(v):
        return jnp.maximum(v @ w1.T, 0.0) @ w2.T

    ca = jax.nn.sigmoid(mlp(avg) + mlp(mx))          # (B, C)
    out1 = x * ca[:, :, None, None]

    avg_s = jnp.mean(out1, axis=1, keepdims=True)
    max_s = jnp.max(out1, axis=1, keepdims=True)
    inp = jnp.concatenate([avg_s, max_s], axis=1)    # (B, 2, H, W)
    conv = lax.conv_general_dilated(
        inp, wconv, window_strides=(1, 1), padding=((1, 1), (1, 1)),
        dimension_numbers=("NCHW", "OIHW", "NCHW"))
    sa = jax.nn.sigmoid(conv + bias[None, :, None, None])
    return out1 * sa


if __name__ == "__main__":
    B, C, H, W = 2, 16, 16, 16
    ratio = 4
    hidden = C // ratio

    key = jax.random.PRNGKey(0)
    kx, k1, k2, k3, k4 = jax.random.split(key, 5)
    x = jax.random.normal(kx, (B, C, H, W), jnp.float32)
    w1 = jax.random.normal(k1, (hidden, C), jnp.float32) * 0.2      # Conv2d(C, C//r, 1)
    w2 = jax.random.normal(k2, (C, hidden), jnp.float32) * 0.2      # Conv2d(C//r, C, 1)
    wconv = jax.random.normal(k3, (1, 2, 3, 3), jnp.float32) * 0.2  # Conv2d(2, 1, 3, pad=1)
    bias = jax.random.normal(k4, (1,), jnp.float32) * 0.2

    out = jax.block_until_ready(cbam_pallas(x, w1, w2, wconv, bias))
    ref = jax.block_until_ready(cbam_ref(x, w1, w2, wconv, bias))

    assert out.shape == (B, C, H, W), out.shape
    err = float(np.max(np.abs(np.asarray(out) - np.asarray(ref))))
    assert np.allclose(np.asarray(out), np.asarray(ref), rtol=2e-3, atol=2e-3), err

    print("KERNEL_OK")
</pallas_src>

<mosaic_0001>
module attributes {stable_mosaic.version = 11 : i64} {
  func.func @_cbam_kernel(%arg0: i32, %arg1: memref<1x16x16x16xf32, #tpu.memory_space<vmem>>, %arg2: memref<16x4xf32, #tpu.memory_space<vmem>>, %arg3: memref<4x16xf32, #tpu.memory_space<vmem>>, %arg4: memref<18xf32, #tpu.memory_space<smem>>, %arg5: memref<1xf32, #tpu.memory_space<smem>>, %arg6: memref<1x16x16x16xf32, #tpu.memory_space<vmem>>, %arg7: memref<2x18x18x16xf32, #tpu.memory_space<vmem>>) attributes {dimension_semantics = [#tpu.dimension_semantics<parallel>], iteration_bounds = array<i64: 2>, scalar_prefetch = 0 : i64, scratch_operands = 1 : i64, tpu.core_type = #tpu.core_type<tc>, window_params = [{transform_indices = @transform_0, window_bounds = array<i64: 1, 16, 16, 16>}, {pipeline_mode = #tpu.pipeline_mode<synchronous>, transform_indices = @transform_1, window_bounds = array<i64: 16, 4>}, {pipeline_mode = #tpu.pipeline_mode<synchronous>, transform_indices = @transform_2, window_bounds = array<i64: 4, 16>}, {transform_indices = @transform_3, window_bounds = array<i64: 18>}, {transform_indices = @transform_4, window_bounds = array<i64: 1>}, {transform_indices = @transform_5, window_bounds = array<i64: 1, 16, 16, 16>}]} {
    %c0 = arith.constant 0 : index
    %c0_0 = arith.constant 0 : index
    %c0_1 = arith.constant 0 : index
    %c0_2 = arith.constant 0 : index
    %0 = vector.load %arg1[%c0, %c0_0, %c0_1, %c0_2] : memref<1x16x16x16xf32, #tpu.memory_space<vmem>>, vector<1x16x16x16xf32>
    %cst = arith.constant dense<0.000000e+00> : vector<1x16x16xf32>
    %1 = vector.multi_reduction <add>, %0, %cst [1] : vector<1x16x16x16xf32> to vector<1x16x16xf32>
    %cst_3 = arith.constant dense<0.000000e+00> : vector<1x16xf32>
    %2 = vector.multi_reduction <add>, %1, %cst_3 [1] : vector<1x16x16xf32> to vector<1x16xf32>
    %cst_4 = arith.constant dense<0xFF800000> : vector<1x16x16xf32>
    %3 = vector.multi_reduction <maximumf>, %0, %cst_4 [1] : vector<1x16x16x16xf32> to vector<1x16x16xf32>
    %cst_5 = arith.constant dense<0xFF800000> : vector<1x16xf32>
    %4 = vector.multi_reduction <maximumf>, %3, %cst_5 [1] : vector<1x16x16xf32> to vector<1x16xf32>
    %cst_6 = arith.constant 3.906250e-03 : f32
    %5 = vector.broadcast %cst_6 : f32 to vector<1x16xf32>
    %6 = arith.mulf %2, %5 : vector<1x16xf32>
    %7 = tpu.concatenate %6, %4 in 0 : vector<1x16xf32>, vector<1x16xf32> -> vector<2x16xf32>
    %c0_7 = arith.constant 0 : index
    %c0_8 = arith.constant 0 : index
    %8 = vector.load %arg2[%c0_7, %c0_8] : memref<16x4xf32, #tpu.memory_space<vmem>>, vector<16x4xf32>
    %cst_9 = arith.constant dense<0.000000e+00> : vector<2x4xf32>
    %9 = tpu.matmul %7, %8, %cst_9 {dimension_numbers = #tpu.dot_dimension_numbers<[1], [0], [0], [1], [0, 0, 1, 1], [], []>} : vector<2x16xf32>, vector<16x4xf32>, vector<2x4xf32> -> vector<2x4xf32>
    %cst_10 = arith.constant 0.000000e+00 : f32
    %10 = vector.broadcast %cst_10 : f32 to vector<2x4xf32>
    %11 = arith.maximumf %9, %10 : vector<2x4xf32>
    %c0_11 = arith.constant 0 : index
    %c0_12 = arith.constant 0 : index
    %12 = vector.load %arg3[%c0_11, %c0_12] : memref<4x16xf32, #tpu.memory_space<vmem>>, vector<4x16xf32>
    %cst_13 = arith.constant dense<0.000000e+00> : vector<2x16xf32>
    %13 = tpu.matmul %11, %12, %cst_13 {dimension_numbers = #tpu.dot_dimension_numbers<[1], [0], [0], [1], [0, 0, 1, 1], [], []>} : vector<2x4xf32>, vector<4x16xf32>, vector<2x16xf32> -> vector<2x16xf32>
    %14 = vector.extract_strided_slice %13 {offsets = [0, 0], sizes = [1, 16], strides = [1, 1]} : vector<2x16xf32> to vector<1x16xf32>
    %15 = vector.extract_strided_slice %13 {offsets = [1, 0], sizes = [1, 16], strides = [1, 1]} : vector<2x16xf32> to vector<1x16xf32>
    %16 = arith.addf %14, %15 : vector<1x16xf32>
    %17 = arith.negf %16 : vector<1x16xf32>
    %18 = math.exp %17 : vector<1x16xf32>
    %cst_14 = arith.constant 1.000000e+00 : f32
    %19 = vector.broadcast %cst_14 : f32 to vector<1x16xf32>
    %20 = arith.addf %19, %18 : vector<1x16xf32>
    %21 = arith.divf %19, %20 : vector<1x16xf32>
    %c0_15 = arith.constant 0 : index
    %22 = memref.load %arg5[%c0_15] : memref<1xf32, #tpu.memory_space<smem>>
    %c0_16 = arith.constant 0 : index
    %23 = memref.load %arg4[%c0_16] : memref<18xf32, #tpu.memory_space<smem>>
    %c1 = arith.constant 1 : index
    %24 = memref.load %arg4[%c1] : memref<18xf32, #tpu.memory_space<smem>>
    %c2 = arith.constant 2 : index
    %25 = memref.load %arg4[%c2] : memref<18xf32, #tpu.memory_space<smem>>
    %c3 = arith.constant 3 : index
    %26 = memref.load %arg4[%c3] : memref<18xf32, #tpu.memory_space<smem>>
    %c4 = arith.constant 4 : index
    %27 = memref.load %arg4[%c4] : memref<18xf32, #tpu.memory_space<smem>>
    %c5 = arith.constant 5 : index
    %28 = memref.load %arg4[%c5] : memref<18xf32, #tpu.memory_space<smem>>
    %c6 = arith.constant 6 : index
    %29 = memref.load %arg4[%c6] : memref<18xf32, #tpu.memory_space<smem>>
    %c7 = arith.constant 7 : index
    %30 = memref.load %arg4[%c7] : memref<18xf32, #tpu.memory_space<smem>>
    %c8 = arith.constant 8 : index
    %31 = memref.load %arg4[%c8] : memref<18xf32, #tpu.memory_space<smem>>
    %c9 = arith.constant 9 : index
    %32 = memref.load %arg4[%c9] : memref<18xf32, #tpu.memory_space<smem>>
    %c10 = arith.constant 10 : index
    %33 = memref.load %arg4[%c10] : memref<18xf32, #tpu.memory_space<smem>>
    %c11 = arith.constant 11 : index
    %34 = memref.load %arg4[%c11] : memref<18xf32, #tpu.memory_space<smem>>
    %c12 = arith.constant 12 : index
    %35 = memref.load %arg4[%c12] : memref<18xf32, #tpu.memory_space<smem>>
    %c13 = arith.constant 13 : index
    %36 = memref.load %arg4[%c13] : memref<18xf32, #tpu.memory_space<smem>>
    %c14 = arith.constant 14 : index
    %37 = memref.load %arg4[%c14] : memref<18xf32, #tpu.memory_space<smem>>
    %c15 = arith.constant 15 : index
    %38 = memref.load %arg4[%c15] : memref<18xf32, #tpu.memory_space<smem>>
    %c16 = arith.constant 16 : index
    %39 = memref.load %arg4[%c16] : memref<18xf32, #tpu.memory_space<smem>>
    %c17 = arith.constant 17 : index
    %40 = memref.load %arg4[%c17] : memref<18xf32, #tpu.memory_space<smem>>
    %cst_17 = arith.constant 0.000000e+00 : f32
    %41 = vector.broadcast %cst_17 : f32 to vector<16x16x16xf32>
    %42 = vector.broadcast %22 : f32 to vector<16x16x16xf32>
    %43 = arith.addf %41, %42 : vector<16x16x16xf32>
    %cst_18 = arith.constant 0.000000e+00 : f32
    %44 = vector.broadcast %cst_18 : f32 to vector<2x1x18x16xf32>
    %cst_19 = arith.constant 0.000000e+00 : f32
    %45 = vector.broadcast %cst_19 : f32 to vector<2x16x1x16xf32>
    %c0_20 = arith.constant 0 : index
    %c0_21 = arith.constant 0 : index
    %c0_22 = arith.constant 0 : index
    %c0_23 = arith.constant 0 : index
    %46 = vector.load %arg7[%c0_20, %c0_21, %c0_22, %c0_23] : memref<2x18x18x16xf32, #tpu.memory_space<vmem>>, vector<2x1x18x16xf32>
    tpu.vector_store %arg7[%c0_20, %c0_21, %c0_22, %c0_23], %44 {strides = array<i32>} : memref<2x18x18x16xf32, #tpu.memory_space<vmem>>, vector<2x1x18x16xf32>,
    %c0_24 = arith.constant 0 : index
    %c17_25 = arith.constant 17 : index
    %c0_26 = arith.constant 0 : index
    %c0_27 = arith.constant 0 : index
    %47 = vector.load %arg7[%c0_24, %c17_25, %c0_26, %c0_27] : memref<2x18x18x16xf32, #tpu.memory_space<vmem>>, vector<2x1x18x16xf32>
    tpu.vector_store %arg7[%c0_24, %c17_25, %c0_26, %c0_27], %44 {strides = array<i32>} : memref<2x18x18x16xf32, #tpu.memory_space<vmem>>, vector<2x1x18x16xf32>,
    %c0_28 = arith.constant 0 : index
    %c1_29 = arith.constant 1 : index
    %c0_30 = arith.constant 0 : index
    %c0_31 = arith.constant 0 : index
    %48 = vector.load %arg7[%c0_28, %c1_29, %c0_30, %c0_31] : memref<2x18x18x16xf32, #tpu.memory_space<vmem>>, vector<2x16x1x16xf32>
    tpu.vector_store %arg7[%c0_28, %c1_29, %c0_30, %c0_31], %45 {strides = array<i32>} : memref<2x18x18x16xf32, #tpu.memory_space<vmem>>, vector<2x16x1x16xf32>,
    %c0_32 = arith.constant 0 : index
    %c1_33 = arith.constant 1 : index
    %c17_34 = arith.constant 17 : index
    %c0_35 = arith.constant 0 : index
    %49 = vector.load %arg7[%c0_32, %c1_33, %c17_34, %c0_35] : memref<2x18x18x16xf32, #tpu.memory_space<vmem>>, vector<2x16x1x16xf32>
    tpu.vector_store %arg7[%c0_32, %c1_33, %c17_34, %c0_35], %45 {strides = array<i32>} : memref<2x18x18x16xf32, #tpu.memory_space<vmem>>, vector<2x16x1x16xf32>,
    %50 = vector.shape_cast %21 : vector<1x16xf32> to vector<1x1x16xf32>
    %c0_36 = arith.constant 0 : index
    %c0_37 = arith.constant 0 : index
    %c0_38 = arith.constant 0 : index
    %c0_39 = arith.constant 0 : index
    %51 = vector.load %arg1[%c0_36, %c0_37, %c0_38, %c0_39] : memref<1x16x16x16xf32, #tpu.memory_space<vmem>>, vector<1x16x16x16xf32>
    %52 = vector.shape_cast %51 : vector<1x16x16x16xf32> to vector<16x16x16xf32>
    %53 = vector.broadcast %50 : vector<1x1x16xf32> to vector<16x16x16xf32>
    %54 = arith.mulf %52, %53 : vector<16x16x16xf32>
    %cst_40 = arith.constant dense<0.000000e+00> : vector<16x16xf32>
    %55 = vector.multi_reduction <add>, %54, %cst_40 [2] : vector<16x16x16xf32> to vector<16x16xf32>
    %56 = vector.shape_cast %55 : vector<16x16xf32> to vector<16x16x1xf32>
    %cst_41 = arith.constant dense<0xFF800000> : vector<16x16xf32>
    %57 = vector.multi_reduction <maximumf>, %54, %cst_41 [2] : vector<16x16x16xf32> to vector<16x16xf32>
    %58 = vector.shape_cast %57 : vector<16x16xf32> to vector<16x16x1xf32>
    %cst_42 = arith.constant 6.250000e-02 : f32
    %59 = vector.broadcast %cst_42 : f32 to vector<16x16x1xf32>
    %60 = arith.mulf %56, %59 : vector<16x16x1xf32>
    %61 = vector.shape_cast %60 : vector<16x16x1xf32> to vector<16x16x1xf32>
    %62 = vector.broadcast %61 : vector<16x16x1xf32> to vector<16x16x16xf32>
    %c0_43 = arith.constant 0 : index
    %c1_44 = arith.constant 1 : index
    %c1_45 = arith.constant 1 : index
    %c0_46 = arith.constant 0 : index
    %63 = vector.load %arg7[%c0_43, %c1_44, %c1_45, %c0_46] : memref<2x18x18x16xf32, #tpu.memory_space<vmem>>, vector<1x16x16x16xf32>
    %64 = vector.shape_cast %63 : vector<1x16x16x16xf32> to vector<16x16x16xf32>
    %65 = vector.shape_cast %62 : vector<16x16x16xf32> to vector<1x16x16x16xf32>
    tpu.vector_store %arg7[%c0_43, %c1_44, %c1_45, %c0_46], %65 {strides = array<i32>} : memref<2x18x18x16xf32, #tpu.memory_space<vmem>>, vector<1x16x16x16xf32>,
    %66 = vector.shape_cast %58 : vector<16x16x1xf32> to vector<16x16x1xf32>
    %67 = vector.broadcast %66 : vector<16x16x1xf32> to vector<16x16x16xf32>
    %c1_47 = arith.constant 1 : index
    %c1_48 = arith.constant 1 : index
    %c1_49 = arith.constant 1 : index
    %c0_50 = arith.constant 0 : index
    %68 = vector.load %arg7[%c1_47, %c1_48, %c1_49, %c0_50] : memref<2x18x18x16xf32, #tpu.memory_space<vmem>>, vector<1x16x16x16xf32>
    %69 = vector.shape_cast %68 : vector<1x16x16x16xf32> to vector<16x16x16xf32>
    %70 = vector.shape_cast %67 : vector<16x16x16xf32> to vector<1x16x16x16xf32>
    tpu.vector_store %arg7[%c1_47, %c1_48, %c1_49, %c0_50], %70 {strides = array<i32>} : memref<2x18x18x16xf32, #tpu.memory_space<vmem>>, vector<1x16x16x16xf32>,
    %c0_51 = arith.constant 0 : index
    %c0_52 = arith.constant 0 : index
    %c0_53 = arith.constant 0 : index
    %c0_54 = arith.constant 0 : index
    %71 = vector.load %arg7[%c0_51, %c0_52, %c0_53, %c0_54] : memref<2x18x18x16xf32, #tpu.memory_space<vmem>>, vector<1x16x16x16xf32>
    %72 = vector.shape_cast %71 : vector<1x16x16x16xf32> to vector<16x16x16xf32>
    %73 = vector.broadcast %23 : f32 to vector<16x16x16xf32>
    %74 = arith.mulf %73, %72 : vector<16x16x16xf32>
    %75 = arith.addf %43, %74 : vector<16x16x16xf32>
    %c1_55 = arith.constant 1 : index
    %c0_56 = arith.constant 0 : index
    %c0_57 = arith.constant 0 : index
    %c0_58 = arith.constant 0 : index
    %76 = vector.load %arg7[%c1_55, %c0_56, %c0_57, %c0_58] : memref<2x18x18x16xf32, #tpu.memory_space<vmem>>, vector<1x16x16x16xf32>
    %77 = vector.shape_cast %76 : vector<1x16x16x16xf32> to vector<16x16x16xf32>
    %78 = vector.broadcast %32 : f32 to vector<16x16x16xf32>
    %79 = arith.mulf %78, %77 : vector<16x16x16xf32>
    %80 = arith.addf %75, %79 : vector<16x16x16xf32>
    %c0_59 = arith.constant 0 : index
    %c0_60 = arith.constant 0 : index
    %c1_61 = arith.constant 1 : index
    %c0_62 = arith.constant 0 : index
    %81 = vector.load %arg7[%c0_59, %c0_60, %c1_61, %c0_62] : memref<2x18x18x16xf32, #tpu.memory_space<vmem>>, vector<1x16x16x16xf32>
    %82 = vector.shape_cast %81 : vector<1x16x16x16xf32> to vector<16x16x16xf32>
    %83 = vector.broadcast %24 : f32 to vector<16x16x16xf32>
    %84 = arith.mulf %83, %82 : vector<16x16x16xf32>
    %85 = arith.addf %80, %84 : vector<16x16x16xf32>
    %c1_63 = arith.constant 1 : index
    %c0_64 = arith.constant 0 : index
    %c1_65 = arith.constant 1 : index
    %c0_66 = arith.constant 0 : index
    %86 = vector.load %arg7[%c1_63, %c0_64, %c1_65, %c0_66] : memref<2x18x18x16xf32, #tpu.memory_space<vmem>>, vector<1x16x16x16xf32>
    %87 = vector.shape_cast %86 : vector<1x16x16x16xf32> to vector<16x16x16xf32>
    %88 = vector.broadcast %33 : f32 to vector<16x16x16xf32>
    %89 = arith.mulf %88, %87 : vector<16x16x16xf32>
    %90 = arith.addf %85, %89 : vector<16x16x16xf32>
    %c0_67 = arith.constant 0 : index
    %c0_68 = arith.constant 0 : index
    %c2_69 = arith.constant 2 : index
    %c0_70 = arith.constant 0 : index
    %91 = vector.load %arg7[%c0_67, %c0_68, %c2_69, %c0_70] : memref<2x18x18x16xf32, #tpu.memory_space<vmem>>, vector<1x16x16x16xf32>
    %92 = vector.shape_cast %91 : vector<1x16x16x16xf32> to vector<16x16x16xf32>
    %93 = vector.broadcast %25 : f32 to vector<16x16x16xf32>
    %94 = arith.mulf %93, %92 : vector<16x16x16xf32>
    %95 = arith.addf %90, %94 : vector<16x16x16xf32>
    %c1_71 = arith.constant 1 : index
    %c0_72 = arith.constant 0 : index
    %c2_73 = arith.constant 2 : index
    %c0_74 = arith.constant 0 : index
    %96 = vector.load %arg7[%c1_71, %c0_72, %c2_73, %c0_74] : memref<2x18x18x16xf32, #tpu.memory_space<vmem>>, vector<1x16x16x16xf32>
    %97 = vector.shape_cast %96 : vector<1x16x16x16xf32> to vector<16x16x16xf32>
    %98 = vector.broadcast %34 : f32 to vector<16x16x16xf32>
    %99 = arith.mulf %98, %97 : vector<16x16x16xf32>
    %100 = arith.addf %95, %99 : vector<16x16x16xf32>
    %c0_75 = arith.constant 0 : index
    %c1_76 = arith.constant 1 : index
    %c0_77 = arith.constant 0 : index
    %c0_78 = arith.constant 0 : index
    %101 = vector.load %arg7[%c0_75, %c1_76, %c0_77, %c0_78] : memref<2x18x18x16xf32, #tpu.memory_space<vmem>>, vector<1x16x16x16xf32>
    %102 = vector.shape_cast %101 : vector<1x16x16x16xf32> to vector<16x16x16xf32>
    %103 = vector.broadcast %26 : f32 to vector<16x16x16xf32>
    %104 = arith.mulf %103, %102 : vector<16x16x16xf32>
    %105 = arith.addf %100, %104 : vector<16x16x16xf32>
    %c1_79 = arith.constant 1 : index
    %c1_80 = arith.constant 1 : index
    %c0_81 = arith.constant 0 : index
    %c0_82 = arith.constant 0 : index
    %106 = vector.load %arg7[%c1_79, %c1_80, %c0_81, %c0_82] : memref<2x18x18x16xf32, #tpu.memory_space<vmem>>, vector<1x16x16x16xf32>
    %107 = vector.shape_cast %106 : vector<1x16x16x16xf32> to vector<16x16x16xf32>
    %108 = vector.broadcast %35 : f32 to vector<16x16x16xf32>
    %109 = arith.mulf %108, %107 : vector<16x16x16xf32>
    %110 = arith.addf %105, %109 : vector<16x16x16xf32>
    %c0_83 = arith.constant 0 : index
    %c1_84 = arith.constant 1 : index
    %c1_85 = arith.constant 1 : index
    %c0_86 = arith.constant 0 : index
    %111 = vector.load %arg7[%c0_83, %c1_84, %c1_85, %c0_86] : memref<2x18x18x16xf32, #tpu.memory_space<vmem>>, vector<1x16x16x16xf32>
    %112 = vector.shape_cast %111 : vector<1x16x16x16xf32> to vector<16x16x16xf32>
    %113 = vector.broadcast %27 : f32 to vector<16x16x16xf32>
    %114 = arith.mulf %113, %112 : vector<16x16x16xf32>
    %115 = arith.addf %110, %114 : vector<16x16x16xf32>
    %c1_87 = arith.constant 1 : index
    %c1_88 = arith.constant 1 : index
    %c1_89 = arith.constant 1 : index
    %c0_90 = arith.constant 0 : index
    %116 = vector.load %arg7[%c1_87, %c1_88, %c1_89, %c0_90] : memref<2x18x18x16xf32, #tpu.memory_space<vmem>>, vector<1x16x16x16xf32>
    %117 = vector.shape_cast %116 : vector<1x16x16x16xf32> to vector<16x16x16xf32>
    %118 = vector.broadcast %36 : f32 to vector<16x16x16xf32>
    %119 = arith.mulf %118, %117 : vector<16x16x16xf32>
    %120 = arith.addf %115, %119 : vector<16x16x16xf32>
    %c0_91 = arith.constant 0 : index
    %c1_92 = arith.constant 1 : index
    %c2_93 = arith.constant 2 : index
    %c0_94 = arith.constant 0 : index
    %121 = vector.load %arg7[%c0_91, %c1_92, %c2_93, %c0_94] : memref<2x18x18x16xf32, #tpu.memory_space<vmem>>, vector<1x16x16x16xf32>
    %122 = vector.shape_cast %121 : vector<1x16x16x16xf32> to vector<16x16x16xf32>
    %123 = vector.broadcast %28 : f32 to vector<16x16x16xf32>
    %124 = arith.mulf %123, %122 : vector<16x16x16xf32>
    %125 = arith.addf %120, %124 : vector<16x16x16xf32>
    %c1_95 = arith.constant 1 : index
    %c1_96 = arith.constant 1 : index
    %c2_97 = arith.constant 2 : index
    %c0_98 = arith.constant 0 : index
    %126 = vector.load %arg7[%c1_95, %c1_96, %c2_97, %c0_98] : memref<2x18x18x16xf32, #tpu.memory_space<vmem>>, vector<1x16x16x16xf32>
    %127 = vector.shape_cast %126 : vector<1x16x16x16xf32> to vector<16x16x16xf32>
    %128 = vector.broadcast %37 : f32 to vector<16x16x16xf32>
    %129 = arith.mulf %128, %127 : vector<16x16x16xf32>
    %130 = arith.addf %125, %129 : vector<16x16x16xf32>
    %c0_99 = arith.constant 0 : index
    %c2_100 = arith.constant 2 : index
    %c0_101 = arith.constant 0 : index
    %c0_102 = arith.constant 0 : index
    %131 = vector.load %arg7[%c0_99, %c2_100, %c0_101, %c0_102] : memref<2x18x18x16xf32, #tpu.memory_space<vmem>>, vector<1x16x16x16xf32>
    %132 = vector.shape_cast %131 : vector<1x16x16x16xf32> to vector<16x16x16xf32>
    %133 = vector.broadcast %29 : f32 to vector<16x16x16xf32>
    %134 = arith.mulf %133, %132 : vector<16x16x16xf32>
    %135 = arith.addf %130, %134 : vector<16x16x16xf32>
    %c1_103 = arith.constant 1 : index
    %c2_104 = arith.constant 2 : index
    %c0_105 = arith.constant 0 : index
    %c0_106 = arith.constant 0 : index
    %136 = vector.load %arg7[%c1_103, %c2_104, %c0_105, %c0_106] : memref<2x18x18x16xf32, #tpu.memory_space<vmem>>, vector<1x16x16x16xf32>
    %137 = vector.shape_cast %136 : vector<1x16x16x16xf32> to vector<16x16x16xf32>
    %138 = vector.broadcast %38 : f32 to vector<16x16x16xf32>
    %139 = arith.mulf %138, %137 : vector<16x16x16xf32>
    %140 = arith.addf %135, %139 : vector<16x16x16xf32>
    %c0_107 = arith.constant 0 : index
    %c2_108 = arith.constant 2 : index
    %c1_109 = arith.constant 1 : index
    %c0_110 = arith.constant 0 : index
    %141 = vector.load %arg7[%c0_107, %c2_108, %c1_109, %c0_110] : memref<2x18x18x16xf32, #tpu.memory_space<vmem>>, vector<1x16x16x16xf32>
    %142 = vector.shape_cast %141 : vector<1x16x16x16xf32> to vector<16x16x16xf32>
    %143 = vector.broadcast %30 : f32 to vector<16x16x16xf32>
    %144 = arith.mulf %143, %142 : vector<16x16x16xf32>
    %145 = arith.addf %140, %144 : vector<16x16x16xf32>
    %c1_111 = arith.constant 1 : index
    %c2_112 = arith.constant 2 : index
    %c1_113 = arith.constant 1 : index
    %c0_114 = arith.constant 0 : index
    %146 = vector.load %arg7[%c1_111, %c2_112, %c1_113, %c0_114] : memref<2x18x18x16xf32, #tpu.memory_space<vmem>>, vector<1x16x16x16xf32>
    %147 = vector.shape_cast %146 : vector<1x16x16x16xf32> to vector<16x16x16xf32>
    %148 = vector.broadcast %39 : f32 to vector<16x16x16xf32>
    %149 = arith.mulf %148, %147 : vector<16x16x16xf32>
    %150 = arith.addf %145, %149 : vector<16x16x16xf32>
    %c0_115 = arith.constant 0 : index
    %c2_116 = arith.constant 2 : index
    %c2_117 = arith.constant 2 : index
    %c0_118 = arith.constant 0 : index
    %151 = vector.load %arg7[%c0_115, %c2_116, %c2_117, %c0_118] : memref<2x18x18x16xf32, #tpu.memory_space<vmem>>, vector<1x16x16x16xf32>
    %152 = vector.shape_cast %151 : vector<1x16x16x16xf32> to vector<16x16x16xf32>
    %153 = vector.broadcast %31 : f32 to vector<16x16x16xf32>
    %154 = arith.mulf %153, %152 : vector<16x16x16xf32>
    %155 = arith.addf %150, %154 : vector<16x16x16xf32>
    %c1_119 = arith.constant 1 : index
    %c2_120 = arith.constant 2 : index
    %c2_121 = arith.constant 2 : index
    %c0_122 = arith.constant 0 : index
    %156 = vector.load %arg7[%c1_119, %c2_120, %c2_121, %c0_122] : memref<2x18x18x16xf32, #tpu.memory_space<vmem>>, vector<1x16x16x16xf32>
    %157 = vector.shape_cast %156 : vector<1x16x16x16xf32> to vector<16x16x16xf32>
    %158 = vector.broadcast %40 : f32 to vector<16x16x16xf32>
    %159 = arith.mulf %158, %157 : vector<16x16x16xf32>
    %160 = arith.addf %155, %159 : vector<16x16x16xf32>
    %161 = arith.negf %160 : vector<16x16x16xf32>
    %162 = math.exp %161 : vector<16x16x16xf32>
    %cst_123 = arith.constant 1.000000e+00 : f32
    %163 = vector.broadcast %cst_123 : f32 to vector<16x16x16xf32>
    %164 = arith.addf %163, %162 : vector<16x16x16xf32>
    %165 = arith.divf %163, %164 : vector<16x16x16xf32>
    %c0_124 = arith.constant 0 : index
    %c0_125 = arith.constant 0 : index
    %c0_126 = arith.constant 0 : index
    %c0_127 = arith.constant 0 : index
    %166 = vector.load %arg1[%c0_124, %c0_125, %c0_126, %c0_127] : memref<1x16x16x16xf32, #tpu.memory_space<vmem>>, vector<1x16x16x16xf32>
    %167 = vector.shape_cast %166 : vector<1x16x16x16xf32> to vector<16x16x16xf32>
    %168 = vector.broadcast %50 : vector<1x1x16xf32> to vector<16x16x16xf32>
    %169 = arith.mulf %167, %168 : vector<16x16x16xf32>
    %170 = arith.mulf %169, %165 : vector<16x16x16xf32>
    %c0_128 = arith.constant 0 : index
    %c0_129 = arith.constant 0 : index
    %c0_130 = arith.constant 0 : index
    %c0_131 = arith.constant 0 : index
    %171 = vector.load %arg6[%c0_128, %c0_129, %c0_130, %c0_131] : memref<1x16x16x16xf32, #tpu.memory_space<vmem>>, vector<1x16x16x16xf32>
    %172 = vector.shape_cast %171 : vector<1x16x16x16xf32> to vector<16x16x16xf32>
    %173 = vector.shape_cast %170 : vector<16x16x16xf32> to vector<1x16x16x16xf32>
    tpu.vector_store %arg6[%c0_128, %c0_129, %c0_130, %c0_131], %173 {strides = array<i32>} : memref<1x16x16x16xf32, #tpu.memory_space<vmem>>, vector<1x16x16x16xf32>,
    return
  }
  func.func @transform_0(%arg0: i32) -> (i32, i32, i32, i32) {
    %c0_i32 = arith.constant 0 : i32
    %c0_i32_0 = arith.constant 0 : i32
    %c0_i32_1 = arith.constant 0 : i32
    %c0_i32_2 = arith.constant 0 : i32
    return %arg0, %c0_i32, %c0_i32_0, %c0_i32_1 : i32, i32, i32, i32
  }
  func.func @transform_1(%arg0: i32) -> (i32, i32) {
    %c0_i32 = arith.constant 0 : i32
    %c0_i32_0 = arith.constant 0 : i32
    %c0_i32_1 = arith.constant 0 : i32
    return %c0_i32, %c0_i32_0 : i32, i32
  }
  func.func @transform_2(%arg0: i32) -> (i32, i32) {
    %c0_i32 = arith.constant 0 : i32
    %c0_i32_0 = arith.constant 0 : i32
    %c0_i32_1 = arith.constant 0 : i32
    return %c0_i32, %c0_i32_0 : i32, i32
  }
  func.func @transform_3(%arg0: i32) -> i32 {
    %c0_i32 = arith.constant 0 : i32
    %c0_i32_0 = arith.constant 0 : i32
    return %c0_i32 : i32
  }
  func.func @transform_4(%arg0: i32) -> i32 {
    %c0_i32 = arith.constant 0 : i32
    %c0_i32_0 = arith.constant 0 : i32
    return %c0_i32 : i32
  }
  func.func @transform_5(%arg0: i32) -> (i32, i32, i32, i32) {
    %c0_i32 = arith.constant 0 : i32
    %c0_i32_0 = arith.constant 0 : i32
    %c0_i32_1 = arith.constant 0 : i32
    %c0_i32_2 = arith.constant 0 : i32
    return %arg0, %c0_i32, %c0_i32_0, %c0_i32_1 : i32, i32, i32, i32
  }
}

</mosaic_0001>

<llo_original>
// kernel: tpu_custom_call.1
$region0: #{tpu_custom_call.1}
  #allocation0 [shape = 'u32[]', space=smem, size = 0x4, offset = 0x4, fixed_abs, tag = 'smem constant byte address 0x4 - core index']
  #allocation1 [shape = 'u32[144,128]{1,0:T(1,128)}', space=vmem, size = 0x12000, scoped, tag = 'internal scratch']
  #allocation2 [shape = 'f32[2,18,18,16]{3,2,1,0:T(8,128)}', space=vmem, size = 0x6c000, scoped, tag = 'scratch operand']
  #allocation3 [shape = 'f32[1]{0:T(128)S(6)}', space=smem, size = 0x200, scoped, tag = 'scoped memory for tpu_custom_call.1']
  %s0 = inlined_call_operand.hbm [shape: f32[2,16,16,16], index: 0, kind: input, shape index: {}]
  %s1 = inlined_call_operand.vmem [shape: f32[16,4], index: 1, kind: input, shape index: {}]
  %s2 = inlined_call_operand.vmem [shape: f32[4,16], index: 2, kind: input, shape index: {}]
  %s3 = inlined_call_operand.vmem [shape: f32[18], index: 3, kind: input, shape index: {}]
  %s4 = inlined_call_operand.<no memory space> [shape: f32[1], index: 4, kind: input, shape index: {}]
  %s5 = inlined_call_operand.hbm [shape: f32[2,16,16,16], index: 5, kind: output, shape index: {}]
  %s6 = sld [smem:[#allocation0]]
  $region61: #{tpu_custom_call.1} parent=0
    _
  %s8 = ssub.s32 1, %s6
  %s9 = scalar_select 0, %s8, %s6
  %10 = sst [smem:[#allocation3]] %s4
  $region1: #{tpu_custom_call.1} parent=0
    #allocation4 [shape = 'u8[262144]{0}', space=vmem, size = 0x40000, scoped, tag = 'input window, operand 0']
    #allocation5 [shape = 's32[2]{0}', space=sflag, size = 0x8, scoped, tag = 'scoped memory for tpu_custom_call.1']
    #allocation6 [shape = 's32[2]{0}', space=sflag, size = 0x8, scoped, tag = 'scoped memory for tpu_custom_call.1']
    #allocation7 [shape = 's32[2]{0}', space=sflag, size = 0x8, scoped, tag = 'scoped memory for tpu_custom_call.1']
    #allocation8 [shape = 'u8[512]{0}', space=smem, size = 0x200, scoped, tag = 'input window, operand 3, single buffered']
    #allocation9 [shape = 'u8[262144]{0}', space=vmem, size = 0x40000, scoped, tag = 'output window, operand 0']
    %11 = vsyncpa [#allocation5], 0
    %s12 = scalar_lea.sflag [#allocation5], 1
    %13 = vsyncpa %s12, 0
    %14 = vsyncpa [#allocation7], 0
    %15 = vsyncpa [#allocation6], 0
    %s16 = scalar_lea.sflag [#allocation6], 1
    %17 = vsyncpa %s16, 0
    loop: start=0, step=1, limit=4
    $region2: #{tpu_custom_call.1} parent=1 // loop_pre_header
      _
    $region3: #{tpu_custom_call.1} parent=1 // loop_header
      %s19 = sphi 0, %s23
      %p20 = scmp.ge.s32.totalorder %s19, 4
      %s29 = sphi 0, %s31
      %s32 = sphi 0, %s29
      %s33 = sphi 0, %s32
      %s49 = sphi 0, %s33
      %s53 = sphi 0, %s53
      %s55 = sphi 0, %s53
      %s56 = sphi 0, %s55
      %s70 = sphi 0, %s56
      %s74 = sphi 0, %s74
      %s76 = sphi 0, %s74
      %s77 = sphi 0, %s76
      %s91 = sphi 0, %s77
      %s95 = sphi 0, %s95
      %s97 = sphi 0, %s95
      %s98 = sphi 0, %s97
      %s112 = sphi 0, %s98
      %s116 = sphi 0, %s116
      %s118 = sphi 0, %s116
      %s119 = sphi 0, %s118
      %s133 = sphi 0, %s119
      %s139 = sphi 0, %s141
      %s142 = sphi 0, %s139
      %s143 = sphi 0, %s142
      %s159 = sphi 0, %s143
    $region4: #{tpu_custom_call.1} parent=1 // loop_header_branch
      %22 = sbr.rel (%p20) target = $region8
    $region5: #{tpu_custom_call.1} parent=1 // loop_body
      %s24 = ssub.s32 %s19, 1
      %s25 = ssub.s32 %s19, 2
      %s26 = sadd.s32 %s19, 1
      %s27 = ssub.s32 %s19, %s26
      %p28 = scmp.eq.s32.totalorder %s27, 0
      %s30 = sadd.s32 %s29, 1
      %s31 = scalar_select %p28, %s29, %s30
      %p34 = pneg %p28
      %p35 = scmp.eq.s32.totalorder %s19, 1
      %p36 = por %p34, %p35
      %p37 = scmp.ne.s32.totalorder %s29, %s32
      %p38 = scmp.eq.s32.totalorder %s19, 0
      %p39 = por %p37, %p38
      %p40 = scmp.ne.s32.totalorder %s29, %s32
      %p41 = scmp.eq.s32.totalorder %s24, 1
      %p42 = por %p40, %p41
      %p43 = scmp.ne.s32.totalorder %s32, %s33
      %p44 = scmp.eq.s32.totalorder %s24, 0
      %p45 = por %p43, %p44
      %p46 = scmp.ne.s32.totalorder %s32, %s33
      %p47 = scmp.eq.s32.totalorder %s25, 1
      %p48 = por %p46, %p47
      %p50 = scmp.ne.s32.totalorder %s33, %s49
      %p51 = scmp.eq.s32.totalorder %s25, 0
      %p52 = por %p50, %p51
      %s54 = sadd.s32 %s53, 1
      %p57 = scmp.eq.s32.totalorder %s19, 1
      %p58 = scmp.ne.s32.totalorder %s53, %s55
      %p59 = scmp.eq.s32.totalorder %s19, 0
      %p60 = por %p58, %p59
      %p61 = scmp.ne.s32.totalorder %s53, %s55
      %p62 = scmp.eq.s32.totalorder %s24, 1
      %p63 = por %p61, %p62
      %p64 = scmp.ne.s32.totalorder %s55, %s56
      %p65 = scmp.eq.s32.totalorder %s24, 0
      %p66 = por %p64, %p65
      %p67 = scmp.ne.s32.totalorder %s55, %s56
      %p68 = scmp.eq.s32.totalorder %s25, 1
      %p69 = por %p67, %p68
      %p71 = scmp.ne.s32.totalorder %s56, %s70
      %p72 = scmp.eq.s32.totalorder %s25, 0
      %p73 = por %p71, %p72
      %s75 = sadd.s32 %s74, 1
      %p78 = scmp.eq.s32.totalorder %s19, 1
      %p79 = scmp.ne.s32.totalorder %s74, %s76
      %p80 = scmp.eq.s32.totalorder %s19, 0
      %p81 = por %p79, %p80
      %p82 = scmp.ne.s32.totalorder %s74, %s76
      %p83 = scmp.eq.s32.totalorder %s24, 1
      %p84 = por %p82, %p83
      %p85 = scmp.ne.s32.totalorder %s76, %s77
      %p86 = scmp.eq.s32.totalorder %s24, 0
      %p87 = por %p85, %p86
      %p88 = scmp.ne.s32.totalorder %s76, %s77
      %p89 = scmp.eq.s32.totalorder %s25, 1
      %p90 = por %p88, %p89
      %p92 = scmp.ne.s32.totalorder %s77, %s91
      %p93 = scmp.eq.s32.totalorder %s25, 0
      %p94 = por %p92, %p93
      %s96 = sadd.s32 %s95, 1
      %p99 = scmp.eq.s32.totalorder %s19, 1
      %p100 = scmp.ne.s32.totalorder %s95, %s97
      %p101 = scmp.eq.s32.totalorder %s19, 0
      %p102 = por %p100, %p101
      %p103 = scmp.ne.s32.totalorder %s95, %s97
      %p104 = scmp.eq.s32.totalorder %s24, 1
      %p105 = por %p103, %p104
      %p106 = scmp.ne.s32.totalorder %s97, %s98
      %p107 = scmp.eq.s32.totalorder %s24, 0
      %p108 = por %p106, %p107
      %p109 = scmp.ne.s32.totalorder %s97, %s98
      %p110 = scmp.eq.s32.totalorder %s25, 1
      %p111 = por %p109, %p110
      %p113 = scmp.ne.s32.totalorder %s98, %s112
      %p114 = scmp.eq.s32.totalorder %s25, 0
      %p115 = por %p113, %p114
      %s117 = sadd.s32 %s116, 1
      %p120 = scmp.eq.s32.totalorder %s19, 1
      %p121 = scmp.ne.s32.totalorder %s116, %s118
      %p122 = scmp.eq.s32.totalorder %s19, 0
      %p123 = por %p121, %p122
      %p124 = scmp.ne.s32.totalorder %s116, %s118
      %p125 = scmp.eq.s32.totalorder %s24, 1
      %p126 = por %p124, %p125
      %p127 = scmp.ne.s32.totalorder %s118, %s119
      %p128 = scmp.eq.s32.totalorder %s24, 0
      %p129 = por %p127, %p128
      %p130 = scmp.ne.s32.totalorder %s118, %s119
      %p131 = scmp.eq.s32.totalorder %s25, 1
      %p132 = por %p130, %p131
      %p134 = scmp.ne.s32.totalorder %s119, %s133
      %p135 = scmp.eq.s32.totalorder %s25, 0
      %p136 = por %p134, %p135
      %s137 = ssub.s32 %s19, %s26
      %p138 = scmp.eq.s32.totalorder %s137, 0
      %s140 = sadd.s32 %s139, 1
      %s141 = scalar_select %p138, %s139, %s140
      %p144 = pneg %p138
      %p145 = scmp.eq.s32.totalorder %s19, 1
      %p146 = por %p144, %p145
      %p147 = scmp.ne.s32.totalorder %s139, %s142
      %p148 = scmp.eq.s32.totalorder %s19, 0
      %p149 = por %p147, %p148
      %p150 = scmp.ne.s32.totalorder %s139, %s142
      %p151 = scmp.eq.s32.totalorder %s24, 1
      %p152 = por %p150, %p151
      %p153 = scmp.ne.s32.totalorder %s142, %s143
      %p154 = scmp.eq.s32.totalorder %s24, 0
      %p155 = por %p153, %p154
      %p156 = scmp.ne.s32.totalorder %s142, %s143
      %p157 = scmp.eq.s32.totalorder %s25, 1
      %p158 = por %p156, %p157
      %p160 = scmp.ne.s32.totalorder %s143, %s159
      %p161 = scmp.eq.s32.totalorder %s25, 0
      %p162 = por %p160, %p161
      %p163 = scmp.le.s32.totalorder 1, %s19
      %p164 = scmp.lt.s32.totalorder %s19, 3
      %p165 = pnand %p163, %p164
      %p166 = pneg %p165
      // Predicated region
      $region9: #{tpu_custom_call.1} parent=5 // pred_check
        _
      $region10: #{tpu_custom_call.1} parent=5 // pred_check_branch
        %168 = sbr.rel (%p165) target = $region12
      $region11: #{tpu_custom_call.1} parent=5 // pred_region
        %s169 = ssub.s32 %s19, 1
        // Predicated region
        $region13: #{tpu_custom_call.1} parent=11 // pred_check
          %p170 = pneg %p66
        $region14: #{tpu_custom_call.1} parent=11 // pred_check_branch
          %172 = sbr.rel (%p170) target = $region16
        $region15: #{tpu_custom_call.1} parent=11 // pred_region
          _
        $region16: #{tpu_custom_call.1} parent=11 // pred_fallthru
          _
        // Predicated region
        $region17: #{tpu_custom_call.1} parent=11 // pred_check
          %p173 = pneg %p87
        $region18: #{tpu_custom_call.1} parent=11 // pred_check_branch
          %175 = sbr.rel (%p173) target = $region20
        $region19: #{tpu_custom_call.1} parent=11 // pred_region
          _
        $region20: #{tpu_custom_call.1} parent=11 // pred_fallthru
          _
        // Predicated region
        $region21: #{tpu_custom_call.1} parent=11 // pred_check
          %p176 = pneg %p108
        $region22: #{tpu_custom_call.1} parent=11 // pred_check_branch
          %178 = sbr.rel (%p176) target = $region24
        $region23: #{tpu_custom_call.1} parent=11 // pred_region
          %s180 = ssub.s32 16, 16
          %181 = vsyncadd [#allocation7], %s180
          %s183 = sshll.u32 %s3, 4
          %s184 = int_to_ptr.vmem [resolvable:$true] %s183
          %186 = dma.vmem_to_smem %s184, 16, [#allocation8], [#allocation7]
        $region24: #{tpu_custom_call.1} parent=11 // pred_fallthru
          _
        // Predicated region
        $region25: #{tpu_custom_call.1} parent=11 // pred_check
          %p187 = pneg %p129
        $region26: #{tpu_custom_call.1} parent=11 // pred_check_branch
          %189 = sbr.rel (%p187) target = $region28
        $region27: #{tpu_custom_call.1} parent=11 // pred_region
          _
        $region28: #{tpu_custom_call.1} parent=11 // pred_fallthru
          _
      $region12: #{tpu_custom_call.1} parent=5 // pred_fallthru
        _
      %p190 = scmp.lt.s32.totalorder %s19, 2
      // Predicated region
      $region29: #{tpu_custom_call.1} parent=5 // pred_check
        %p191 = pneg %p190
      $region30: #{tpu_custom_call.1} parent=5 // pred_check_branch
        %193 = sbr.rel (%p191) target = $region32
      $region31: #{tpu_custom_call.1} parent=5 // pred_region
        // Predicated region
        $region33: #{tpu_custom_call.1} parent=31 // pred_check
          %p194 = pneg %p39
        $region34: #{tpu_custom_call.1} parent=31 // pred_check_branch
          %196 = sbr.rel (%p194) target = $region36
        $region35: #{tpu_custom_call.1} parent=31 // pred_region
          %s197 = sand.u32 %s29, 1
          %s198 = scalar_lea.sflag [#allocation5], %s197
          %s199 = sand.u32 %s29, 1
          %s200 = smul.addr %s199, 256
          %s201 = scalar_lea.vmem [#allocation4], %s200
          %s203 = ssub.s32 4096, 4096
          %204 = vsyncadd %s198, %s203
          %s205 = smul.addr %s19, 32
          %s206 = smul.addr %s205, 128
          %s207 = scalar_lea.hbm %s0, %s206
          %s208 = sshll.u32 %s201, 4
          %s209 = int_to_ptr.vmem [resolvable:$true] %s208
          %214 = dma.hbm_to_vmem [thread:$0]  %s207, 4096, %s209, %s198, 128, 128, 8
        $region36: #{tpu_custom_call.1} parent=31 // pred_fallthru
          _
      $region32: #{tpu_custom_call.1} parent=5 // pred_fallthru
        _
      %p215 = scmp.le.s32.totalorder 1, %s19
      %p216 = scmp.lt.s32.totalorder %s19, 3
      %p217 = pnand %p215, %p216
      %p218 = pneg %p217
      // Predicated region
      $region37: #{tpu_custom_call.1} parent=5 // pred_check
        _
      $region38: #{tpu_custom_call.1} parent=5 // pred_check_branch
        %220 = sbr.rel (%p217) target = $region40
      $region39: #{tpu_custom_call.1} parent=5 // pred_region
        %s221 = ssub.s32 %s19, 1
        %s222 = sand.u32 %s32, 1
        %s223 = scalar_lea.sflag [#allocation5], %s222
        %s224 = sand.u32 %s32, 1
        %s225 = smul.addr %s224, 256
        %s226 = scalar_lea.vmem [#allocation4], %s225
        // Predicated region
        $region41: #{tpu_custom_call.1} parent=39 // pred_check
          %p227 = pneg %p45
        $region42: #{tpu_custom_call.1} parent=39 // pred_check_branch
          %229 = sbr.rel (%p227) target = $region44
        $region43: #{tpu_custom_call.1} parent=39 // pred_region
          %230 = dma.done %s223, 4096
        $region44: #{tpu_custom_call.1} parent=39 // pred_fallthru
          _
        // Predicated region
        $region45: #{tpu_custom_call.1} parent=39 // pred_check
          %p231 = pneg %p108
        $region46: #{tpu_custom_call.1} parent=39 // pred_check_branch
          %233 = sbr.rel (%p231) target = $region48
        $region47: #{tpu_custom_call.1} parent=39 // pred_region
          %234 = dma.done [#allocation7], 16
        $region48: #{tpu_custom_call.1} parent=39 // pred_fallthru
          _
        %235 = sfence
        %s236 = sand.u32 %s32, 1
        %s237 = scalar_lea.sflag [#allocation5], %s236
        %s238 = sand.u32 %s32, 1
        %s239 = smul.addr %s238, 256
        %s240 = scalar_lea.vmem [#allocation4], %s239
        %p241 = pneg %p45
        %p242 = pneg %p42
        %p243 = pneg %p66
        %p244 = pneg %p63
        %p245 = pneg %p87
        %p246 = pneg %p84
        %p247 = pneg %p108
        %p248 = pneg %p105
        %p249 = pneg %p129
        %p250 = pneg %p126
        %p251 = pneg %p155
        %p252 = pneg %p152
        %s253 = sand.u32 %s142, 1
        %s254 = scalar_lea.sflag [#allocation6], %s253
        %s255 = sand.u32 %s142, 1
        %s256 = smul.addr %s255, 256
        %s257 = scalar_lea.vmem [#allocation9], %s256
        %v258 = vld [vmem:[%s226] sm:$0xff]
        %v259 = vld [vmem:[%s226 + $0x8] sm:$0xff]
        %v260 = vld [vmem:[%s226 + $0x10] sm:$0xff]
        %v261 = vld [vmem:[%s226 + $0x18] sm:$0xff]
        %v262 = vld [vmem:[%s226 + $0x20] sm:$0xff]
        %v263 = vld [vmem:[%s226 + $0x28] sm:$0xff]
        %v264 = vld [vmem:[%s226 + $0x30] sm:$0xff]
        %v265 = vld [vmem:[%s226 + $0x38] sm:$0xff]
        %v266 = vld [vmem:[%s226 + $0x40] sm:$0xff]
        %v267 = vld [vmem:[%s226 + $0x48] sm:$0xff]
        %v268 = vld [vmem:[%s226 + $0x50] sm:$0xff]
        %v269 = vld [vmem:[%s226 + $0x58] sm:$0xff]
        %v270 = vld [vmem:[%s226 + $0x60] sm:$0xff]
        %v271 = vld [vmem:[%s226 + $0x68] sm:$0xff]
        %v272 = vld [vmem:[%s226 + $0x70] sm:$0xff]
        %v273 = vld [vmem:[%s226 + $0x78] sm:$0xff]
        %v274 = vld [vmem:[%s226 + $0x80] sm:$0xff]
        %v275 = vld [vmem:[%s226 + $0x88] sm:$0xff]
        %v276 = vld [vmem:[%s226 + $0x90] sm:$0xff]
        %v277 = vld [vmem:[%s226 + $0x98] sm:$0xff]
        %v278 = vld [vmem:[%s226 + $0xa0] sm:$0xff]
        %v279 = vld [vmem:[%s226 + $0xa8] sm:$0xff]
        %v280 = vld [vmem:[%s226 + $0xb0] sm:$0xff]
        %v281 = vld [vmem:[%s226 + $0xb8] sm:$0xff]
        %v282 = vld [vmem:[%s226 + $0xc0] sm:$0xff]
        %v283 = vld [vmem:[%s226 + $0xc8] sm:$0xff]
        %v284 = vld [vmem:[%s226 + $0xd0] sm:$0xff]
        %v285 = vld [vmem:[%s226 + $0xd8] sm:$0xff]
        %v286 = vld [vmem:[%s226 + $0xe0] sm:$0xff]
        %v287 = vld [vmem:[%s226 + $0xe8] sm:$0xff]
        %v288 = vld [vmem:[%s226 + $0xf0] sm:$0xff]
        %v289 = vld [vmem:[%s226 + $0xf8] sm:$0xff]
        %vm290 = vcmask 130048
        %v291 = vsel %vm290, %v258, 0.0
        %v292 = vsel %vm290, %v260, 0.0
        %v293 = vadd.f32 %v291, %v292
        %v294 = vsel %vm290, %v262, 0.0
        %v295 = vadd.f32 %v293, %v294
        %v296 = vsel %vm290, %v264, 0.0
        %v297 = vadd.f32 %v295, %v296
        %v298 = vsel %vm290, %v266, 0.0
        %v299 = vadd.f32 %v297, %v298
        %v300 = vsel %vm290, %v268, 0.0
        %v301 = vadd.f32 %v299, %v300
        %v302 = vsel %vm290, %v270, 0.0
        %v303 = vadd.f32 %v301, %v302
        %v304 = vsel %vm290, %v272, 0.0
        %v305 = vadd.f32 %v303, %v304
        %v306 = vsel %vm290, %v274, 0.0
        %v307 = vadd.f32 %v305, %v306
        %v308 = vsel %vm290, %v276, 0.0
        %v309 = vadd.f32 %v307, %v308
        %v310 = vsel %vm290, %v278, 0.0
        %v311 = vadd.f32 %v309, %v310
        %v312 = vsel %vm290, %v280, 0.0
        %v313 = vadd.f32 %v311, %v312
        %v314 = vsel %vm290, %v282, 0.0
        %v315 = vadd.f32 %v313, %v314
        %v316 = vsel %vm290, %v284, 0.0
        %v317 = vadd.f32 %v315, %v316
        %v318 = vsel %vm290, %v286, 0.0
        %v319 = vadd.f32 %v317, %v318
        %v320 = vsel %vm290, %v288, 0.0
        %v321 = vadd.f32 %v319, %v320
        %v322 = vsel %vm290, %v259, 0.0
        %v323 = vsel %vm290, %v261, 0.0
        %v324 = vadd.f32 %v322, %v323
        %v325 = vsel %vm290, %v263, 0.0
        %v326 = vadd.f32 %v324, %v325
        %v327 = vsel %vm290, %v265, 0.0
        %v328 = vadd.f32 %v326, %v327
        %v329 = vsel %vm290, %v267, 0.0
        %v330 = vadd.f32 %v328, %v329
        %v331 = vsel %vm290, %v269, 0.0
        %v332 = vadd.f32 %v330, %v331
        %v333 = vsel %vm290, %v271, 0.0
        %v334 = vadd.f32 %v332, %v333
        %v335 = vsel %vm290, %v273, 0.0
        %v336 = vadd.f32 %v334, %v335
        %v337 = vsel %vm290, %v275, 0.0
        %v338 = vadd.f32 %v336, %v337
        %v339 = vsel %vm290, %v277, 0.0
        %v340 = vadd.f32 %v338, %v339
        %v341 = vsel %vm290, %v279, 0.0
        %v342 = vadd.f32 %v340, %v341
        %v343 = vsel %vm290, %v281, 0.0
        %v344 = vadd.f32 %v342, %v343
        %v345 = vsel %vm290, %v283, 0.0
        %v346 = vadd.f32 %v344, %v345
        %v347 = vsel %vm290, %v285, 0.0
        %v348 = vadd.f32 %v346, %v347
        %v349 = vsel %vm290, %v287, 0.0
        %v350 = vadd.f32 %v348, %v349
        %v351 = vsel %vm290, %v289, 0.0
        %v352 = vadd.f32 %v350, %v351
        %v353 = vsel %vm290, %v321, 0.0
        %v354 = vsel %vm290, %v352, 0.0
        %v355 = vadd.f32 %v353, %v354
        %v356 = vrot.slane %v355, 4
        %v357 = vadd.f32 %v355, %v356
        %v358 = vrot.slane %v357, 2
        %v359 = vadd.f32 %v357, %v358
        %v360 = vrot.slane %v359, 1
        %v361 = vadd.f32 %v359, %v360
        %v362 = vsel %vm290, %v258, -inf
        %v363 = vsel %vm290, %v260, -inf
        %v364 = vsel %vm290, %v262, -inf
        %v365 = vmax.f32 %v362, %v364
        %v366 = vsel %vm290, %v264, -inf
        %v367 = vmax.f32 %v363, %v366
        %v368 = vsel %vm290, %v266, -inf
        %v369 = vmax.f32 %v365, %v368
        %v370 = vsel %vm290, %v268, -inf
        %v371 = vmax.f32 %v367, %v370
        %v372 = vsel %vm290, %v270, -inf
        %v373 = vmax.f32 %v369, %v372
        %v374 = vsel %vm290, %v272, -inf
        %v375 = vmax.f32 %v371, %v374
        %v376 = vsel %vm290, %v274, -inf
        %v377 = vmax.f32 %v373, %v376
        %v378 = vsel %vm290, %v276, -inf
        %v379 = vmax.f32 %v375, %v378
        %v380 = vsel %vm290, %v278, -inf
        %v381 = vmax.f32 %v377, %v380
        %v382 = vsel %vm290, %v280, -inf
        %v383 = vmax.f32 %v379, %v382
        %v384 = vsel %vm290, %v282, -inf
        %v385 = vmax.f32 %v381, %v384
        %v386 = vsel %vm290, %v284, -inf
        %v387 = vmax.f32 %v383, %v386
        %v388 = vsel %vm290, %v286, -inf
        %v389 = vmax.f32 %v385, %v388
        %v390 = vsel %vm290, %v288, -inf
        %v391 = vmax.f32 %v387, %v390
        %v392 = vmax.f32 %v389, %v391
        %v393 = vsel %vm290, %v259, -inf
        %v394 = vsel %vm290, %v261, -inf
        %v395 = vsel %vm290, %v263, -inf
        %v396 = vmax.f32 %v393, %v395
        %v397 = vsel %vm290, %v265, -inf
        %v398 = vmax.f32 %v394, %v397
        %v399 = vsel %vm290, %v267, -inf
        %v400 = vmax.f32 %v396, %v399
        %v401 = vsel %vm290, %v269, -inf
        %v402 = vmax.f32 %v398, %v401
        %v403 = vsel %vm290, %v271, -inf
        %v404 = vmax.f32 %v400, %v403
        %v405 = vsel %vm290, %v273, -inf
        %v406 = vmax.f32 %v402, %v405
        %v407 = vsel %vm290, %v275, -inf
        %v408 = vmax.f32 %v404, %v407
        %v409 = vsel %vm290, %v277, -inf
        %v410 = vmax.f32 %v406, %v409
        %v411 = vsel %vm290, %v279, -inf
        %v412 = vmax.f32 %v408, %v411
        %v413 = vsel %vm290, %v281, -inf
        %v414 = vmax.f32 %v410, %v413
        %v415 = vsel %vm290, %v283, -inf
        %v416 = vmax.f32 %v412, %v415
        %v417 = vsel %vm290, %v285, -inf
        %v418 = vmax.f32 %v414, %v417
        %v419 = vsel %vm290, %v287, -inf
        %v420 = vmax.f32 %v416, %v419
        %v421 = vsel %vm290, %v289, -inf
        %v422 = vmax.f32 %v418, %v421
        %v423 = vmax.f32 %v420, %v422
        %v424 = vsel %vm290, %v392, -inf
        %v425 = vsel %vm290, %v423, -inf
        %v426 = vmax.f32 %v424, %v425
        %v427 = vrot.slane %v426, 4
        %v428 = vmax.f32 %v426, %v427
        %v429 = vrot.slane %v428, 2
        %v430 = vmax.f32 %v428, %v429
        %v431 = vrot.slane %v430, 1
        %v432 = vmax.f32 %v430, %v431
        %v433 = vmul.f32 %v361, 0.00390625
        %vm434 = vcmask 1040384
        %v435 = vsel %vm434, %v433, %v432
        %v436 = vld [vmem:[%s1] sm:$0xff]
        %v437 = vld [vmem:[%s1 + $0x8] sm:$0xff]
        %v439 = vsel %vm290, %v435, 0
        %441 = vmatprep.subr.mxu0 0.0
        %442 = vmatpush1.msra.mxu0 %v436
        %443 = vmatprep.subr.mxu0 0.0
        %444 = vmatpush1.msra.mxu0 %v437
        %445 = vmatprep.subr.mxu0 0.0
        %446 = vmatpush1.msra.mxu0 0.0
        %447 = vmatprep.subr.mxu0 0.0
        %448 = vmatpush1.msra.mxu0 0.0
        %449 = vmatprep.subr.mxu0 0.0
        %450 = vmatpush1.msra.mxu0 0.0
        %451 = vmatprep.subr.mxu0 0.0
        %452 = vmatpush1.msra.mxu0 0.0
        %453 = vmatprep.subr.mxu0 0.0
        %454 = vmatpush1.msra.mxu0 0.0
        %455 = vmatprep.subr.mxu0 0.0
        %456 = vmatpush1.msra.mxu0 0.0
        %457 = vmatprep.subr.mxu0 0.0
        %458 = vmatpush1.msra.mxu0 0.0
        %459 = vmatprep.subr.mxu0 0.0
        %460 = vmatpush1.msra.mxu0 0.0
        %461 = vmatprep.subr.mxu0 0.0
        %462 = vmatpush1.msra.mxu0 0.0
        %463 = vmatprep.subr.mxu0 0.0
        %464 = vmatpush1.msra.mxu0 0.0
        %465 = vmatprep.subr.mxu0 0.0
        %466 = vmatpush1.msra.mxu0 0.0
        %467 = vmatprep.subr.mxu0 0.0
        %468 = vmatpush1.msra.mxu0 0.0
        %469 = vmatprep.subr.mxu0 0.0
        %470 = vmatpush1.msra.mxu0 0.0
        %471 = vmatprep.subr.mxu0 0.0
        %472 = vmatpush1.msra.mxu0 0.0
        %473 = vmatprep.subr.mxu0 0.0
        %474 = vmatpush1.msra.mxu0 0.0
        %475 = vmatprep.subr.mxu0 0.0
        %476 = vmatpush1.msra.mxu0 0.0
        %477 = vmatprep.subr.mxu0 0.0
        %478 = vmatpush1.msra.mxu0 0.0
        %479 = vmatprep.subr.mxu0 0.0
        %480 = vmatpush1.msra.mxu0 0.0
        %481 = vmatprep.subr.mxu0 0.0
        %482 = vmatpush1.msra.mxu0 0.0
        %483 = vmatprep.subr.mxu0 0.0
        %484 = vmatpush1.msra.mxu0 0.0
        %485 = vmatprep.subr.mxu0 0.0
        %486 = vmatpush1.msra.mxu0 0.0
        %487 = vmatprep.subr.mxu0 0.0
        %488 = vmatpush1.msra.mxu0 0.0
        %489 = vmatprep.subr.mxu0 0.0
        %490 = vmatpush1.msra.mxu0 0.0
        %491 = vmatprep.subr.mxu0 0.0
        %492 = vmatpush1.msra.mxu0 0.0
        %493 = vmatprep.subr.mxu0 0.0
        %494 = vmatpush1.msra.mxu0 0.0
        %495 = vmatprep.subr.mxu0 0.0
        %496 = vmatpush1.msra.mxu0 0.0
        %497 = vmatprep.subr.mxu0 0.0
        %498 = vmatpush1.msra.mxu0 0.0
        %499 = vmatprep.subr.mxu0 0.0
        %500 = vmatpush1.msra.mxu0 0.0
        %501 = vmatprep.subr.mxu0 0.0
        %502 = vmatpush1.msra.mxu0 0.0
        %503 = vmatprep.subr.mxu0 0.0
        %504 = vmatpush1.msra.mxu0 0.0
        %505 = vmatprep.mubr.f32.mxu0 0.0
        %506 = vmatmul.mubr.f32.gmra.mrb[0].mxu0 %v439
        %v507 = vpop.f32.mrb[0].mxu0
        %v508 = vadd.f32 0.0, %v507
        %v509 = vpop.f32.mrb[0].mxu0
        %510 = vdwg.mxu0
        %v511 = vmax.f32 %v508, 0.0
        %v512 = vld [vmem:[%s2] sm:$0xf]
        %vm513 = vcmask 31744
        %v515 = vsel %vm513, %v511, 0
        %vm517 = vcmask 1043456
        %v519 = vsel %vm517, %v512, 0
        %521 = vmatprep.subr.mxu0 0.0
        %522 = vmatpush1.msra.mxu0 %v519
        %523 = vmatprep.subr.mxu0 0.0
        %524 = vmatpush1.msra.mxu0 0.0
        %525 = vmatprep.subr.mxu0 0.0
        %526 = vmatpush1.msra.mxu0 0.0
        %527 = vmatprep.subr.mxu0 0.0
        %528 = vmatpush1.msra.mxu0 0.0
        %529 = vmatprep.subr.mxu0 0.0
        %530 = vmatpush1.msra.mxu0 0.0
        %531 = vmatprep.subr.mxu0 0.0
        %532 = vmatpush1.msra.mxu0 0.0
        %533 = vmatprep.subr.mxu0 0.0
        %534 = vmatpush1.msra.mxu0 0.0
        %535 = vmatprep.subr.mxu0 0.0
        %536 = vmatpush1.msra.mxu0 0.0
        %537 = vmatprep.subr.mxu0 0.0
        %538 = vmatpush1.msra.mxu0 0.0
        %539 = vmatprep.subr.mxu0 0.0
        %540 = vmatpush1.msra.mxu0 0.0
        %541 = vmatprep.subr.mxu0 0.0
        %542 = vmatpush1.msra.mxu0 0.0
        %543 = vmatprep.subr.mxu0 0.0
        %544 = vmatpush1.msra.mxu0 0.0
        %545 = vmatprep.subr.mxu0 0.0
        %546 = vmatpush1.msra.mxu0 0.0
        %547 = vmatprep.subr.mxu0 0.0
        %548 = vmatpush1.msra.mxu0 0.0
        %549 = vmatprep.subr.mxu0 0.0
        %550 = vmatpush1.msra.mxu0 0.0
        %551 = vmatprep.subr.mxu0 0.0
        %552 = vmatpush1.msra.mxu0 0.0
        %553 = vmatprep.subr.mxu0 0.0
        %554 = vmatpush1.msra.mxu0 0.0
        %555 = vmatprep.subr.mxu0 0.0
        %556 = vmatpush1.msra.mxu0 0.0
        %557 = vmatprep.subr.mxu0 0.0
        %558 = vmatpush1.msra.mxu0 0.0
        %559 = vmatprep.subr.mxu0 0.0
        %560 = vmatpush1.msra.mxu0 0.0
        %561 = vmatprep.subr.mxu0 0.0
        %562 = vmatpush1.msra.mxu0 0.0
        %563 = vmatprep.subr.mxu0 0.0
        %564 = vmatpush1.msra.mxu0 0.0
        %565 = vmatprep.subr.mxu0 0.0
        %566 = vmatpush1.msra.mxu0 0.0
        %567 = vmatprep.subr.mxu0 0.0
        %568 = vmatpush1.msra.mxu0 0.0
        %569 = vmatprep.subr.mxu0 0.0
        %570 = vmatpush1.msra.mxu0 0.0
        %571 = vmatprep.subr.mxu0 0.0
        %572 = vmatpush1.msra.mxu0 0.0
        %573 = vmatprep.subr.mxu0 0.0
        %574 = vmatpush1.msra.mxu0 0.0
        %575 = vmatprep.subr.mxu0 0.0
        %576 = vmatpush1.msra.mxu0 0.0
        %577 = vmatprep.subr.mxu0 0.0
        %578 = vmatpush1.msra.mxu0 0.0
        %579 = vmatprep.subr.mxu0 0.0
        %580 = vmatpush1.msra.mxu0 0.0
        %581 = vmatprep.subr.mxu0 0.0
        %582 = vmatpush1.msra.mxu0 0.0
        %583 = vmatprep.subr.mxu0 0.0
        %584 = vmatpush1.msra.mxu0 0.0
        %585 = vmatprep.mubr.f32.mxu0 0.0
        %586 = vmatmul.mubr.f32.gmra.mrb[0].mxu0 %v515
        %v587 = vpop.f32.mrb[0].mxu0
        %v588 = vadd.f32 0.0, %v587
        %v589 = vpop.f32.mrb[0].mxu0
        %590 = vdwg.mxu0
        %v592 = vrot.slane %v588, 1
        %v594 = vadd.f32 %v588, %v592
        %v595 = vxor.u32 %v594, 2147483648
        %v596 = vmul.f32 %v595, 1.442695
        %v597 = vpow.pop %v596
        %v598 = vadd.f32 %v597, 1.0
        %v599 = vrcp.pop %v598
        %v600 = vmul.f32 1.0, %v599
        %s601 = sld [smem:[#allocation3]]
        %s602 = sld [smem:[#allocation8]]
        %s603 = sld [smem:[#allocation8 + $0x1]]
        %s604 = sld [smem:[#allocation8 + $0x2]]
        %s605 = sld [smem:[#allocation8 + $0x3]]
        %s606 = sld [smem:[#allocation8 + $0x4]]
        %s607 = sld [smem:[#allocation8 + $0x5]]
        %s608 = sld [smem:[#allocation8 + $0x6]]
        %s609 = sld [smem:[#allocation8 + $0x7]]
        %s610 = sld [smem:[#allocation8 + $0x8]]
        %s611 = sld [smem:[#allocation8 + $0x9]]
        %s612 = sld [smem:[#allocation8 + $0xa]]
        %s613 = sld [smem:[#allocation8 + $0xb]]
        %s614 = sld [smem:[#allocation8 + $0xc]]
        %s615 = sld [smem:[#allocation8 + $0xd]]
        %s616 = sld [smem:[#allocation8 + $0xe]]
        %s617 = sld [smem:[#allocation8 + $0xf]]
        %s618 = sld [smem:[#allocation8 + $0x10]]
        %s619 = sld [smem:[#allocation8 + $0x11]]
        %v620 = vstv %s601
        %v621 = vadd.f32 %v620, 0.0
        %622 = vst.msk [vmem:[#allocation2] sm:$0xff] %vm290, 0.0
        %623 = vst.msk [vmem:[#allocation2 + $0x8] sm:$0xff] %vm290, 0.0
        %vm624 = vcmask 123904
        %625 = vst.msk [vmem:[#allocation2 + $0x10] sm:$0x3] %vm624, 0.0
        %626 = vst.msk [vmem:[#allocation2 + $0x1b0] sm:$0xff] %vm290, 0.0
        %627 = vst.msk [vmem:[#allocation2 + $0x1b8] sm:$0xff] %vm290, 0.0
        %628 = vst.msk [vmem:[#allocation2 + $0x1c0] sm:$0x3] %vm624, 0.0
        %s629 = scalar_lea.vmem [#allocation2], 408
        %630 = vst.msk [vmem:[%s629] sm:$0xff] %vm290, 0.0
        %631 = vst.msk [vmem:[%s629 + $0x8] sm:$0xff] %vm290, 0.0
        %632 = vst.msk [vmem:[%s629 + $0x10] sm:$0x3] %vm624, 0.0
        %633 = vst.msk [vmem:[%s629 + $0x1b0] sm:$0xff] %vm290, 0.0
        %634 = vst.msk [vmem:[%s629 + $0x1b8] sm:$0xff] %vm290, 0.0
        %635 = vst.msk [vmem:[%s629 + $0x1c0] sm:$0x3] %vm624, 0.0
        %s636 = scalar_lea.vmem [#allocation2], 24
        %vm637 = vcmask 122880
        %638 = vst.msk [vmem:[%s636] sm:$0x1] %vm637, 0.0
        %639 = vst.msk [vmem:[%s636 + $0x18] sm:$0x1] %vm637, 0.0
        %640 = vst.msk [vmem:[%s636 + $0x30] sm:$0x1] %vm637, 0.0
        %641 = vst.msk [vmem:[%s636 + $0x48] sm:$0x1] %vm637, 0.0
        %642 = vst.msk [vmem:[%s636 + $0x60] sm:$0x1] %vm637, 0.0
        %643 = vst.msk [vmem:[%s636 + $0x78] sm:$0x1] %vm637, 0.0
        %644 = vst.msk [vmem:[%s636 + $0x90] sm:$0x1] %vm637, 0.0
        %645 = vst.msk [vmem:[%s636 + $0xa8] sm:$0x1] %vm637, 0.0
        %646 = vst.msk [vmem:[%s636 + $0xc0] sm:$0x1] %vm637, 0.0
        %647 = vst.msk [vmem:[%s636 + $0xd8] sm:$0x1] %vm637, 0.0
        %648 = vst.msk [vmem:[%s636 + $0xf0] sm:$0x1] %vm637, 0.0
        %649 = vst.msk [vmem:[%s636 + $0x108] sm:$0x1] %vm637, 0.0
        %650 = vst.msk [vmem:[%s636 + $0x120] sm:$0x1] %vm637, 0.0
        %651 = vst.msk [vmem:[%s636 + $0x138] sm:$0x1] %vm637, 0.0
        %652 = vst.msk [vmem:[%s636 + $0x150] sm:$0x1] %vm637, 0.0
        %653 = vst.msk [vmem:[%s636 + $0x168] sm:$0x1] %vm637, 0.0
        %654 = vst.msk [vmem:[%s636 + $0x1b0] sm:$0x1] %vm637, 0.0
        %655 = vst.msk [vmem:[%s636 + $0x1c8] sm:$0x1] %vm637, 0.0
        %656 = vst.msk [vmem:[%s636 + $0x1e0] sm:$0x1] %vm637, 0.0
        %657 = vst.msk [vmem:[%s636 + $0x1f8] sm:$0x1] %vm637, 0.0
        %658 = vst.msk [vmem:[%s636 + $0x210] sm:$0x1] %vm637, 0.0
        %659 = vst.msk [vmem:[%s636 + $0x228] sm:$0x1] %vm637, 0.0
        %660 = vst.msk [vmem:[%s636 + $0x240] sm:$0x1] %vm637, 0.0
        %661 = vst.msk [vmem:[%s636 + $0x258] sm:$0x1] %vm637, 0.0
        %662 = vst.msk [vmem:[%s636 + $0x270] sm:$0x1] %vm637, 0.0
        %663 = vst.msk [vmem:[%s636 + $0x288] sm:$0x1] %vm637, 0.0
        %664 = vst.msk [vmem:[%s636 + $0x2a0] sm:$0x1] %vm637, 0.0
        %665 = vst.msk [vmem:[%s636 + $0x2b8] sm:$0x1] %vm637, 0.0
        %666 = vst.msk [vmem:[%s636 + $0x2d0] sm:$0x1] %vm637, 0.0
        %667 = vst.msk [vmem:[%s636 + $0x2e8] sm:$0x1] %vm637, 0.0
        %668 = vst.msk [vmem:[%s636 + $0x300] sm:$0x1] %vm637, 0.0
        %669 = vst.msk [vmem:[%s636 + $0x318] sm:$0x1] %vm637, 0.0
        %670 = vst.msk [vmem:[%s636 + $0x11] sm:$0x1] %vm637, 0.0
        %671 = vst.msk [vmem:[%s636 + $0x29] sm:$0x1] %vm637, 0.0
        %672 = vst.msk [vmem:[%s636 + $0x41] sm:$0x1] %vm637, 0.0
        %673 = vst.msk [vmem:[%s636 + $0x59] sm:$0x1] %vm637, 0.0
        %674 = vst.msk [vmem:[%s636 + $0x71] sm:$0x1] %vm637, 0.0
        %675 = vst.msk [vmem:[%s636 + $0x89] sm:$0x1] %vm637, 0.0
        %676 = vst.msk [vmem:[%s636 + $0xa1] sm:$0x1] %vm637, 0.0
        %677 = vst.msk [vmem:[%s636 + $0xb9] sm:$0x1] %vm637, 0.0
        %678 = vst.msk [vmem:[%s636 + $0xd1] sm:$0x1] %vm637, 0.0
        %679 = vst.msk [vmem:[%s636 + $0xe9] sm:$0x1] %vm637, 0.0
        %680 = vst.msk [vmem:[%s636 + $0x101] sm:$0x1] %vm637, 0.0
        %681 = vst.msk [vmem:[%s636 + $0x119] sm:$0x1] %vm637, 0.0
        %682 = vst.msk [vmem:[%s636 + $0x131] sm:$0x1] %vm637, 0.0
        %683 = vst.msk [vmem:[%s636 + $0x149] sm:$0x1] %vm637, 0.0
        %684 = vst.msk [vmem:[%s636 + $0x161] sm:$0x1] %vm637, 0.0
        %685 = vst.msk [vmem:[%s636 + $0x179] sm:$0x1] %vm637, 0.0
        %686 = vst.msk [vmem:[%s636 + $0x1c1] sm:$0x1] %vm637, 0.0
        %687 = vst.msk [vmem:[%s636 + $0x1d9] sm:$0x1] %vm637, 0.0
        %688 = vst.msk [vmem:[%s636 + $0x1f1] sm:$0x1] %vm637, 0.0
        %689 = vst.msk [vmem:[%s636 + $0x209] sm:$0x1] %vm637, 0.0
        %690 = vst.msk [vmem:[%s636 + $0x221] sm:$0x1] %vm637, 0.0
        %691 = vst.msk [vmem:[%s636 + $0x239] sm:$0x1] %vm637, 0.0
        %692 = vst.msk [vmem:[%s636 + $0x251] sm:$0x1] %vm637, 0.0
        %693 = vst.msk [vmem:[%s636 + $0x269] sm:$0x1] %vm637, 0.0
        %694 = vst.msk [vmem:[%s636 + $0x281] sm:$0x1] %vm637, 0.0
        %695 = vst.msk [vmem:[%s636 + $0x299] sm:$0x1] %vm637, 0.0
        %696 = vst.msk [vmem:[%s636 + $0x2b1] sm:$0x1] %vm637, 0.0
        %697 = vst.msk [vmem:[%s636 + $0x2c9] sm:$0x1] %vm637, 0.0
        %698 = vst.msk [vmem:[%s636 + $0x2e1] sm:$0x1] %vm637, 0.0
        %699 = vst.msk [vmem:[%s636 + $0x2f9] sm:$0x1] %vm637, 0.0
        %700 = vst.msk [vmem:[%s636 + $0x311] sm:$0x1] %vm637, 0.0
        %701 = vst.msk [vmem:[%s636 + $0x329] sm:$0x1] %vm637, 0.0
        %v702 = vld [vmem:[%s226] sm:$0xff]
        %v703 = vld [vmem:[%s226 + $0x8] sm:$0xff]
        %v704 = vld [vmem:[%s226 + $0x10] sm:$0xff]
        %v705 = vld [vmem:[%s226 + $0x18] sm:$0xff]
        %v706 = vld [vmem:[%s226 + $0x20] sm:$0xff]
        %v707 = vld [vmem:[%s226 + $0x28] sm:$0xff]
        %v708 = vld [vmem:[%s226 + $0x30] sm:$0xff]
        %v709 = vld [vmem:[%s226 + $0x38] sm:$0xff]
        %v710 = vld [vmem:[%s226 + $0x40] sm:$0xff]
        %v711 = vld [vmem:[%s226 + $0x48] sm:$0xff]
        %v712 = vld [vmem:[%s226 + $0x50] sm:$0xff]
        %v713 = vld [vmem:[%s226 + $0x58] sm:$0xff]
        %v714 = vld [vmem:[%s226 + $0x60] sm:$0xff]
        %v715 = vld [vmem:[%s226 + $0x68] sm:$0xff]
        %v716 = vld [vmem:[%s226 + $0x70] sm:$0xff]
        %v717 = vld [vmem:[%s226 + $0x78] sm:$0xff]
        %v718 = vld [vmem:[%s226 + $0x80] sm:$0xff]
        %v719 = vld [vmem:[%s226 + $0x88] sm:$0xff]
        %v720 = vld [vmem:[%s226 + $0x90] sm:$0xff]
        %v721 = vld [vmem:[%s226 + $0x98] sm:$0xff]
        %v722 = vld [vmem:[%s226 + $0xa0] sm:$0xff]
        %v723 = vld [vmem:[%s226 + $0xa8] sm:$0xff]
        %v724 = vld [vmem:[%s226 + $0xb0] sm:$0xff]
        %v725 = vld [vmem:[%s226 + $0xb8] sm:$0xff]
        %v726 = vld [vmem:[%s226 + $0xc0] sm:$0xff]
        %v727 = vld [vmem:[%s226 + $0xc8] sm:$0xff]
        %v728 = vld [vmem:[%s226 + $0xd0] sm:$0xff]
        %v729 = vld [vmem:[%s226 + $0xd8] sm:$0xff]
        %v730 = vld [vmem:[%s226 + $0xe0] sm:$0xff]
        %v731 = vld [vmem:[%s226 + $0xe8] sm:$0xff]
        %v732 = vld [vmem:[%s226 + $0xf0] sm:$0xff]
        %v733 = vld [vmem:[%s226 + $0xf8] sm:$0xff]
        %v734 = vlaneseq
        %v735 = vshrl.u32 %v734, 7
        %v736 = vsub.s32 0, %v735
        %v737 = vrot.slane %v600, %v736
        %v738 = vmul.f32 %v702, %v737
        %v739 = vmul.f32 %v703, %v737
        %v740 = vmul.f32 %v704, %v737
        %v741 = vmul.f32 %v705, %v737
        %v742 = vmul.f32 %v706, %v737
        %v743 = vmul.f32 %v707, %v737
        %v744 = vmul.f32 %v708, %v737
        %v745 = vmul.f32 %v709, %v737
        %v746 = vmul.f32 %v710, %v737
        %v747 = vmul.f32 %v711, %v737
        %v748 = vmul.f32 %v712, %v737
        %v749 = vmul.f32 %v713, %v737
        %v750 = vmul.f32 %v714, %v737
        %v751 = vmul.f32 %v715, %v737
        %v752 = vmul.f32 %v716, %v737
        %v753 = vmul.f32 %v717, %v737
        %v754 = vmul.f32 %v718, %v737
        %v755 = vmul.f32 %v719, %v737
        %v756 = vmul.f32 %v720, %v737
        %v757 = vmul.f32 %v721, %v737
        %v758 = vmul.f32 %v722, %v737
        %v759 = vmul.f32 %v723, %v737
        %v760 = vmul.f32 %v724, %v737
        %v761 = vmul.f32 %v725, %v737
        %v762 = vmul.f32 %v726, %v737
        %v763 = vmul.f32 %v727, %v737
        %v764 = vmul.f32 %v728, %v737
        %v765 = vmul.f32 %v729, %v737
        %v766 = vmul.f32 %v730, %v737
        %v767 = vmul.f32 %v731, %v737
        %v768 = vmul.f32 %v732, %v737
        %v769 = vmul.f32 %v733, %v737
        %v770 = vsel %vm290, %v738, 0.0
        %771 = vadd.xlane.f32.xlu0 %v770
        %v772 = vpop.xlane.xlu0 %771
        %v773 = vsel %vm290, %v739, 0.0
        %774 = vadd.xlane.f32.xlu0 %v773
        %v775 = vpop.xlane.xlu0 %774
        %v776 = vsel %vm290, %v740, 0.0
        %777 = vadd.xlane.f32.xlu0 %v776
        %v778 = vpop.xlane.xlu0 %777
        %v779 = vsel %vm290, %v741, 0.0
        %780 = vadd.xlane.f32.xlu0 %v779
        %v781 = vpop.xlane.xlu0 %780
        %v782 = vsel %vm290, %v742, 0.0
        %783 = vadd.xlane.f32.xlu0 %v782
        %v784 = vpop.xlane.xlu0 %783
        %v785 = vsel %vm290, %v743, 0.0
        %786 = vadd.xlane.f32.xlu0 %v785
        %v787 = vpop.xlane.xlu0 %786
        %v788 = vsel %vm290, %v744, 0.0
        %789 = vadd.xlane.f32.xlu0 %v788
        %v790 = vpop.xlane.xlu0 %789
        %v791 = vsel %vm290, %v745, 0.0
        %792 = vadd.xlane.f32.xlu0 %v791
        %v793 = vpop.xlane.xlu0 %792
        %v794 = vsel %vm290, %v746, 0.0
        %795 = vadd.xlane.f32.xlu0 %v794
        %v796 = vpop.xlane.xlu0 %795
        %v797 = vsel %vm290, %v747, 0.0
        %798 = vadd.xlane.f32.xlu0 %v797
        %v799 = vpop.xlane.xlu0 %798
        %v800 = vsel %vm290, %v748, 0.0
        %801 = vadd.xlane.f32.xlu0 %v800
        %v802 = vpop.xlane.xlu0 %801
        %v803 = vsel %vm290, %v749, 0.0
        %804 = vadd.xlane.f32.xlu0 %v803
        %v805 = vpop.xlane.xlu0 %804
        %v806 = vsel %vm290, %v750, 0.0
        %807 = vadd.xlane.f32.xlu0 %v806
        %v808 = vpop.xlane.xlu0 %807
        %v809 = vsel %vm290, %v751, 0.0
        %810 = vadd.xlane.f32.xlu0 %v809
        %v811 = vpop.xlane.xlu0 %810
        %v812 = vsel %vm290, %v752, 0.0
        %813 = vadd.xlane.f32.xlu0 %v812
        %v814 = vpop.xlane.xlu0 %813
        %v815 = vsel %vm290, %v753, 0.0
        %816 = vadd.xlane.f32.xlu0 %v815
        %v817 = vpop.xlane.xlu0 %816
        %v818 = vsel %vm290, %v754, 0.0
        %819 = vadd.xlane.f32.xlu0 %v818
        %v820 = vpop.xlane.xlu0 %819
        %v821 = vsel %vm290, %v755, 0.0
        %822 = vadd.xlane.f32.xlu0 %v821
        %v823 = vpop.xlane.xlu0 %822
        %v824 = vsel %vm290, %v756, 0.0
        %825 = vadd.xlane.f32.xlu0 %v824
        %v826 = vpop.xlane.xlu0 %825
        %v827 = vsel %vm290, %v757, 0.0
        %828 = vadd.xlane.f32.xlu0 %v827
        %v829 = vpop.xlane.xlu0 %828
        %v830 = vsel %vm290, %v758, 0.0
        %831 = vadd.xlane.f32.xlu0 %v830
        %v832 = vpop.xlane.xlu0 %831
        %v833 = vsel %vm290, %v759, 0.0
        %834 = vadd.xlane.f32.xlu0 %v833
        %v835 = vpop.xlane.xlu0 %834
        %v836 = vsel %vm290, %v760, 0.0
        %837 = vadd.xlane.f32.xlu0 %v836
        %v838 = vpop.xlane.xlu0 %837
        %v839 = vsel %vm290, %v761, 0.0
        %840 = vadd.xlane.f32.xlu0 %v839
        %v841 = vpop.xlane.xlu0 %840
        %v842 = vsel %vm290, %v762, 0.0
        %843 = vadd.xlane.f32.xlu0 %v842
        %v844 = vpop.xlane.xlu0 %843
        %v845 = vsel %vm290, %v763, 0.0
        %846 = vadd.xlane.f32.xlu0 %v845
        %v847 = vpop.xlane.xlu0 %846
        %v848 = vsel %vm290, %v764, 0.0
        %849 = vadd.xlane.f32.xlu0 %v848
        %v850 = vpop.xlane.xlu0 %849
        %v851 = vsel %vm290, %v765, 0.0
        %852 = vadd.xlane.f32.xlu0 %v851
        %v853 = vpop.xlane.xlu0 %852
        %v854 = vsel %vm290, %v766, 0.0
        %855 = vadd.xlane.f32.xlu0 %v854
        %v856 = vpop.xlane.xlu0 %855
        %v857 = vsel %vm290, %v767, 0.0
        %858 = vadd.xlane.f32.xlu0 %v857
        %v859 = vpop.xlane.xlu0 %858
        %v860 = vsel %vm290, %v768, 0.0
        %861 = vadd.xlane.f32.xlu0 %v860
        %v862 = vpop.xlane.xlu0 %861
        %v863 = vsel %vm290, %v769, 0.0
        %864 = vadd.xlane.f32.xlu0 %v863
        %v865 = vpop.xlane.xlu0 %864
        %v866 = vsel %vm290, %v738, -inf
        %867 = vmax.xlane.f32.xlu0 %v866
        %v868 = vpop.xlane.xlu0 %867
        %v869 = vsel %vm290, %v739, -inf
        %870 = vmax.xlane.f32.xlu0 %v869
        %v871 = vpop.xlane.xlu0 %870
        %v872 = vsel %vm290, %v740, -inf
        %873 = vmax.xlane.f32.xlu0 %v872
        %v874 = vpop.xlane.xlu0 %873
        %v875 = vsel %vm290, %v741, -inf
        %876 = vmax.xlane.f32.xlu0 %v875
        %v877 = vpop.xlane.xlu0 %876
        %v878 = vsel %vm290, %v742, -inf
        %879 = vmax.xlane.f32.xlu0 %v878
        %v880 = vpop.xlane.xlu0 %879
        %v881 = vsel %vm290, %v743, -inf
        %882 = vmax.xlane.f32.xlu0 %v881
        %v883 = vpop.xlane.xlu0 %882
        %v884 = vsel %vm290, %v744, -inf
        %885 = vmax.xlane.f32.xlu0 %v884
        %v886 = vpop.xlane.xlu0 %885
        %v887 = vsel %vm290, %v745, -inf
        %888 = vmax.xlane.f32.xlu0 %v887
        %v889 = vpop.xlane.xlu0 %888
        %v890 = vsel %vm290, %v746, -inf
        %891 = vmax.xlane.f32.xlu0 %v890
        %v892 = vpop.xlane.xlu0 %891
        %v893 = vsel %vm290, %v747, -inf
        %894 = vmax.xlane.f32.xlu0 %v893
        %v895 = vpop.xlane.xlu0 %894
        %v896 = vsel %vm290, %v748, -inf
        %897 = vmax.xlane.f32.xlu0 %v896
        %v898 = vpop.xlane.xlu0 %897
        %v899 = vsel %vm290, %v749, -inf
        %900 = vmax.xlane.f32.xlu0 %v899
        %v901 = vpop.xlane.xlu0 %900
        %v902 = vsel %vm290, %v750, -inf
        %903 = vmax.xlane.f32.xlu0 %v902
        %v904 = vpop.xlane.xlu0 %903
        %v905 = vsel %vm290, %v751, -inf
        %906 = vmax.xlane.f32.xlu0 %v905
        %v907 = vpop.xlane.xlu0 %906
        %v908 = vsel %vm290, %v752, -inf
        %909 = vmax.xlane.f32.xlu0 %v908
        %v910 = vpop.xlane.xlu0 %909
        %v911 = vsel %vm290, %v753, -inf
        %912 = vmax.xlane.f32.xlu0 %v911
        %v913 = vpop.xlane.xlu0 %912
        %v914 = vsel %vm290, %v754, -inf
        %915 = vmax.xlane.f32.xlu0 %v914
        %v916 = vpop.xlane.xlu0 %915
        %v917 = vsel %vm290, %v755, -inf
        %918 = vmax.xlane.f32.xlu0 %v917
        %v919 = vpop.xlane.xlu0 %918
        %v920 = vsel %vm290, %v756, -inf
        %921 = vmax.xlane.f32.xlu0 %v920
        %v922 = vpop.xlane.xlu0 %921
        %v923 = vsel %vm290, %v757, -inf
        %924 = vmax.xlane.f32.xlu0 %v923
        %v925 = vpop.xlane.xlu0 %924
        %v926 = vsel %vm290, %v758, -inf
        %927 = vmax.xlane.f32.xlu0 %v926
        %v928 = vpop.xlane.xlu0 %927
        %v929 = vsel %vm290, %v759, -inf
        %930 = vmax.xlane.f32.xlu0 %v929
        %v931 = vpop.xlane.xlu0 %930
        %v932 = vsel %vm290, %v760, -inf
        %933 = vmax.xlane.f32.xlu0 %v932
        %v934 = vpop.xlane.xlu0 %933
        %v935 = vsel %vm290, %v761, -inf
        %936 = vmax.xlane.f32.xlu0 %v935
        %v937 = vpop.xlane.xlu0 %936
        %v938 = vsel %vm290, %v762, -inf
        %939 = vmax.xlane.f32.xlu0 %v938
        %v940 = vpop.xlane.xlu0 %939
        %v941 = vsel %vm290, %v763, -inf
        %942 = vmax.xlane.f32.xlu0 %v941
        %v943 = vpop.xlane.xlu0 %942
        %v944 = vsel %vm290, %v764, -inf
        %945 = vmax.xlane.f32.xlu0 %v944
        %v946 = vpop.xlane.xlu0 %945
        %v947 = vsel %vm290, %v765, -inf
        %948 = vmax.xlane.f32.xlu0 %v947
        %v949 = vpop.xlane.xlu0 %948
        %v950 = vsel %vm290, %v766, -inf
        %951 = vmax.xlane.f32.xlu0 %v950
        %v952 = vpop.xlane.xlu0 %951
        %v953 = vsel %vm290, %v767, -inf
        %954 = vmax.xlane.f32.xlu0 %v953
        %v955 = vpop.xlane.xlu0 %954
        %v956 = vsel %vm290, %v768, -inf
        %957 = vmax.xlane.f32.xlu0 %v956
        %v958 = vpop.xlane.xlu0 %957
        %v959 = vsel %vm290, %v769, -inf
        %960 = vmax.xlane.f32.xlu0 %v959
        %v961 = vpop.xlane.xlu0 %960
        %v962 = vmul.f32 %v772, 0.0625
        %v963 = vmul.f32 %v775, 0.0625
        %v964 = vmul.f32 %v778, 0.0625
        %v965 = vmul.f32 %v781, 0.0625
        %v966 = vmul.f32 %v784, 0.0625
        %v967 = vmul.f32 %v787, 0.0625
        %v968 = vmul.f32 %v790, 0.0625
        %v969 = vmul.f32 %v793, 0.0625
        %v970 = vmul.f32 %v796, 0.0625
        %v971 = vmul.f32 %v799, 0.0625
        %v972 = vmul.f32 %v802, 0.0625
        %v973 = vmul.f32 %v805, 0.0625
        %v974 = vmul.f32 %v808, 0.0625
        %v975 = vmul.f32 %v811, 0.0625
        %v976 = vmul.f32 %v814, 0.0625
        %v977 = vmul.f32 %v817, 0.0625
        %v978 = vmul.f32 %v820, 0.0625
        %v979 = vmul.f32 %v823, 0.0625
        %v980 = vmul.f32 %v826, 0.0625
        %v981 = vmul.f32 %v829, 0.0625
        %v982 = vmul.f32 %v832, 0.0625
        %v983 = vmul.f32 %v835, 0.0625
        %v984 = vmul.f32 %v838, 0.0625
        %v985 = vmul.f32 %v841, 0.0625
        %v986 = vmul.f32 %v844, 0.0625
        %v987 = vmul.f32 %v847, 0.0625
        %v988 = vmul.f32 %v850, 0.0625
        %v989 = vmul.f32 %v853, 0.0625
        %v990 = vmul.f32 %v856, 0.0625
        %v991 = vmul.f32 %v859, 0.0625
        %v992 = vmul.f32 %v862, 0.0625
        %v993 = vmul.f32 %v865, 0.0625
        %994 = vst.msk [vmem:[%s636 + $0x1] sm:$0xff] %vm290, %v962
        %995 = vst.msk [vmem:[%s636 + $0x9] sm:$0xff] %vm290, %v963
        %996 = vst.msk [vmem:[%s636 + $0x19] sm:$0xff] %vm290, %v964
        %997 = vst.msk [vmem:[%s636 + $0x21] sm:$0xff] %vm290, %v965
        %998 = vst.msk [vmem:[%s636 + $0x31] sm:$0xff] %vm290, %v966
        %999 = vst.msk [vmem:[%s636 + $0x39] sm:$0xff] %vm290, %v967
        %1000 = vst.msk [vmem:[%s636 + $0x49] sm:$0xff] %vm290, %v968
        %1001 = vst.msk [vmem:[%s636 + $0x51] sm:$0xff] %vm290, %v969
        %1002 = vst.msk [vmem:[%s636 + $0x61] sm:$0xff] %vm290, %v970
        %1003 = vst.msk [vmem:[%s636 + $0x69] sm:$0xff] %vm290, %v971
        %1004 = vst.msk [vmem:[%s636 + $0x79] sm:$0xff] %vm290, %v972
        %1005 = vst.msk [vmem:[%s636 + $0x81] sm:$0xff] %vm290, %v973
        %1006 = vst.msk [vmem:[%s636 + $0x91] sm:$0xff] %vm290, %v974
        %1007 = vst.msk [vmem:[%s636 + $0x99] sm:$0xff] %vm290, %v975
        %1008 = vst.msk [vmem:[%s636 + $0xa9] sm:$0xff] %vm290, %v976
        %1009 = vst.msk [vmem:[%s636 + $0xb1] sm:$0xff] %vm290, %v977
        %1010 = vst.msk [vmem:[%s636 + $0xc1] sm:$0xff] %vm290, %v978
        %1011 = vst.msk [vmem:[%s636 + $0xc9] sm:$0xff] %vm290, %v979
        %1012 = vst.msk [vmem:[%s636 + $0xd9] sm:$0xff] %vm290, %v980
        %1013 = vst.msk [vmem:[%s636 + $0xe1] sm:$0xff] %vm290, %v981
        %1014 = vst.msk [vmem:[%s636 + $0xf1] sm:$0xff] %vm290, %v982
        %1015 = vst.msk [vmem:[%s636 + $0xf9] sm:$0xff] %vm290, %v983
        %1016 = vst.msk [vmem:[%s636 + $0x109] sm:$0xff] %vm290, %v984
        %1017 = vst.msk [vmem:[%s636 + $0x111] sm:$0xff] %vm290, %v985
        %1018 = vst.msk [vmem:[%s636 + $0x121] sm:$0xff] %vm290, %v986
        %1019 = vst.msk [vmem:[%s636 + $0x129] sm:$0xff] %vm290, %v987
        %1020 = vst.msk [vmem:[%s636 + $0x139] sm:$0xff] %vm290, %v988
        %1021 = vst.msk [vmem:[%s636 + $0x141] sm:$0xff] %vm290, %v989
        %1022 = vst.msk [vmem:[%s636 + $0x151] sm:$0xff] %vm290, %v990
        %1023 = vst.msk [vmem:[%s636 + $0x159] sm:$0xff] %vm290, %v991
        %1024 = vst.msk [vmem:[%s636 + $0x169] sm:$0xff] %vm290, %v992
        %1025 = vst.msk [vmem:[%s636 + $0x171] sm:$0xff] %vm290, %v993
        %s1026 = scalar_lea.vmem [#allocation2], 456
        %1027 = vst.msk [vmem:[%s1026 + $0x1] sm:$0xff] %vm290, %v868
        %1028 = vst.msk [vmem:[%s1026 + $0x9] sm:$0xff] %vm290, %v871
        %1029 = vst.msk [vmem:[%s1026 + $0x19] sm:$0xff] %vm290, %v874
        %1030 = vst.msk [vmem:[%s1026 + $0x21] sm:$0xff] %vm290, %v877
        %1031 = vst.msk [vmem:[%s1026 + $0x31] sm:$0xff] %vm290, %v880
        %1032 = vst.msk [vmem:[%s1026 + $0x39] sm:$0xff] %vm290, %v883
        %1033 = vst.msk [vmem:[%s1026 + $0x49] sm:$0xff] %vm290, %v886
        %1034 = vst.msk [vmem:[%s1026 + $0x51] sm:$0xff] %vm290, %v889
        %1035 = vst.msk [vmem:[%s1026 + $0x61] sm:$0xff] %vm290, %v892
        %1036 = vst.msk [vmem:[%s1026 + $0x69] sm:$0xff] %vm290, %v895
        %1037 = vst.msk [vmem:[%s1026 + $0x79] sm:$0xff] %vm290, %v898
        %1038 = vst.msk [vmem:[%s1026 + $0x81] sm:$0xff] %vm290, %v901
        %1039 = vst.msk [vmem:[%s1026 + $0x91] sm:$0xff] %vm290, %v904
        %1040 = vst.msk [vmem:[%s1026 + $0x99] sm:$0xff] %vm290, %v907
        %1041 = vst.msk [vmem:[%s1026 + $0xa9] sm:$0xff] %vm290, %v910
        %1042 = vst.msk [vmem:[%s1026 + $0xb1] sm:$0xff] %vm290, %v913
        %1043 = vst.msk [vmem:[%s1026 + $0xc1] sm:$0xff] %vm290, %v916
        %1044 = vst.msk [vmem:[%s1026 + $0xc9] sm:$0xff] %vm290, %v919
        %1045 = vst.msk [vmem:[%s1026 + $0xd9] sm:$0xff] %vm290, %v922
        %1046 = vst.msk [vmem:[%s1026 + $0xe1] sm:$0xff] %vm290, %v925
        %1047 = vst.msk [vmem:[%s1026 + $0xf1] sm:$0xff] %vm290, %v928
        %1048 = vst.msk [vmem:[%s1026 + $0xf9] sm:$0xff] %vm290, %v931
        %1049 = vst.msk [vmem:[%s1026 + $0x109] sm:$0xff] %vm290, %v934
        %1050 = vst.msk [vmem:[%s1026 + $0x111] sm:$0xff] %vm290, %v937
        %1051 = vst.msk [vmem:[%s1026 + $0x121] sm:$0xff] %vm290, %v940
        %1052 = vst.msk [vmem:[%s1026 + $0x129] sm:$0xff] %vm290, %v943
        %1053 = vst.msk [vmem:[%s1026 + $0x139] sm:$0xff] %vm290, %v946
        %1054 = vst.msk [vmem:[%s1026 + $0x141] sm:$0xff] %vm290, %v949
        %1055 = vst.msk [vmem:[%s1026 + $0x151] sm:$0xff] %vm290, %v952
        %1056 = vst.msk [vmem:[%s1026 + $0x159] sm:$0xff] %vm290, %v955
        %1057 = vst.msk [vmem:[%s1026 + $0x169] sm:$0xff] %vm290, %v958
        %1058 = vst.msk [vmem:[%s1026 + $0x171] sm:$0xff] %vm290, %v961
        %v1059 = vld [vmem:[#allocation2] sm:$0xff]
        %v1060 = vld [vmem:[#allocation2 + $0x8] sm:$0xff]
        %v1061 = vld [vmem:[#allocation2 + $0x18] sm:$0xff]
        %v1062 = vld [vmem:[#allocation2 + $0x20] sm:$0xff]
        %v1063 = vld [vmem:[#allocation2 + $0x30] sm:$0xff]
        %v1064 = vld [vmem:[#allocation2 + $0x38] sm:$0xff]
        %v1065 = vld [vmem:[#allocation2 + $0x48] sm:$0xff]
        %v1066 = vld [vmem:[#allocation2 + $0x50] sm:$0xff]
        %v1067 = vld [vmem:[#allocation2 + $0x60] sm:$0xff]
        %v1068 = vld [vmem:[#allocation2 + $0x68] sm:$0xff]
        %v1069 = vld [vmem:[#allocation2 + $0x78] sm:$0xff]
        %v1070 = vld [vmem:[#allocation2 + $0x80] sm:$0xff]
        %v1071 = vld [vmem:[#allocation2 + $0x90] sm:$0xff]
        %v1072 = vld [vmem:[#allocation2 + $0x98] sm:$0xff]
        %v1073 = vld [vmem:[#allocation2 + $0xa8] sm:$0xff]
        %v1074 = vld [vmem:[#allocation2 + $0xb0] sm:$0xff]
        %v1075 = vld [vmem:[#allocation2 + $0xc0] sm:$0xff]
        %v1076 = vld [vmem:[#allocation2 + $0xc8] sm:$0xff]
        %v1077 = vld [vmem:[#allocation2 + $0xd8] sm:$0xff]
        %v1078 = vld [vmem:[#allocation2 + $0xe0] sm:$0xff]
        %v1079 = vld [vmem:[#allocation2 + $0xf0] sm:$0xff]
        %v1080 = vld [vmem:[#allocation2 + $0xf8] sm:$0xff]
        %v1081 = vld [vmem:[#allocation2 + $0x108] sm:$0xff]
        %v1082 = vld [vmem:[#allocation2 + $0x110] sm:$0xff]
        %v1083 = vld [vmem:[#allocation2 + $0x120] sm:$0xff]
        %v1084 = vld [vmem:[#allocation2 + $0x128] sm:$0xff]
        %v1085 = vld [vmem:[#allocation2 + $0x138] sm:$0xff]
        %v1086 = vld [vmem:[#allocation2 + $0x140] sm:$0xff]
        %v1087 = vld [vmem:[#allocation2 + $0x150] sm:$0xff]
        %v1088 = vld [vmem:[#allocation2 + $0x158] sm:$0xff]
        %v1089 = vld [vmem:[#allocation2 + $0x168] sm:$0xff]
        %v1090 = vld [vmem:[#allocation2 + $0x170] sm:$0xff]
        %v1091 = vstv %s602
        %v1092 = vmul.f32 %v1091, %v1059
        %v1093 = vmul.f32 %v1091, %v1060
        %v1094 = vmul.f32 %v1091, %v1061
        %v1095 = vmul.f32 %v1091, %v1062
        %v1096 = vmul.f32 %v1091, %v1063
        %v1097 = vmul.f32 %v1091, %v1064
        %v1098 = vmul.f32 %v1091, %v1065
        %v1099 = vmul.f32 %v1091, %v1066
        %v1100 = vmul.f32 %v1091, %v1067
        %v1101 = vmul.f32 %v1091, %v1068
        %v1102 = vmul.f32 %v1091, %v1069
        %v1103 = vmul.f32 %v1091, %v1070
        %v1104 = vmul.f32 %v1091, %v1071
        %v1105 = vmul.f32 %v1091, %v1072
        %v1106 = vmul.f32 %v1091, %v1073
        %v1107 = vmul.f32 %v1091, %v1074
        %v1108 = vmul.f32 %v1091, %v1075
        %v1109 = vmul.f32 %v1091, %v1076
        %v1110 = vmul.f32 %v1091, %v1077
        %v1111 = vmul.f32 %v1091, %v1078
        %v1112 = vmul.f32 %v1091, %v1079
        %v1113 = vmul.f32 %v1091, %v1080
        %v1114 = vmul.f32 %v1091, %v1081
        %v1115 = vmul.f32 %v1091, %v1082
        %v1116 = vmul.f32 %v1091, %v1083
        %v1117 = vmul.f32 %v1091, %v1084
        %v1118 = vmul.f32 %v1091, %v1085
        %v1119 = vmul.f32 %v1091, %v1086
        %v1120 = vmul.f32 %v1091, %v1087
        %v1121 = vmul.f32 %v1091, %v1088
        %v1122 = vmul.f32 %v1091, %v1089
        %v1123 = vmul.f32 %v1091, %v1090
        %v1124 = vadd.f32 %v621, %v1092
        %v1125 = vadd.f32 %v621, %v1093
        %v1126 = vadd.f32 %v621, %v1094
        %v1127 = vadd.f32 %v621, %v1095
        %v1128 = vadd.f32 %v621, %v1096
        %v1129 = vadd.f32 %v621, %v1097
        %v1130 = vadd.f32 %v621, %v1098
        %v1131 = vadd.f32 %v621, %v1099
        %v1132 = vadd.f32 %v621, %v1100
        %v1133 = vadd.f32 %v621, %v1101
        %v1134 = vadd.f32 %v621, %v1102
        %v1135 = vadd.f32 %v621, %v1103
        %v1136 = vadd.f32 %v621, %v1104
        %v1137 = vadd.f32 %v621, %v1105
        %v1138 = vadd.f32 %v621, %v1106
        %v1139 = vadd.f32 %v621, %v1107
        %v1140 = vadd.f32 %v621, %v1108
        %v1141 = vadd.f32 %v621, %v1109
        %v1142 = vadd.f32 %v621, %v1110
        %v1143 = vadd.f32 %v621, %v1111
        %v1144 = vadd.f32 %v621, %v1112
        %v1145 = vadd.f32 %v621, %v1113
        %v1146 = vadd.f32 %v621, %v1114
        %v1147 = vadd.f32 %v621, %v1115
        %v1148 = vadd.f32 %v621, %v1116
        %v1149 = vadd.f32 %v621, %v1117
        %v1150 = vadd.f32 %v621, %v1118
        %v1151 = vadd.f32 %v621, %v1119
        %v1152 = vadd.f32 %v621, %v1120
        %v1153 = vadd.f32 %v621, %v1121
        %v1154 = vadd.f32 %v621, %v1122
        %v1155 = vadd.f32 %v621, %v1123
        %s1156 = scalar_lea.vmem [#allocation2], 432
        %v1157 = vld [vmem:[%s1156] sm:$0xff]
        %v1158 = vld [vmem:[%s1156 + $0x8] sm:$0xff]
        %v1159 = vld [vmem:[%s1156 + $0x18] sm:$0xff]
        %v1160 = vld [vmem:[%s1156 + $0x20] sm:$0xff]
        %v1161 = vld [vmem:[%s1156 + $0x30] sm:$0xff]
        %v1162 = vld [vmem:[%s1156 + $0x38] sm:$0xff]
        %v1163 = vld [vmem:[%s1156 + $0x48] sm:$0xff]
        %v1164 = vld [vmem:[%s1156 + $0x50] sm:$0xff]
        %v1165 = vld [vmem:[%s1156 + $0x60] sm:$0xff]
        %v1166 = vld [vmem:[%s1156 + $0x68] sm:$0xff]
        %v1167 = vld [vmem:[%s1156 + $0x78] sm:$0xff]
        %v1168 = vld [vmem:[%s1156 + $0x80] sm:$0xff]
        %v1169 = vld [vmem:[%s1156 + $0x90] sm:$0xff]
        %v1170 = vld [vmem:[%s1156 + $0x98] sm:$0xff]
        %v1171 = vld [vmem:[%s1156 + $0xa8] sm:$0xff]
        %v1172 = vld [vmem:[%s1156 + $0xb0] sm:$0xff]
        %v1173 = vld [vmem:[%s1156 + $0xc0] sm:$0xff]
        %v1174 = vld [vmem:[%s1156 + $0xc8] sm:$0xff]
        %v1175 = vld [vmem:[%s1156 + $0xd8] sm:$0xff]
        %v1176 = vld [vmem:[%s1156 + $0xe0] sm:$0xff]
        %v1177 = vld [vmem:[%s1156 + $0xf0] sm:$0xff]
        %v1178 = vld [vmem:[%s1156 + $0xf8] sm:$0xff]
        %v1179 = vld [vmem:[%s1156 + $0x108] sm:$0xff]
        %v1180 = vld [vmem:[%s1156 + $0x110] sm:$0xff]
        %v1181 = vld [vmem:[%s1156 + $0x120] sm:$0xff]
        %v1182 = vld [vmem:[%s1156 + $0x128] sm:$0xff]
        %v1183 = vld [vmem:[%s1156 + $0x138] sm:$0xff]
        %v1184 = vld [vmem:[%s1156 + $0x140] sm:$0xff]
        %v1185 = vld [vmem:[%s1156 + $0x150] sm:$0xff]
        %v1186 = vld [vmem:[%s1156 + $0x158] sm:$0xff]
        %v1187 = vld [vmem:[%s1156 + $0x168] sm:$0xff]
        %v1188 = vld [vmem:[%s1156 + $0x170] sm:$0xff]
        %v1189 = vstv %s611
        %v1190 = vmul.f32 %v1189, %v1157
        %v1191 = vmul.f32 %v1189, %v1158
        %v1192 = vmul.f32 %v1189, %v1159
        %v1193 = vmul.f32 %v1189, %v1160
        %v1194 = vmul.f32 %v1189, %v1161
        %v1195 = vmul.f32 %v1189, %v1162
        %v1196 = vmul.f32 %v1189, %v1163
        %v1197 = vmul.f32 %v1189, %v1164
        %v1198 = vmul.f32 %v1189, %v1165
        %v1199 = vmul.f32 %v1189, %v1166
        %v1200 = vmul.f32 %v1189, %v1167
        %v1201 = vmul.f32 %v1189, %v1168
        %v1202 = vmul.f32 %v1189, %v1169
        %v1203 = vmul.f32 %v1189, %v1170
        %v1204 = vmul.f32 %v1189, %v1171
        %v1205 = vmul.f32 %v1189, %v1172
        %v1206 = vmul.f32 %v1189, %v1173
        %v1207 = vmul.f32 %v1189, %v1174
        %v1208 = vmul.f32 %v1189, %v1175
        %v1209 = vmul.f32 %v1189, %v1176
        %v1210 = vmul.f32 %v1189, %v1177
        %v1211 = vmul.f32 %v1189, %v1178
        %v1212 = vmul.f32 %v1189, %v1179
        %v1213 = vmul.f32 %v1189, %v1180
        %v1214 = vmul.f32 %v1189, %v1181
        %v1215 = vmul.f32 %v1189, %v1182
        %v1216 = vmul.f32 %v1189, %v1183
        %v1217 = vmul.f32 %v1189, %v1184
        %v1218 = vmul.f32 %v1189, %v1185
        %v1219 = vmul.f32 %v1189, %v1186
        %v1220 = vmul.f32 %v1189, %v1187
        %v1221 = vmul.f32 %v1189, %v1188
        %v1222 = vadd.f32 %v1124, %v1190
        %v1223 = vadd.f32 %v1125, %v1191
        %v1224 = vadd.f32 %v1126, %v1192
        %v1225 = vadd.f32 %v1127, %v1193
        %v1226 = vadd.f32 %v1128, %v1194
        %v1227 = vadd.f32 %v1129, %v1195
        %v1228 = vadd.f32 %v1130, %v1196
        %v1229 = vadd.f32 %v1131, %v1197
        %v1230 = vadd.f32 %v1132, %v1198
        %v1231 = vadd.f32 %v1133, %v1199
        %v1232 = vadd.f32 %v1134, %v1200
        %v1233 = vadd.f32 %v1135, %v1201
        %v1234 = vadd.f32 %v1136, %v1202
        %v1235 = vadd.f32 %v1137, %v1203
        %v1236 = vadd.f32 %v1138, %v1204
        %v1237 = vadd.f32 %v1139, %v1205
        %v1238 = vadd.f32 %v1140, %v1206
        %v1239 = vadd.f32 %v1141, %v1207
        %v1240 = vadd.f32 %v1142, %v1208
        %v1241 = vadd.f32 %v1143, %v1209
        %v1242 = vadd.f32 %v1144, %v1210
        %v1243 = vadd.f32 %v1145, %v1211
        %v1244 = vadd.f32 %v1146, %v1212
        %v1245 = vadd.f32 %v1147, %v1213
        %v1246 = vadd.f32 %v1148, %v1214
        %v1247 = vadd.f32 %v1149, %v1215
        %v1248 = vadd.f32 %v1150, %v1216
        %v1249 = vadd.f32 %v1151, %v1217
        %v1250 = vadd.f32 %v1152, %v1218
        %v1251 = vadd.f32 %v1153, %v1219
        %v1252 = vadd.f32 %v1154, %v1220
        %v1253 = vadd.f32 %v1155, %v1221
        %v1254 = vld [vmem:[#allocation2 + $0x1] sm:$0xff]
        %v1255 = vld [vmem:[#allocation2 + $0x9] sm:$0xff]
        %v1256 = vld [vmem:[#allocation2 + $0x19] sm:$0xff]
        %v1257 = vld [vmem:[#allocation2 + $0x21] sm:$0xff]
        %v1258 = vld [vmem:[#allocation2 + $0x31] sm:$0xff]
        %v1259 = vld [vmem:[#allocation2 + $0x39] sm:$0xff]
        %v1260 = vld [vmem:[#allocation2 + $0x49] sm:$0xff]
        %v1261 = vld [vmem:[#allocation2 + $0x51] sm:$0xff]
        %v1262 = vld [vmem:[#allocation2 + $0x61] sm:$0xff]
        %v1263 = vld [vmem:[#allocation2 + $0x69] sm:$0xff]
        %v1264 = vld [vmem:[#allocation2 + $0x79] sm:$0xff]
        %v1265 = vld [vmem:[#allocation2 + $0x81] sm:$0xff]
        %v1266 = vld [vmem:[#allocation2 + $0x91] sm:$0xff]
        %v1267 = vld [vmem:[#allocation2 + $0x99] sm:$0xff]
        %v1268 = vld [vmem:[#allocation2 + $0xa9] sm:$0xff]
        %v1269 = vld [vmem:[#allocation2 + $0xb1] sm:$0xff]
        %v1270 = vld [vmem:[#allocation2 + $0xc1] sm:$0xff]
        %v1271 = vld [vmem:[#allocation2 + $0xc9] sm:$0xff]
        %v1272 = vld [vmem:[#allocation2 + $0xd9] sm:$0xff]
        %v1273 = vld [vmem:[#allocation2 + $0xe1] sm:$0xff]
        %v1274 = vld [vmem:[#allocation2 + $0xf1] sm:$0xff]
        %v1275 = vld [vmem:[#allocation2 + $0xf9] sm:$0xff]
        %v1276 = vld [vmem:[#allocation2 + $0x109] sm:$0xff]
        %v1277 = vld [vmem:[#allocation2 + $0x111] sm:$0xff]
        %v1278 = vld [vmem:[#allocation2 + $0x121] sm:$0xff]
        %v1279 = vld [vmem:[#allocation2 + $0x129] sm:$0xff]
        %v1280 = vld [vmem:[#allocation2 + $0x139] sm:$0xff]
        %v1281 = vld [vmem:[#allocation2 + $0x141] sm:$0xff]
        %v1282 = vld [vmem:[#allocation2 + $0x151] sm:$0xff]
        %v1283 = vld [vmem:[#allocation2 + $0x159] sm:$0xff]
        %v1284 = vld [vmem:[#allocation2 + $0x169] sm:$0xff]
        %v1285 = vld [vmem:[#allocation2 + $0x171] sm:$0xff]
        %v1286 = vstv %s603
        %v1287 = vmul.f32 %v1286, %v1254
        %v1288 = vmul.f32 %v1286, %v1255
        %v1289 = vmul.f32 %v1286, %v1256
        %v1290 = vmul.f32 %v1286, %v1257
        %v1291 = vmul.f32 %v1286, %v1258
        %v1292 = vmul.f32 %v1286, %v1259
        %v1293 = vmul.f32 %v1286, %v1260
        %v1294 = vmul.f32 %v1286, %v1261
        %v1295 = vmul.f32 %v1286, %v1262
        %v1296 = vmul.f32 %v1286, %v1263
        %v1297 = vmul.f32 %v1286, %v1264
        %v1298 = vmul.f32 %v1286, %v1265
        %v1299 = vmul.f32 %v1286, %v1266
        %v1300 = vmul.f32 %v1286, %v1267
        %v1301 = vmul.f32 %v1286, %v1268
        %v1302 = vmul.f32 %v1286, %v1269
        %v1303 = vmul.f32 %v1286, %v1270
        %v1304 = vmul.f32 %v1286, %v1271
        %v1305 = vmul.f32 %v1286, %v1272
        %v1306 = vmul.f32 %v1286, %v1273
        %v1307 = vmul.f32 %v1286, %v1274
        %v1308 = vmul.f32 %v1286, %v1275
        %v1309 = vmul.f32 %v1286, %v1276
        %v1310 = vmul.f32 %v1286, %v1277
        %v1311 = vmul.f32 %v1286, %v1278
        %v1312 = vmul.f32 %v1286, %v1279
        %v1313 = vmul.f32 %v1286, %v1280
        %v1314 = vmul.f32 %v1286, %v1281
        %v1315 = vmul.f32 %v1286, %v1282
        %v1316 = vmul.f32 %v1286, %v1283
        %v1317 = vmul.f32 %v1286, %v1284
        %v1318 = vmul.f32 %v1286, %v1285
        %v1319 = vadd.f32 %v1222, %v1287
        %v1320 = vadd.f32 %v1223, %v1288
        %v1321 = vadd.f32 %v1224, %v1289
        %v1322 = vadd.f32 %v1225, %v1290
        %v1323 = vadd.f32 %v1226, %v1291
        %v1324 = vadd.f32 %v1227, %v1292
        %v1325 = vadd.f32 %v1228, %v1293
        %v1326 = vadd.f32 %v1229, %v1294
        %v1327 = vadd.f32 %v1230, %v1295
        %v1328 = vadd.f32 %v1231, %v1296
        %v1329 = vadd.f32 %v1232, %v1297
        %v1330 = vadd.f32 %v1233, %v1298
        %v1331 = vadd.f32 %v1234, %v1299
        %v1332 = vadd.f32 %v1235, %v1300
        %v1333 = vadd.f32 %v1236, %v1301
        %v1334 = vadd.f32 %v1237, %v1302
        %v1335 = vadd.f32 %v1238, %v1303
        %v1336 = vadd.f32 %v1239, %v1304
        %v1337 = vadd.f32 %v1240, %v1305
        %v1338 = vadd.f32 %v1241, %v1306
        %v1339 = vadd.f32 %v1242, %v1307
        %v1340 = vadd.f32 %v1243, %v1308
        %v1341 = vadd.f32 %v1244, %v1309
        %v1342 = vadd.f32 %v1245, %v1310
        %v1343 = vadd.f32 %v1246, %v1311
        %v1344 = vadd.f32 %v1247, %v1312
        %v1345 = vadd.f32 %v1248, %v1313
        %v1346 = vadd.f32 %v1249, %v1314
        %v1347 = vadd.f32 %v1250, %v1315
        %v1348 = vadd.f32 %v1251, %v1316
        %v1349 = vadd.f32 %v1252, %v1317
        %v1350 = vadd.f32 %v1253, %v1318
        %v1351 = vld [vmem:[%s1156 + $0x1] sm:$0xff]
        %v1352 = vld [vmem:[%s1156 + $0x9] sm:$0xff]
        %v1353 = vld [vmem:[%s1156 + $0x19] sm:$0xff]
        %v1354 = vld [vmem:[%s1156 + $0x21] sm:$0xff]
        %v1355 = vld [vmem:[%s1156 + $0x31] sm:$0xff]
        %v1356 = vld [vmem:[%s1156 + $0x39] sm:$0xff]
        %v1357 = vld [vmem:[%s1156 + $0x49] sm:$0xff]
        %v1358 = vld [vmem:[%s1156 + $0x51] sm:$0xff]
        %v1359 = vld [vmem:[%s1156 + $0x61] sm:$0xff]
        %v1360 = vld [vmem:[%s1156 + $0x69] sm:$0xff]
        %v1361 = vld [vmem:[%s1156 + $0x79] sm:$0xff]
        %v1362 = vld [vmem:[%s1156 + $0x81] sm:$0xff]
        %v1363 = vld [vmem:[%s1156 + $0x91] sm:$0xff]
        %v1364 = vld [vmem:[%s1156 + $0x99] sm:$0xff]
        %v1365 = vld [vmem:[%s1156 + $0xa9] sm:$0xff]
        %v1366 = vld [vmem:[%s1156 + $0xb1] sm:$0xff]
        %v1367 = vld [vmem:[%s1156 + $0xc1] sm:$0xff]
        %v1368 = vld [vmem:[%s1156 + $0xc9] sm:$0xff]
        %v1369 = vld [vmem:[%s1156 + $0xd9] sm:$0xff]
        %v1370 = vld [vmem:[%s1156 + $0xe1] sm:$0xff]
        %v1371 = vld [vmem:[%s1156 + $0xf1] sm:$0xff]
        %v1372 = vld [vmem:[%s1156 + $0xf9] sm:$0xff]
        %v1373 = vld [vmem:[%s1156 + $0x109] sm:$0xff]
        %v1374 = vld [vmem:[%s1156 + $0x111] sm:$0xff]
        %v1375 = vld [vmem:[%s1156 + $0x121] sm:$0xff]
        %v1376 = vld [vmem:[%s1156 + $0x129] sm:$0xff]
        %v1377 = vld [vmem:[%s1156 + $0x139] sm:$0xff]
        %v1378 = vld [vmem:[%s1156 + $0x141] sm:$0xff]
        %v1379 = vld [vmem:[%s1156 + $0x151] sm:$0xff]
        %v1380 = vld [vmem:[%s1156 + $0x159] sm:$0xff]
        %v1381 = vld [vmem:[%s1156 + $0x169] sm:$0xff]
        %v1382 = vld [vmem:[%s1156 + $0x171] sm:$0xff]
        %v1383 = vstv %s612
        %v1384 = vmul.f32 %v1383, %v1351
        %v1385 = vmul.f32 %v1383, %v1352
        %v1386 = vmul.f32 %v1383, %v1353
        %v1387 = vmul.f32 %v1383, %v1354
        %v1388 = vmul.f32 %v1383, %v1355
        %v1389 = vmul.f32 %v1383, %v1356
        %v1390 = vmul.f32 %v1383, %v1357
        %v1391 = vmul.f32 %v1383, %v1358
        %v1392 = vmul.f32 %v1383, %v1359
        %v1393 = vmul.f32 %v1383, %v1360
        %v1394 = vmul.f32 %v1383, %v1361
        %v1395 = vmul.f32 %v1383, %v1362
        %v1396 = vmul.f32 %v1383, %v1363
        %v1397 = vmul.f32 %v1383, %v1364
        %v1398 = vmul.f32 %v1383, %v1365
        %v1399 = vmul.f32 %v1383, %v1366
        %v1400 = vmul.f32 %v1383, %v1367
        %v1401 = vmul.f32 %v1383, %v1368
        %v1402 = vmul.f32 %v1383, %v1369
        %v1403 = vmul.f32 %v1383, %v1370
        %v1404 = vmul.f32 %v1383, %v1371
        %v1405 = vmul.f32 %v1383, %v1372
        %v1406 = vmul.f32 %v1383, %v1373
        %v1407 = vmul.f32 %v1383, %v1374
        %v1408 = vmul.f32 %v1383, %v1375
        %v1409 = vmul.f32 %v1383, %v1376
        %v1410 = vmul.f32 %v1383, %v1377
        %v1411 = vmul.f32 %v1383, %v1378
        %v1412 = vmul.f32 %v1383, %v1379
        %v1413 = vmul.f32 %v1383, %v1380
        %v1414 = vmul.f32 %v1383, %v1381
        %v1415 = vmul.f32 %v1383, %v1382
        %v1416 = vadd.f32 %v1319, %v1384
        %v1417 = vadd.f32 %v1320, %v1385
        %v1418 = vadd.f32 %v1321, %v1386
        %v1419 = vadd.f32 %v1322, %v1387
        %v1420 = vadd.f32 %v1323, %v1388
        %v1421 = vadd.f32 %v1324, %v1389
        %v1422 = vadd.f32 %v1325, %v1390
        %v1423 = vadd.f32 %v1326, %v1391
        %v1424 = vadd.f32 %v1327, %v1392
        %v1425 = vadd.f32 %v1328, %v1393
        %v1426 = vadd.f32 %v1329, %v1394
        %v1427 = vadd.f32 %v1330, %v1395
        %v1428 = vadd.f32 %v1331, %v1396
        %v1429 = vadd.f32 %v1332, %v1397
        %v1430 = vadd.f32 %v1333, %v1398
        %v1431 = vadd.f32 %v1334, %v1399
        %v1432 = vadd.f32 %v1335, %v1400
        %v1433 = vadd.f32 %v1336, %v1401
        %v1434 = vadd.f32 %v1337, %v1402
        %v1435 = vadd.f32 %v1338, %v1403
        %v1436 = vadd.f32 %v1339, %v1404
        %v1437 = vadd.f32 %v1340, %v1405
        %v1438 = vadd.f32 %v1341, %v1406
        %v1439 = vadd.f32 %v1342, %v1407
        %v1440 = vadd.f32 %v1343, %v1408
        %v1441 = vadd.f32 %v1344, %v1409
        %v1442 = vadd.f32 %v1345, %v1410
        %v1443 = vadd.f32 %v1346, %v1411
        %v1444 = vadd.f32 %v1347, %v1412
        %v1445 = vadd.f32 %v1348, %v1413
        %v1446 = vadd.f32 %v1349, %v1414
        %v1447 = vadd.f32 %v1350, %v1415
        %v1448 = vld [vmem:[#allocation2 + $0x2] sm:$0xff]
        %v1449 = vld [vmem:[#allocation2 + $0xa] sm:$0xff]
        %v1450 = vld [vmem:[#allocation2 + $0x1a] sm:$0xff]
        %v1451 = vld [vmem:[#allocation2 + $0x22] sm:$0xff]
        %v1452 = vld [vmem:[#allocation2 + $0x32] sm:$0xff]
        %v1453 = vld [vmem:[#allocation2 + $0x3a] sm:$0xff]
        %v1454 = vld [vmem:[#allocation2 + $0x4a] sm:$0xff]
        %v1455 = vld [vmem:[#allocation2 + $0x52] sm:$0xff]
        %v1456 = vld [vmem:[#allocation2 + $0x62] sm:$0xff]
        %v1457 = vld [vmem:[#allocation2 + $0x6a] sm:$0xff]
        %v1458 = vld [vmem:[#allocation2 + $0x7a] sm:$0xff]
        %v1459 = vld [vmem:[#allocation2 + $0x82] sm:$0xff]
        %v1460 = vld [vmem:[#allocation2 + $0x92] sm:$0xff]
        %v1461 = vld [vmem:[#allocation2 + $0x9a] sm:$0xff]
        %v1462 = vld [vmem:[#allocation2 + $0xaa] sm:$0xff]
        %v1463 = vld [vmem:[#allocation2 + $0xb2] sm:$0xff]
        %v1464 = vld [vmem:[#allocation2 + $0xc2] sm:$0xff]
        %v1465 = vld [vmem:[#allocation2 + $0xca] sm:$0xff]
        %v1466 = vld [vmem:[#allocation2 + $0xda] sm:$0xff]
        %v1467 = vld [vmem:[#allocation2 + $0xe2] sm:$0xff]
        %v1468 = vld [vmem:[#allocation2 + $0xf2] sm:$0xff]
        %v1469 = vld [vmem:[#allocation2 + $0xfa] sm:$0xff]
        %v1470 = vld [vmem:[#allocation2 + $0x10a] sm:$0xff]
        %v1471 = vld [vmem:[#allocation2 + $0x112] sm:$0xff]
        %v1472 = vld [vmem:[#allocation2 + $0x122] sm:$0xff]
        %v1473 = vld [vmem:[#allocation2 + $0x12a] sm:$0xff]
        %v1474 = vld [vmem:[#allocation2 + $0x13a] sm:$0xff]
        %v1475 = vld [vmem:[#allocation2 + $0x142] sm:$0xff]
        %v1476 = vld [vmem:[#allocation2 + $0x152] sm:$0xff]
        %v1477 = vld [vmem:[#allocation2 + $0x15a] sm:$0xff]
        %v1478 = vld [vmem:[#allocation2 + $0x16a] sm:$0xff]
        %v1479 = vld [vmem:[#allocation2 + $0x172] sm:$0xff]
        %v1480 = vstv %s604
        %v1481 = vmul.f32 %v1480, %v1448
        %v1482 = vmul.f32 %v1480, %v1449
        %v1483 = vmul.f32 %v1480, %v1450
        %v1484 = vmul.f32 %v1480, %v1451
        %v1485 = vmul.f32 %v1480, %v1452
        %v1486 = vmul.f32 %v1480, %v1453
        %v1487 = vmul.f32 %v1480, %v1454
        %v1488 = vmul.f32 %v1480, %v1455
        %v1489 = vmul.f32 %v1480, %v1456
        %v1490 = vmul.f32 %v1480, %v1457
        %v1491 = vmul.f32 %v1480, %v1458
        %v1492 = vmul.f32 %v1480, %v1459
        %v1493 = vmul.f32 %v1480, %v1460
        %v1494 = vmul.f32 %v1480, %v1461
        %v1495 = vmul.f32 %v1480, %v1462
        %v1496 = vmul.f32 %v1480, %v1463
        %v1497 = vmul.f32 %v1480, %v1464
        %v1498 = vmul.f32 %v1480, %v1465
        %v1499 = vmul.f32 %v1480, %v1466
        %v1500 = vmul.f32 %v1480, %v1467
        %v1501 = vmul.f32 %v1480, %v1468
        %v1502 = vmul.f32 %v1480, %v1469
        %v1503 = vmul.f32 %v1480, %v1470
        %v1504 = vmul.f32 %v1480, %v1471
        %v1505 = vmul.f32 %v1480, %v1472
        %v1506 = vmul.f32 %v1480, %v1473
        %v1507 = vmul.f32 %v1480, %v1474
        %v1508 = vmul.f32 %v1480, %v1475
        %v1509 = vmul.f32 %v1480, %v1476
        %v1510 = vmul.f32 %v1480, %v1477
        %v1511 = vmul.f32 %v1480, %v1478
        %v1512 = vmul.f32 %v1480, %v1479
        %v1513 = vadd.f32 %v1416, %v1481
        %v1514 = vadd.f32 %v1417, %v1482
        %v1515 = vadd.f32 %v1418, %v1483
        %v1516 = vadd.f32 %v1419, %v1484
        %v1517 = vadd.f32 %v1420, %v1485
        %v1518 = vadd.f32 %v1421, %v1486
        %v1519 = vadd.f32 %v1422, %v1487
        %v1520 = vadd.f32 %v1423, %v1488
        %v1521 = vadd.f32 %v1424, %v1489
        %v1522 = vadd.f32 %v1425, %v1490
        %v1523 = vadd.f32 %v1426, %v1491
        %v1524 = vadd.f32 %v1427, %v1492
        %v1525 = vadd.f32 %v1428, %v1493
        %v1526 = vadd.f32 %v1429, %v1494
        %v1527 = vadd.f32 %v1430, %v1495
        %v1528 = vadd.f32 %v1431, %v1496
        %v1529 = vadd.f32 %v1432, %v1497
        %v1530 = vadd.f32 %v1433, %v1498
        %v1531 = vadd.f32 %v1434, %v1499
        %v1532 = vadd.f32 %v1435, %v1500
        %v1533 = vadd.f32 %v1436, %v1501
        %v1534 = vadd.f32 %v1437, %v1502
        %v1535 = vadd.f32 %v1438, %v1503
        %v1536 = vadd.f32 %v1439, %v1504
        %v1537 = vadd.f32 %v1440, %v1505
        %v1538 = vadd.f32 %v1441, %v1506
        %v1539 = vadd.f32 %v1442, %v1507
        %v1540 = vadd.f32 %v1443, %v1508
        %v1541 = vadd.f32 %v1444, %v1509
        %v1542 = vadd.f32 %v1445, %v1510
        %v1543 = vadd.f32 %v1446, %v1511
        %v1544 = vadd.f32 %v1447, %v1512
        %v1545 = vld [vmem:[%s1156 + $0x2] sm:$0xff]
        %v1546 = vld [vmem:[%s1156 + $0xa] sm:$0xff]
        %v1547 = vld [vmem:[%s1156 + $0x1a] sm:$0xff]
        %v1548 = vld [vmem:[%s1156 + $0x22] sm:$0xff]
        %v1549 = vld [vmem:[%s1156 + $0x32] sm:$0xff]
        %v1550 = vld [vmem:[%s1156 + $0x3a] sm:$0xff]
        %v1551 = vld [vmem:[%s1156 + $0x4a] sm:$0xff]
        %v1552 = vld [vmem:[%s1156 + $0x52] sm:$0xff]
        %v1553 = vld [vmem:[%s1156 + $0x62] sm:$0xff]
        %v1554 = vld [vmem:[%s1156 + $0x6a] sm:$0xff]
        %v1555 = vld [vmem:[%s1156 + $0x7a] sm:$0xff]
        %v1556 = vld [vmem:[%s1156 + $0x82] sm:$0xff]
        %v1557 = vld [vmem:[%s1156 + $0x92] sm:$0xff]
        %v1558 = vld [vmem:[%s1156 + $0x9a] sm:$0xff]
        %v1559 = vld [vmem:[%s1156 + $0xaa] sm:$0xff]
        %v1560 = vld [vmem:[%s1156 + $0xb2] sm:$0xff]
        %v1561 = vld [vmem:[%s1156 + $0xc2] sm:$0xff]
        %v1562 = vld [vmem:[%s1156 + $0xca] sm:$0xff]
        %v1563 = vld [vmem:[%s1156 + $0xda] sm:$0xff]
        %v1564 = vld [vmem:[%s1156 + $0xe2] sm:$0xff]
        %v1565 = vld [vmem:[%s1156 + $0xf2] sm:$0xff]
        %v1566 = vld [vmem:[%s1156 + $0xfa] sm:$0xff]
        %v1567 = vld [vmem:[%s1156 + $0x10a] sm:$0xff]
        %v1568 = vld [vmem:[%s1156 + $0x112] sm:$0xff]
        %v1569 = vld [vmem:[%s1156 + $0x122] sm:$0xff]
        %v1570 = vld [vmem:[%s1156 + $0x12a] sm:$0xff]
        %v1571 = vld [vmem:[%s1156 + $0x13a] sm:$0xff]
        %v1572 = vld [vmem:[%s1156 + $0x142] sm:$0xff]
        %v1573 = vld [vmem:[%s1156 + $0x152] sm:$0xff]
        %v1574 = vld [vmem:[%s1156 + $0x15a] sm:$0xff]
        %v1575 = vld [vmem:[%s1156 + $0x16a] sm:$0xff]
        %v1576 = vld [vmem:[%s1156 + $0x172] sm:$0xff]
        %v1577 = vstv %s613
        %v1578 = vmul.f32 %v1577, %v1545
        %v1579 = vmul.f32 %v1577, %v1546
        %v1580 = vmul.f32 %v1577, %v1547
        %v1581 = vmul.f32 %v1577, %v1548
        %v1582 = vmul.f32 %v1577, %v1549
        %v1583 = vmul.f32 %v1577, %v1550
        %v1584 = vmul.f32 %v1577, %v1551
        %v1585 = vmul.f32 %v1577, %v1552
        %v1586 = vmul.f32 %v1577, %v1553
        %v1587 = vmul.f32 %v1577, %v1554
        %v1588 = vmul.f32 %v1577, %v1555
        %v1589 = vmul.f32 %v1577, %v1556
        %v1590 = vmul.f32 %v1577, %v1557
        %v1591 = vmul.f32 %v1577, %v1558
        %v1592 = vmul.f32 %v1577, %v1559
        %v1593 = vmul.f32 %v1577, %v1560
        %v1594 = vmul.f32 %v1577, %v1561
        %v1595 = vmul.f32 %v1577, %v1562
        %v1596 = vmul.f32 %v1577, %v1563
        %v1597 = vmul.f32 %v1577, %v1564
        %v1598 = vmul.f32 %v1577, %v1565
        %v1599 = vmul.f32 %v1577, %v1566
        %v1600 = vmul.f32 %v1577, %v1567
        %v1601 = vmul.f32 %v1577, %v1568
        %v1602 = vmul.f32 %v1577, %v1569
        %v1603 = vmul.f32 %v1577, %v1570
        %v1604 = vmul.f32 %v1577, %v1571
        %v1605 = vmul.f32 %v1577, %v1572
        %v1606 = vmul.f32 %v1577, %v1573
        %v1607 = vmul.f32 %v1577, %v1574
        %v1608 = vmul.f32 %v1577, %v1575
        %v1609 = vmul.f32 %v1577, %v1576
        %v1610 = vadd.f32 %v1513, %v1578
        %v1611 = vadd.f32 %v1514, %v1579
        %v1612 = vadd.f32 %v1515, %v1580
        %v1613 = vadd.f32 %v1516, %v1581
        %v1614 = vadd.f32 %v1517, %v1582
        %v1615 = vadd.f32 %v1518, %v1583
        %v1616 = vadd.f32 %v1519, %v1584
        %v1617 = vadd.f32 %v1520, %v1585
        %v1618 = vadd.f32 %v1521, %v1586
        %v1619 = vadd.f32 %v1522, %v1587
        %v1620 = vadd.f32 %v1523, %v1588
        %v1621 = vadd.f32 %v1524, %v1589
        %v1622 = vadd.f32 %v1525, %v1590
        %v1623 = vadd.f32 %v1526, %v1591
        %v1624 = vadd.f32 %v1527, %v1592
        %v1625 = vadd.f32 %v1528, %v1593
        %v1626 = vadd.f32 %v1529, %v1594
        %v1627 = vadd.f32 %v1530, %v1595
        %v1628 = vadd.f32 %v1531, %v1596
        %v1629 = vadd.f32 %v1532, %v1597
        %v1630 = vadd.f32 %v1533, %v1598
        %v1631 = vadd.f32 %v1534, %v1599
        %v1632 = vadd.f32 %v1535, %v1600
        %v1633 = vadd.f32 %v1536, %v1601
        %v1634 = vadd.f32 %v1537, %v1602
        %v1635 = vadd.f32 %v1538, %v1603
        %v1636 = vadd.f32 %v1539, %v1604
        %v1637 = vadd.f32 %v1540, %v1605
        %v1638 = vadd.f32 %v1541, %v1606
        %v1639 = vadd.f32 %v1542, %v1607
        %v1640 = vadd.f32 %v1543, %v1608
        %v1641 = vadd.f32 %v1544, %v1609
        %v1642 = vld [vmem:[%s636] sm:$0xff]
        %v1643 = vld [vmem:[%s636 + $0x8] sm:$0xff]
        %v1644 = vld [vmem:[%s636 + $0x18] sm:$0xff]
        %v1645 = vld [vmem:[%s636 + $0x20] sm:$0xff]
        %v1646 = vld [vmem:[%s636 + $0x30] sm:$0xff]
        %v1647 = vld [vmem:[%s636 + $0x38] sm:$0xff]
        %v1648 = vld [vmem:[%s636 + $0x48] sm:$0xff]
        %v1649 = vld [vmem:[%s636 + $0x50] sm:$0xff]
        %v1650 = vld [vmem:[%s636 + $0x60] sm:$0xff]
        %v1651 = vld [vmem:[%s636 + $0x68] sm:$0xff]
        %v1652 = vld [vmem:[%s636 + $0x78] sm:$0xff]
        %v1653 = vld [vmem:[%s636 + $0x80] sm:$0xff]
        %v1654 = vld [vmem:[%s636 + $0x90] sm:$0xff]
        %v1655 = vld [vmem:[%s636 + $0x98] sm:$0xff]
        %v1656 = vld [vmem:[%s636 + $0xa8] sm:$0xff]
        %v1657 = vld [vmem:[%s636 + $0xb0] sm:$0xff]
        %v1658 = vld [vmem:[%s636 + $0xc0] sm:$0xff]
        %v1659 = vld [vmem:[%s636 + $0xc8] sm:$0xff]
        %v1660 = vld [vmem:[%s636 + $0xd8] sm:$0xff]
        %v1661 = vld [vmem:[%s636 + $0xe0] sm:$0xff]
        %v1662 = vld [vmem:[%s636 + $0xf0] sm:$0xff]
        %v1663 = vld [vmem:[%s636 + $0xf8] sm:$0xff]
        %v1664 = vld [vmem:[%s636 + $0x108] sm:$0xff]
        %v1665 = vld [vmem:[%s636 + $0x110] sm:$0xff]
        %v1666 = vld [vmem:[%s636 + $0x120] sm:$0xff]
        %v1667 = vld [vmem:[%s636 + $0x128] sm:$0xff]
        %v1668 = vld [vmem:[%s636 + $0x138] sm:$0xff]
        %v1669 = vld [vmem:[%s636 + $0x140] sm:$0xff]
        %v1670 = vld [vmem:[%s636 + $0x150] sm:$0xff]
        %v1671 = vld [vmem:[%s636 + $0x158] sm:$0xff]
        %v1672 = vld [vmem:[%s636 + $0x168] sm:$0xff]
        %v1673 = vld [vmem:[%s636 + $0x170] sm:$0xff]
        %v1674 = vstv %s605
        %v1675 = vmul.f32 %v1674, %v1642
        %v1676 = vmul.f32 %v1674, %v1643
        %v1677 = vmul.f32 %v1674, %v1644
        %v1678 = vmul.f32 %v1674, %v1645
        %v1679 = vmul.f32 %v1674, %v1646
        %v1680 = vmul.f32 %v1674, %v1647
        %v1681 = vmul.f32 %v1674, %v1648
        %v1682 = vmul.f32 %v1674, %v1649
        %v1683 = vmul.f32 %v1674, %v1650
        %v1684 = vmul.f32 %v1674, %v1651
        %v1685 = vmul.f32 %v1674, %v1652
        %v1686 = vmul.f32 %v1674, %v1653
        %v1687 = vmul.f32 %v1674, %v1654
        %v1688 = vmul.f32 %v1674, %v1655
        %v1689 = vmul.f32 %v1674, %v1656
        %v1690 = vmul.f32 %v1674, %v1657
        %v1691 = vmul.f32 %v1674, %v1658
        %v1692 = vmul.f32 %v1674, %v1659
        %v1693 = vmul.f32 %v1674, %v1660
        %v1694 = vmul.f32 %v1674, %v1661
        %v1695 = vmul.f32 %v1674, %v1662
        %v1696 = vmul.f32 %v1674, %v1663
        %v1697 = vmul.f32 %v1674, %v1664
        %v1698 = vmul.f32 %v1674, %v1665
        %v1699 = vmul.f32 %v1674, %v1666
        %v1700 = vmul.f32 %v1674, %v1667
        %v1701 = vmul.f32 %v1674, %v1668
        %v1702 = vmul.f32 %v1674, %v1669
        %v1703 = vmul.f32 %v1674, %v1670
        %v1704 = vmul.f32 %v1674, %v1671
        %v1705 = vmul.f32 %v1674, %v1672
        %v1706 = vmul.f32 %v1674, %v1673
        %v1707 = vadd.f32 %v1610, %v1675
        %v1708 = vadd.f32 %v1611, %v1676
        %v1709 = vadd.f32 %v1612, %v1677
        %v1710 = vadd.f32 %v1613, %v1678
        %v1711 = vadd.f32 %v1614, %v1679
        %v1712 = vadd.f32 %v1615, %v1680
        %v1713 = vadd.f32 %v1616, %v1681
        %v1714 = vadd.f32 %v1617, %v1682
        %v1715 = vadd.f32 %v1618, %v1683
        %v1716 = vadd.f32 %v1619, %v1684
        %v1717 = vadd.f32 %v1620, %v1685
        %v1718 = vadd.f32 %v1621, %v1686
        %v1719 = vadd.f32 %v1622, %v1687
        %v1720 = vadd.f32 %v1623, %v1688
        %v1721 = vadd.f32 %v1624, %v1689
        %v1722 = vadd.f32 %v1625, %v1690
        %v1723 = vadd.f32 %v1626, %v1691
        %v1724 = vadd.f32 %v1627, %v1692
        %v1725 = vadd.f32 %v1628, %v1693
        %v1726 = vadd.f32 %v1629, %v1694
        %v1727 = vadd.f32 %v1630, %v1695
        %v1728 = vadd.f32 %v1631, %v1696
        %v1729 = vadd.f32 %v1632, %v1697
        %v1730 = vadd.f32 %v1633, %v1698
        %v1731 = vadd.f32 %v1634, %v1699
        %v1732 = vadd.f32 %v1635, %v1700
        %v1733 = vadd.f32 %v1636, %v1701
        %v1734 = vadd.f32 %v1637, %v1702
        %v1735 = vadd.f32 %v1638, %v1703
        %v1736 = vadd.f32 %v1639, %v1704
        %v1737 = vadd.f32 %v1640, %v1705
        %v1738 = vadd.f32 %v1641, %v1706
        %v1739 = vld [vmem:[%s1026] sm:$0xff]
        %v1740 = vld [vmem:[%s1026 + $0x8] sm:$0xff]
        %v1741 = vld [vmem:[%s1026 + $0x18] sm:$0xff]
        %v1742 = vld [vmem:[%s1026 + $0x20] sm:$0xff]
        %v1743 = vld [vmem:[%s1026 + $0x30] sm:$0xff]
        %v1744 = vld [vmem:[%s1026 + $0x38] sm:$0xff]
        %v1745 = vld [vmem:[%s1026 + $0x48] sm:$0xff]
        %v1746 = vld [vmem:[%s1026 + $0x50] sm:$0xff]
        %v1747 = vld [vmem:[%s1026 + $0x60] sm:$0xff]
        %v1748 = vld [vmem:[%s1026 + $0x68] sm:$0xff]
        %v1749 = vld [vmem:[%s1026 + $0x78] sm:$0xff]
        %v1750 = vld [vmem:[%s1026 + $0x80] sm:$0xff]
        %v1751 = vld [vmem:[%s1026 + $0x90] sm:$0xff]
        %v1752 = vld [vmem:[%s1026 + $0x98] sm:$0xff]
        %v1753 = vld [vmem:[%s1026 + $0xa8] sm:$0xff]
        %v1754 = vld [vmem:[%s1026 + $0xb0] sm:$0xff]
        %v1755 = vld [vmem:[%s1026 + $0xc0] sm:$0xff]
        %v1756 = vld [vmem:[%s1026 + $0xc8] sm:$0xff]
        %v1757 = vld [vmem:[%s1026 + $0xd8] sm:$0xff]
        %v1758 = vld [vmem:[%s1026 + $0xe0] sm:$0xff]
        %v1759 = vld [vmem:[%s1026 + $0xf0] sm:$0xff]
        %v1760 = vld [vmem:[%s1026 + $0xf8] sm:$0xff]
        %v1761 = vld [vmem:[%s1026 + $0x108] sm:$0xff]
        %v1762 = vld [vmem:[%s1026 + $0x110] sm:$0xff]
        %v1763 = vld [vmem:[%s1026 + $0x120] sm:$0xff]
        %v1764 = vld [vmem:[%s1026 + $0x128] sm:$0xff]
        %v1765 = vld [vmem:[%s1026 + $0x138] sm:$0xff]
        %v1766 = vld [vmem:[%s1026 + $0x140] sm:$0xff]
        %v1767 = vld [vmem:[%s1026 + $0x150] sm:$0xff]
        %v1768 = vld [vmem:[%s1026 + $0x158] sm:$0xff]
        %v1769 = vld [vmem:[%s1026 + $0x168] sm:$0xff]
        %v1770 = vld [vmem:[%s1026 + $0x170] sm:$0xff]
        %v1771 = vstv %s614
        %v1772 = vmul.f32 %v1771, %v1739
        %v1773 = vmul.f32 %v1771, %v1740
        %v1774 = vmul.f32 %v1771, %v1741
        %v1775 = vmul.f32 %v1771, %v1742
        %v1776 = vmul.f32 %v1771, %v1743
        %v1777 = vmul.f32 %v1771, %v1744
        %v1778 = vmul.f32 %v1771, %v1745
        %v1779 = vmul.f32 %v1771, %v1746
        %v1780 = vmul.f32 %v1771, %v1747
        %v1781 = vmul.f32 %v1771, %v1748
        %v1782 = vmul.f32 %v1771, %v1749
        %v1783 = vmul.f32 %v1771, %v1750
        %v1784 = vmul.f32 %v1771, %v1751
        %v1785 = vmul.f32 %v1771, %v1752
        %v1786 = vmul.f32 %v1771, %v1753
        %v1787 = vmul.f32 %v1771, %v1754
        %v1788 = vmul.f32 %v1771, %v1755
        %v1789 = vmul.f32 %v1771, %v1756
        %v1790 = vmul.f32 %v1771, %v1757
        %v1791 = vmul.f32 %v1771, %v1758
        %v1792 = vmul.f32 %v1771, %v1759
        %v1793 = vmul.f32 %v1771, %v1760
        %v1794 = vmul.f32 %v1771, %v1761
        %v1795 = vmul.f32 %v1771, %v1762
        %v1796 = vmul.f32 %v1771, %v1763
        %v1797 = vmul.f32 %v1771, %v1764
        %v1798 = vmul.f32 %v1771, %v1765
        %v1799 = vmul.f32 %v1771, %v1766
        %v1800 = vmul.f32 %v1771, %v1767
        %v1801 = vmul.f32 %v1771, %v1768
        %v1802 = vmul.f32 %v1771, %v1769
        %v1803 = vmul.f32 %v1771, %v1770
        %v1804 = vadd.f32 %v1707, %v1772
        %v1805 = vadd.f32 %v1708, %v1773
        %v1806 = vadd.f32 %v1709, %v1774
        %v1807 = vadd.f32 %v1710, %v1775
        %v1808 = vadd.f32 %v1711, %v1776
        %v1809 = vadd.f32 %v1712, %v1777
        %v1810 = vadd.f32 %v1713, %v1778
        %v1811 = vadd.f32 %v1714, %v1779
        %v1812 = vadd.f32 %v1715, %v1780
        %v1813 = vadd.f32 %v1716, %v1781
        %v1814 = vadd.f32 %v1717, %v1782
        %v1815 = vadd.f32 %v1718, %v1783
        %v1816 = vadd.f32 %v1719, %v1784
        %v1817 = vadd.f32 %v1720, %v1785
        %v1818 = vadd.f32 %v1721, %v1786
        %v1819 = vadd.f32 %v1722, %v1787
        %v1820 = vadd.f32 %v1723, %v1788
        %v1821 = vadd.f32 %v1724, %v1789
        %v1822 = vadd.f32 %v1725, %v1790
        %v1823 = vadd.f32 %v1726, %v1791
        %v1824 = vadd.f32 %v1727, %v1792
        %v1825 = vadd.f32 %v1728, %v1793
        %v1826 = vadd.f32 %v1729, %v1794
        %v1827 = vadd.f32 %v1730, %v1795
        %v1828 = vadd.f32 %v1731, %v1796
        %v1829 = vadd.f32 %v1732, %v1797
        %v1830 = vadd.f32 %v1733, %v1798
        %v1831 = vadd.f32 %v1734, %v1799
        %v1832 = vadd.f32 %v1735, %v1800
        %v1833 = vadd.f32 %v1736, %v1801
        %v1834 = vadd.f32 %v1737, %v1802
        %v1835 = vadd.f32 %v1738, %v1803
        %v1836 = vld [vmem:[%s636 + $0x1] sm:$0xff]
        %v1837 = vld [vmem:[%s636 + $0x9] sm:$0xff]
        %v1838 = vld [vmem:[%s636 + $0x19] sm:$0xff]
        %v1839 = vld [vmem:[%s636 + $0x21] sm:$0xff]
        %v1840 = vld [vmem:[%s636 + $0x31] sm:$0xff]
        %v1841 = vld [vmem:[%s636 + $0x39] sm:$0xff]
        %v1842 = vld [vmem:[%s636 + $0x49] sm:$0xff]
        %v1843 = vld [vmem:[%s636 + $0x51] sm:$0xff]
        %v1844 = vld [vmem:[%s636 + $0x61] sm:$0xff]
        %v1845 = vld [vmem:[%s636 + $0x69] sm:$0xff]
        %v1846 = vld [vmem:[%s636 + $0x79] sm:$0xff]
        %v1847 = vld [vmem:[%s636 + $0x81] sm:$0xff]
        %v1848 = vld [vmem:[%s636 + $0x91] sm:$0xff]
        %v1849 = vld [vmem:[%s636 + $0x99] sm:$0xff]
        %v1850 = vld [vmem:[%s636 + $0xa9] sm:$0xff]
        %v1851 = vld [vmem:[%s636 + $0xb1] sm:$0xff]
        %v1852 = vld [vmem:[%s636 + $0xc1] sm:$0xff]
        %v1853 = vld [vmem:[%s636 + $0xc9] sm:$0xff]
        %v1854 = vld [vmem:[%s636 + $0xd9] sm:$0xff]
        %v1855 = vld [vmem:[%s636 + $0xe1] sm:$0xff]
        %v1856 = vld [vmem:[%s636 + $0xf1] sm:$0xff]
        %v1857 = vld [vmem:[%s636 + $0xf9] sm:$0xff]
        %v1858 = vld [vmem:[%s636 + $0x109] sm:$0xff]
        %v1859 = vld [vmem:[%s636 + $0x111] sm:$0xff]
        %v1860 = vld [vmem:[%s636 + $0x121] sm:$0xff]
        %v1861 = vld [vmem:[%s636 + $0x129] sm:$0xff]
        %v1862 = vld [vmem:[%s636 + $0x139] sm:$0xff]
        %v1863 = vld [vmem:[%s636 + $0x141] sm:$0xff]
        %v1864 = vld [vmem:[%s636 + $0x151] sm:$0xff]
        %v1865 = vld [vmem:[%s636 + $0x159] sm:$0xff]
        %v1866 = vld [vmem:[%s636 + $0x169] sm:$0xff]
        %v1867 = vld [vmem:[%s636 + $0x171] sm:$0xff]
        %v1868 = vstv %s606
        %v1869 = vmul.f32 %v1868, %v1836
        %v1870 = vmul.f32 %v1868, %v1837
        %v1871 = vmul.f32 %v1868, %v1838
        %v1872 = vmul.f32 %v1868, %v1839
        %v1873 = vmul.f32 %v1868, %v1840
        %v1874 = vmul.f32 %v1868, %v1841
        %v1875 = vmul.f32 %v1868, %v1842
        %v1876 = vmul.f32 %v1868, %v1843
        %v1877 = vmul.f32 %v1868, %v1844
        %v1878 = vmul.f32 %v1868, %v1845
        %v1879 = vmul.f32 %v1868, %v1846
        %v1880 = vmul.f32 %v1868, %v1847
        %v1881 = vmul.f32 %v1868, %v1848
        %v1882 = vmul.f32 %v1868, %v1849
        %v1883 = vmul.f32 %v1868, %v1850
        %v1884 = vmul.f32 %v1868, %v1851
        %v1885 = vmul.f32 %v1868, %v1852
        %v1886 = vmul.f32 %v1868, %v1853
        %v1887 = vmul.f32 %v1868, %v1854
        %v1888 = vmul.f32 %v1868, %v1855
        %v1889 = vmul.f32 %v1868, %v1856
        %v1890 = vmul.f32 %v1868, %v1857
        %v1891 = vmul.f32 %v1868, %v1858
        %v1892 = vmul.f32 %v1868, %v1859
        %v1893 = vmul.f32 %v1868, %v1860
        %v1894 = vmul.f32 %v1868, %v1861
        %v1895 = vmul.f32 %v1868, %v1862
        %v1896 = vmul.f32 %v1868, %v1863
        %v1897 = vmul.f32 %v1868, %v1864
        %v1898 = vmul.f32 %v1868, %v1865
        %v1899 = vmul.f32 %v1868, %v1866
        %v1900 = vmul.f32 %v1868, %v1867
        %v1901 = vadd.f32 %v1804, %v1869
        %v1902 = vadd.f32 %v1805, %v1870
        %v1903 = vadd.f32 %v1806, %v1871
        %v1904 = vadd.f32 %v1807, %v1872
        %v1905 = vadd.f32 %v1808, %v1873
        %v1906 = vadd.f32 %v1809, %v1874
        %v1907 = vadd.f32 %v1810, %v1875
        %v1908 = vadd.f32 %v1811, %v1876
        %v1909 = vadd.f32 %v1812, %v1877
        %v1910 = vadd.f32 %v1813, %v1878
        %v1911 = vadd.f32 %v1814, %v1879
        %v1912 = vadd.f32 %v1815, %v1880
        %v1913 = vadd.f32 %v1816, %v1881
        %v1914 = vadd.f32 %v1817, %v1882
        %v1915 = vadd.f32 %v1818, %v1883
        %v1916 = vadd.f32 %v1819, %v1884
        %v1917 = vadd.f32 %v1820, %v1885
        %v1918 = vadd.f32 %v1821, %v1886
        %v1919 = vadd.f32 %v1822, %v1887
        %v1920 = vadd.f32 %v1823, %v1888
        %v1921 = vadd.f32 %v1824, %v1889
        %v1922 = vadd.f32 %v1825, %v1890
        %v1923 = vadd.f32 %v1826, %v1891
        %v1924 = vadd.f32 %v1827, %v1892
        %v1925 = vadd.f32 %v1828, %v1893
        %v1926 = vadd.f32 %v1829, %v1894
        %v1927 = vadd.f32 %v1830, %v1895
        %v1928 = vadd.f32 %v1831, %v1896
        %v1929 = vadd.f32 %v1832, %v1897
        %v1930 = vadd.f32 %v1833, %v1898
        %v1931 = vadd.f32 %v1834, %v1899
        %v1932 = vadd.f32 %v1835, %v1900
        %v1933 = vld [vmem:[%s1026 + $0x1] sm:$0xff]
        %v1934 = vld [vmem:[%s1026 + $0x9] sm:$0xff]
        %v1935 = vld [vmem:[%s1026 + $0x19] sm:$0xff]
        %v1936 = vld [vmem:[%s1026 + $0x21] sm:$0xff]
        %v1937 = vld [vmem:[%s1026 + $0x31] sm:$0xff]
        %v1938 = vld [vmem:[%s1026 + $0x39] sm:$0xff]
        %v1939 = vld [vmem:[%s1026 + $0x49] sm:$0xff]
        %v1940 = vld [vmem:[%s1026 + $0x51] sm:$0xff]
        %v1941 = vld [vmem:[%s1026 + $0x61] sm:$0xff]
        %v1942 = vld [vmem:[%s1026 + $0x69] sm:$0xff]
        %v1943 = vld [vmem:[%s1026 + $0x79] sm:$0xff]
        %v1944 = vld [vmem:[%s1026 + $0x81] sm:$0xff]
        %v1945 = vld [vmem:[%s1026 + $0x91] sm:$0xff]
        %v1946 = vld [vmem:[%s1026 + $0x99] sm:$0xff]
        %v1947 = vld [vmem:[%s1026 + $0xa9] sm:$0xff]
        %v1948 = vld [vmem:[%s1026 + $0xb1] sm:$0xff]
        %v1949 = vld [vmem:[%s1026 + $0xc1] sm:$0xff]
        %v1950 = vld [vmem:[%s1026 + $0xc9] sm:$0xff]
        %v1951 = vld [vmem:[%s1026 + $0xd9] sm:$0xff]
        %v1952 = vld [vmem:[%s1026 + $0xe1] sm:$0xff]
        %v1953 = vld [vmem:[%s1026 + $0xf1] sm:$0xff]
        %v1954 = vld [vmem:[%s1026 + $0xf9] sm:$0xff]
        %v1955 = vld [vmem:[%s1026 + $0x109] sm:$0xff]
        %v1956 = vld [vmem:[%s1026 + $0x111] sm:$0xff]
        %v1957 = vld [vmem:[%s1026 + $0x121] sm:$0xff]
        %v1958 = vld [vmem:[%s1026 + $0x129] sm:$0xff]
        %v1959 = vld [vmem:[%s1026 + $0x139] sm:$0xff]
        %v1960 = vld [vmem:[%s1026 + $0x141] sm:$0xff]
        %v1961 = vld [vmem:[%s1026 + $0x151] sm:$0xff]
        %v1962 = vld [vmem:[%s1026 + $0x159] sm:$0xff]
        %v1963 = vld [vmem:[%s1026 + $0x169] sm:$0xff]
        %v1964 = vld [vmem:[%s1026 + $0x171] sm:$0xff]
        %v1965 = vstv %s615
        %v1966 = vmul.f32 %v1965, %v1933
        %v1967 = vmul.f32 %v1965, %v1934
        %v1968 = vmul.f32 %v1965, %v1935
        %v1969 = vmul.f32 %v1965, %v1936
        %v1970 = vmul.f32 %v1965, %v1937
        %v1971 = vmul.f32 %v1965, %v1938
        %v1972 = vmul.f32 %v1965, %v1939
        %v1973 = vmul.f32 %v1965, %v1940
        %v1974 = vmul.f32 %v1965, %v1941
        %v1975 = vmul.f32 %v1965, %v1942
        %v1976 = vmul.f32 %v1965, %v1943
        %v1977 = vmul.f32 %v1965, %v1944
        %v1978 = vmul.f32 %v1965, %v1945
        %v1979 = vmul.f32 %v1965, %v1946
        %v1980 = vmul.f32 %v1965, %v1947
        %v1981 = vmul.f32 %v1965, %v1948
        %v1982 = vmul.f32 %v1965, %v1949
        %v1983 = vmul.f32 %v1965, %v1950
        %v1984 = vmul.f32 %v1965, %v1951
        %v1985 = vmul.f32 %v1965, %v1952
        %v1986 = vmul.f32 %v1965, %v1953
        %v1987 = vmul.f32 %v1965, %v1954
        %v1988 = vmul.f32 %v1965, %v1955
        %v1989 = vmul.f32 %v1965, %v1956
        %v1990 = vmul.f32 %v1965, %v1957
        %v1991 = vmul.f32 %v1965, %v1958
        %v1992 = vmul.f32 %v1965, %v1959
        %v1993 = vmul.f32 %v1965, %v1960
        %v1994 = vmul.f32 %v1965, %v1961
        %v1995 = vmul.f32 %v1965, %v1962
        %v1996 = vmul.f32 %v1965, %v1963
        %v1997 = vmul.f32 %v1965, %v1964
        %v1998 = vadd.f32 %v1901, %v1966
        %v1999 = vadd.f32 %v1902, %v1967
        %v2000 = vadd.f32 %v1903, %v1968
        %v2001 = vadd.f32 %v1904, %v1969
        %v2002 = vadd.f32 %v1905, %v1970
        %v2003 = vadd.f32 %v1906, %v1971
        %v2004 = vadd.f32 %v1907, %v1972
        %v2005 = vadd.f32 %v1908, %v1973
        %v2006 = vadd.f32 %v1909, %v1974
        %v2007 = vadd.f32 %v1910, %v1975
        %v2008 = vadd.f32 %v1911, %v1976
        %v2009 = vadd.f32 %v1912, %v1977
        %v2010 = vadd.f32 %v1913, %v1978
        %v2011 = vadd.f32 %v1914, %v1979
        %v2012 = vadd.f32 %v1915, %v1980
        %v2013 = vadd.f32 %v1916, %v1981
        %v2014 = vadd.f32 %v1917, %v1982
        %v2015 = vadd.f32 %v1918, %v1983
        %v2016 = vadd.f32 %v1919, %v1984
        %v2017 = vadd.f32 %v1920, %v1985
        %v2018 = vadd.f32 %v1921, %v1986
        %v2019 = vadd.f32 %v1922, %v1987
        %v2020 = vadd.f32 %v1923, %v1988
        %v2021 = vadd.f32 %v1924, %v1989
        %v2022 = vadd.f32 %v1925, %v1990
        %v2023 = vadd.f32 %v1926, %v1991
        %v2024 = vadd.f32 %v1927, %v1992
        %v2025 = vadd.f32 %v1928, %v1993
        %v2026 = vadd.f32 %v1929, %v1994
        %v2027 = vadd.f32 %v1930, %v1995
        %v2028 = vadd.f32 %v1931, %v1996
        %v2029 = vadd.f32 %v1932, %v1997
        %v2030 = vld [vmem:[%s636 + $0x2] sm:$0xff]
        %v2031 = vld [vmem:[%s636 + $0xa] sm:$0xff]
        %v2032 = vld [vmem:[%s636 + $0x1a] sm:$0xff]
        %v2033 = vld [vmem:[%s636 + $0x22] sm:$0xff]
        %v2034 = vld [vmem:[%s636 + $0x32] sm:$0xff]
        %v2035 = vld [vmem:[%s636 + $0x3a] sm:$0xff]
        %v2036 = vld [vmem:[%s636 + $0x4a] sm:$0xff]
        %v2037 = vld [vmem:[%s636 + $0x52] sm:$0xff]
        %v2038 = vld [vmem:[%s636 + $0x62] sm:$0xff]
        %v2039 = vld [vmem:[%s636 + $0x6a] sm:$0xff]
        %v2040 = vld [vmem:[%s636 + $0x7a] sm:$0xff]
        %v2041 = vld [vmem:[%s636 + $0x82] sm:$0xff]
        %v2042 = vld [vmem:[%s636 + $0x92] sm:$0xff]
        %v2043 = vld [vmem:[%s636 + $0x9a] sm:$0xff]
        %v2044 = vld [vmem:[%s636 + $0xaa] sm:$0xff]
        %v2045 = vld [vmem:[%s636 + $0xb2] sm:$0xff]
        %v2046 = vld [vmem:[%s636 + $0xc2] sm:$0xff]
        %v2047 = vld [vmem:[%s636 + $0xca] sm:$0xff]
        %v2048 = vld [vmem:[%s636 + $0xda] sm:$0xff]
        %v2049 = vld [vmem:[%s636 + $0xe2] sm:$0xff]
        %v2050 = vld [vmem:[%s636 + $0xf2] sm:$0xff]
        %v2051 = vld [vmem:[%s636 + $0xfa] sm:$0xff]
        %v2052 = vld [vmem:[%s636 + $0x10a] sm:$0xff]
        %v2053 = vld [vmem:[%s636 + $0x112] sm:$0xff]
        %v2054 = vld [vmem:[%s636 + $0x122] sm:$0xff]
        %v2055 = vld [vmem:[%s636 + $0x12a] sm:$0xff]
        %v2056 = vld [vmem:[%s636 + $0x13a] sm:$0xff]
        %v2057 = vld [vmem:[%s636 + $0x142] sm:$0xff]
        %v2058 = vld [vmem:[%s636 + $0x152] sm:$0xff]
        %v2059 = vld [vmem:[%s636 + $0x15a] sm:$0xff]
        %v2060 = vld [vmem:[%s636 + $0x16a] sm:$0xff]
        %v2061 = vld [vmem:[%s636 + $0x172] sm:$0xff]
        %v2062 = vstv %s607
        %v2063 = vmul.f32 %v2062, %v2030
        %v2064 = vmul.f32 %v2062, %v2031
        %v2065 = vmul.f32 %v2062, %v2032
        %v2066 = vmul.f32 %v2062, %v2033
        %v2067 = vmul.f32 %v2062, %v2034
        %v2068 = vmul.f32 %v2062, %v2035
        %v2069 = vmul.f32 %v2062, %v2036
        %v2070 = vmul.f32 %v2062, %v2037
        %v2071 = vmul.f32 %v2062, %v2038
        %v2072 = vmul.f32 %v2062, %v2039
        %v2073 = vmul.f32 %v2062, %v2040
        %v2074 = vmul.f32 %v2062, %v2041
        %v2075 = vmul.f32 %v2062, %v2042
        %v2076 = vmul.f32 %v2062, %v2043
        %v2077 = vmul.f32 %v2062, %v2044
        %v2078 = vmul.f32 %v2062, %v2045
        %v2079 = vmul.f32 %v2062, %v2046
        %v2080 = vmul.f32 %v2062, %v2047
        %v2081 = vmul.f32 %v2062, %v2048
        %v2082 = vmul.f32 %v2062, %v2049
        %v2083 = vmul.f32 %v2062, %v2050
        %v2084 = vmul.f32 %v2062, %v2051
        %v2085 = vmul.f32 %v2062, %v2052
        %v2086 = vmul.f32 %v2062, %v2053
        %v2087 = vmul.f32 %v2062, %v2054
        %v2088 = vmul.f32 %v2062, %v2055
        %v2089 = vmul.f32 %v2062, %v2056
        %v2090 = vmul.f32 %v2062, %v2057
        %v2091 = vmul.f32 %v2062, %v2058
        %v2092 = vmul.f32 %v2062, %v2059
        %v2093 = vmul.f32 %v2062, %v2060
        %v2094 = vmul.f32 %v2062, %v2061
        %v2095 = vadd.f32 %v1998, %v2063
        %v2096 = vadd.f32 %v1999, %v2064
        %v2097 = vadd.f32 %v2000, %v2065
        %v2098 = vadd.f32 %v2001, %v2066
        %v2099 = vadd.f32 %v2002, %v2067
        %v2100 = vadd.f32 %v2003, %v2068
        %v2101 = vadd.f32 %v2004, %v2069
        %v2102 = vadd.f32 %v2005, %v2070
        %v2103 = vadd.f32 %v2006, %v2071
        %v2104 = vadd.f32 %v2007, %v2072
        %v2105 = vadd.f32 %v2008, %v2073
        %v2106 = vadd.f32 %v2009, %v2074
        %v2107 = vadd.f32 %v2010, %v2075
        %v2108 = vadd.f32 %v2011, %v2076
        %v2109 = vadd.f32 %v2012, %v2077
        %v2110 = vadd.f32 %v2013, %v2078
        %v2111 = vadd.f32 %v2014, %v2079
        %v2112 = vadd.f32 %v2015, %v2080
        %v2113 = vadd.f32 %v2016, %v2081
        %v2114 = vadd.f32 %v2017, %v2082
        %v2115 = vadd.f32 %v2018, %v2083
        %v2116 = vadd.f32 %v2019, %v2084
        %v2117 = vadd.f32 %v2020, %v2085
        %v2118 = vadd.f32 %v2021, %v2086
        %v2119 = vadd.f32 %v2022, %v2087
        %v2120 = vadd.f32 %v2023, %v2088
        %v2121 = vadd.f32 %v2024, %v2089
        %v2122 = vadd.f32 %v2025, %v2090
        %v2123 = vadd.f32 %v2026, %v2091
        %v2124 = vadd.f32 %v2027, %v2092
        %v2125 = vadd.f32 %v2028, %v2093
        %v2126 = vadd.f32 %v2029, %v2094
        %v2127 = vld [vmem:[%s1026 + $0x2] sm:$0xff]
        %v2128 = vld [vmem:[%s1026 + $0xa] sm:$0xff]
        %v2129 = vld [vmem:[%s1026 + $0x1a] sm:$0xff]
        %v2130 = vld [vmem:[%s1026 + $0x22] sm:$0xff]
        %v2131 = vld [vmem:[%s1026 + $0x32] sm:$0xff]
        %v2132 = vld [vmem:[%s1026 + $0x3a] sm:$0xff]
        %v2133 = vld [vmem:[%s1026 + $0x4a] sm:$0xff]
        %v2134 = vld [vmem:[%s1026 + $0x52] sm:$0xff]
        %v2135 = vld [vmem:[%s1026 + $0x62] sm:$0xff]
        %v2136 = vld [vmem:[%s1026 + $0x6a] sm:$0xff]
        %v2137 = vld [vmem:[%s1026 + $0x7a] sm:$0xff]
        %v2138 = vld [vmem:[%s1026 + $0x82] sm:$0xff]
        %v2139 = vld [vmem:[%s1026 + $0x92] sm:$0xff]
        %v2140 = vld [vmem:[%s1026 + $0x9a] sm:$0xff]
        %v2141 = vld [vmem:[%s1026 + $0xaa] sm:$0xff]
        %v2142 = vld [vmem:[%s1026 + $0xb2] sm:$0xff]
        %v2143 = vld [vmem:[%s1026 + $0xc2] sm:$0xff]
        %v2144 = vld [vmem:[%s1026 + $0xca] sm:$0xff]
        %v2145 = vld [vmem:[%s1026 + $0xda] sm:$0xff]
        %v2146 = vld [vmem:[%s1026 + $0xe2] sm:$0xff]
        %v2147 = vld [vmem:[%s1026 + $0xf2] sm:$0xff]
        %v2148 = vld [vmem:[%s1026 + $0xfa] sm:$0xff]
        %v2149 = vld [vmem:[%s1026 + $0x10a] sm:$0xff]
        %v2150 = vld [vmem:[%s1026 + $0x112] sm:$0xff]
        %v2151 = vld [vmem:[%s1026 + $0x122] sm:$0xff]
        %v2152 = vld [vmem:[%s1026 + $0x12a] sm:$0xff]
        %v2153 = vld [vmem:[%s1026 + $0x13a] sm:$0xff]
        %v2154 = vld [vmem:[%s1026 + $0x142] sm:$0xff]
        %v2155 = vld [vmem:[%s1026 + $0x152] sm:$0xff]
        %v2156 = vld [vmem:[%s1026 + $0x15a] sm:$0xff]
        %v2157 = vld [vmem:[%s1026 + $0x16a] sm:$0xff]
        %v2158 = vld [vmem:[%s1026 + $0x172] sm:$0xff]
        %v2159 = vstv %s616
        %v2160 = vmul.f32 %v2159, %v2127
        %v2161 = vmul.f32 %v2159, %v2128
        %v2162 = vmul.f32 %v2159, %v2129
        %v2163 = vmul.f32 %v2159, %v2130
        %v2164 = vmul.f32 %v2159, %v2131
        %v2165 = vmul.f32 %v2159, %v2132
        %v2166 = vmul.f32 %v2159, %v2133
        %v2167 = vmul.f32 %v2159, %v2134
        %v2168 = vmul.f32 %v2159, %v2135
        %v2169 = vmul.f32 %v2159, %v2136
        %v2170 = vmul.f32 %v2159, %v2137
        %v2171 = vmul.f32 %v2159, %v2138
        %v2172 = vmul.f32 %v2159, %v2139
        %v2173 = vmul.f32 %v2159, %v2140
        %v2174 = vmul.f32 %v2159, %v2141
        %v2175 = vmul.f32 %v2159, %v2142
        %v2176 = vmul.f32 %v2159, %v2143
        %v2177 = vmul.f32 %v2159, %v2144
        %v2178 = vmul.f32 %v2159, %v2145
        %v2179 = vmul.f32 %v2159, %v2146
        %v2180 = vmul.f32 %v2159, %v2147
        %v2181 = vmul.f32 %v2159, %v2148
        %v2182 = vmul.f32 %v2159, %v2149
        %v2183 = vmul.f32 %v2159, %v2150
        %v2184 = vmul.f32 %v2159, %v2151
        %v2185 = vmul.f32 %v2159, %v2152
        %v2186 = vmul.f32 %v2159, %v2153
        %v2187 = vmul.f32 %v2159, %v2154
        %v2188 = vmul.f32 %v2159, %v2155
        %v2189 = vmul.f32 %v2159, %v2156
        %v2190 = vmul.f32 %v2159, %v2157
        %v2191 = vmul.f32 %v2159, %v2158
        %v2192 = vadd.f32 %v2095, %v2160
        %v2193 = vadd.f32 %v2096, %v2161
        %v2194 = vadd.f32 %v2097, %v2162
        %v2195 = vadd.f32 %v2098, %v2163
        %v2196 = vadd.f32 %v2099, %v2164
        %v2197 = vadd.f32 %v2100, %v2165
        %v2198 = vadd.f32 %v2101, %v2166
        %v2199 = vadd.f32 %v2102, %v2167
        %v2200 = vadd.f32 %v2103, %v2168
        %v2201 = vadd.f32 %v2104, %v2169
        %v2202 = vadd.f32 %v2105, %v2170
        %v2203 = vadd.f32 %v2106, %v2171
        %v2204 = vadd.f32 %v2107, %v2172
        %v2205 = vadd.f32 %v2108, %v2173
        %v2206 = vadd.f32 %v2109, %v2174
        %v2207 = vadd.f32 %v2110, %v2175
        %v2208 = vadd.f32 %v2111, %v2176
        %v2209 = vadd.f32 %v2112, %v2177
        %v2210 = vadd.f32 %v2113, %v2178
        %v2211 = vadd.f32 %v2114, %v2179
        %v2212 = vadd.f32 %v2115, %v2180
        %v2213 = vadd.f32 %v2116, %v2181
        %v2214 = vadd.f32 %v2117, %v2182
        %v2215 = vadd.f32 %v2118, %v2183
        %v2216 = vadd.f32 %v2119, %v2184
        %v2217 = vadd.f32 %v2120, %v2185
        %v2218 = vadd.f32 %v2121, %v2186
        %v2219 = vadd.f32 %v2122, %v2187
        %v2220 = vadd.f32 %v2123, %v2188
        %v2221 = vadd.f32 %v2124, %v2189
        %v2222 = vadd.f32 %v2125, %v2190
        %v2223 = vadd.f32 %v2126, %v2191
        %s2224 = scalar_lea.vmem [#allocation2], 48
        %v2225 = vld [vmem:[%s2224] sm:$0xff]
        %v2226 = vld [vmem:[%s2224 + $0x8] sm:$0xff]
        %v2227 = vld [vmem:[%s2224 + $0x18] sm:$0xff]
        %v2228 = vld [vmem:[%s2224 + $0x20] sm:$0xff]
        %v2229 = vld [vmem:[%s2224 + $0x30] sm:$0xff]
        %v2230 = vld [vmem:[%s2224 + $0x38] sm:$0xff]
        %v2231 = vld [vmem:[%s2224 + $0x48] sm:$0xff]
        %v2232 = vld [vmem:[%s2224 + $0x50] sm:$0xff]
        %v2233 = vld [vmem:[%s2224 + $0x60] sm:$0xff]
        %v2234 = vld [vmem:[%s2224 + $0x68] sm:$0xff]
        %v2235 = vld [vmem:[%s2224 + $0x78] sm:$0xff]
        %v2236 = vld [vmem:[%s2224 + $0x80] sm:$0xff]
        %v2237 = vld [vmem:[%s2224 + $0x90] sm:$0xff]
        %v2238 = vld [vmem:[%s2224 + $0x98] sm:$0xff]
        %v2239 = vld [vmem:[%s2224 + $0xa8] sm:$0xff]
        %v2240 = vld [vmem:[%s2224 + $0xb0] sm:$0xff]
        %v2241 = vld [vmem:[%s2224 + $0xc0] sm:$0xff]
        %v2242 = vld [vmem:[%s2224 + $0xc8] sm:$0xff]
        %v2243 = vld [vmem:[%s2224 + $0xd8] sm:$0xff]
        %v2244 = vld [vmem:[%s2224 + $0xe0] sm:$0xff]
        %v2245 = vld [vmem:[%s2224 + $0xf0] sm:$0xff]
        %v2246 = vld [vmem:[%s2224 + $0xf8] sm:$0xff]
        %v2247 = vld [vmem:[%s2224 + $0x108] sm:$0xff]
        %v2248 = vld [vmem:[%s2224 + $0x110] sm:$0xff]
        %v2249 = vld [vmem:[%s2224 + $0x120] sm:$0xff]
        %v2250 = vld [vmem:[%s2224 + $0x128] sm:$0xff]
        %v2251 = vld [vmem:[%s2224 + $0x138] sm:$0xff]
        %v2252 = vld [vmem:[%s2224 + $0x140] sm:$0xff]
        %v2253 = vld [vmem:[%s2224 + $0x150] sm:$0xff]
        %v2254 = vld [vmem:[%s2224 + $0x158] sm:$0xff]
        %v2255 = vld [vmem:[%s2224 + $0x168] sm:$0xff]
        %v2256 = vld [vmem:[%s2224 + $0x170] sm:$0xff]
        %v2257 = vstv %s608
        %v2258 = vmul.f32 %v2257, %v2225
        %v2259 = vmul.f32 %v2257, %v2226
        %v2260 = vmul.f32 %v2257, %v2227
        %v2261 = vmul.f32 %v2257, %v2228
        %v2262 = vmul.f32 %v2257, %v2229
        %v2263 = vmul.f32 %v2257, %v2230
        %v2264 = vmul.f32 %v2257, %v2231
        %v2265 = vmul.f32 %v2257, %v2232
        %v2266 = vmul.f32 %v2257, %v2233
        %v2267 = vmul.f32 %v2257, %v2234
        %v2268 = vmul.f32 %v2257, %v2235
        %v2269 = vmul.f32 %v2257, %v2236
        %v2270 = vmul.f32 %v2257, %v2237
        %v2271 = vmul.f32 %v2257, %v2238
        %v2272 = vmul.f32 %v2257, %v2239
        %v2273 = vmul.f32 %v2257, %v2240
        %v2274 = vmul.f32 %v2257, %v2241
        %v2275 = vmul.f32 %v2257, %v2242
        %v2276 = vmul.f32 %v2257, %v2243
        %v2277 = vmul.f32 %v2257, %v2244
        %v2278 = vmul.f32 %v2257, %v2245
        %v2279 = vmul.f32 %v2257, %v2246
        %v2280 = vmul.f32 %v2257, %v2247
        %v2281 = vmul.f32 %v2257, %v2248
        %v2282 = vmul.f32 %v2257, %v2249
        %v2283 = vmul.f32 %v2257, %v2250
        %v2284 = vmul.f32 %v2257, %v2251
        %v2285 = vmul.f32 %v2257, %v2252
        %v2286 = vmul.f32 %v2257, %v2253
        %v2287 = vmul.f32 %v2257, %v2254
        %v2288 = vmul.f32 %v2257, %v2255
        %v2289 = vmul.f32 %v2257, %v2256
        %v2290 = vadd.f32 %v2192, %v2258
        %v2291 = vadd.f32 %v2193, %v2259
        %v2292 = vadd.f32 %v2194, %v2260
        %v2293 = vadd.f32 %v2195, %v2261
        %v2294 = vadd.f32 %v2196, %v2262
        %v2295 = vadd.f32 %v2197, %v2263
        %v2296 = vadd.f32 %v2198, %v2264
        %v2297 = vadd.f32 %v2199, %v2265
        %v2298 = vadd.f32 %v2200, %v2266
        %v2299 = vadd.f32 %v2201, %v2267
        %v2300 = vadd.f32 %v2202, %v2268
        %v2301 = vadd.f32 %v2203, %v2269
        %v2302 = vadd.f32 %v2204, %v2270
        %v2303 = vadd.f32 %v2205, %v2271
        %v2304 = vadd.f32 %v2206, %v2272
        %v2305 = vadd.f32 %v2207, %v2273
        %v2306 = vadd.f32 %v2208, %v2274
        %v2307 = vadd.f32 %v2209, %v2275
        %v2308 = vadd.f32 %v2210, %v2276
        %v2309 = vadd.f32 %v2211, %v2277
        %v2310 = vadd.f32 %v2212, %v2278
        %v2311 = vadd.f32 %v2213, %v2279
        %v2312 = vadd.f32 %v2214, %v2280
        %v2313 = vadd.f32 %v2215, %v2281
        %v2314 = vadd.f32 %v2216, %v2282
        %v2315 = vadd.f32 %v2217, %v2283
        %v2316 = vadd.f32 %v2218, %v2284
        %v2317 = vadd.f32 %v2219, %v2285
        %v2318 = vadd.f32 %v2220, %v2286
        %v2319 = vadd.f32 %v2221, %v2287
        %v2320 = vadd.f32 %v2222, %v2288
        %v2321 = vadd.f32 %v2223, %v2289
        %s2322 = scalar_lea.vmem [#allocation2], 480
        %v2323 = vld [vmem:[%s2322] sm:$0xff]
        %v2324 = vld [vmem:[%s2322 + $0x8] sm:$0xff]
        %v2325 = vld [vmem:[%s2322 + $0x18] sm:$0xff]
        %v2326 = vld [vmem:[%s2322 + $0x20] sm:$0xff]
        %v2327 = vld [vmem:[%s2322 + $0x30] sm:$0xff]
        %v2328 = vld [vmem:[%s2322 + $0x38] sm:$0xff]
        %v2329 = vld [vmem:[%s2322 + $0x48] sm:$0xff]
        %v2330 = vld [vmem:[%s2322 + $0x50] sm:$0xff]
        %v2331 = vld [vmem:[%s2322 + $0x60] sm:$0xff]
        %v2332 = vld [vmem:[%s2322 + $0x68] sm:$0xff]
        %v2333 = vld [vmem:[%s2322 + $0x78] sm:$0xff]
        %v2334 = vld [vmem:[%s2322 + $0x80] sm:$0xff]
        %v2335 = vld [vmem:[%s2322 + $0x90] sm:$0xff]
        %v2336 = vld [vmem:[%s2322 + $0x98] sm:$0xff]
        %v2337 = vld [vmem:[%s2322 + $0xa8] sm:$0xff]
        %v2338 = vld [vmem:[%s2322 + $0xb0] sm:$0xff]
        %v2339 = vld [vmem:[%s2322 + $0xc0] sm:$0xff]
        %v2340 = vld [vmem:[%s2322 + $0xc8] sm:$0xff]
        %v2341 = vld [vmem:[%s2322 + $0xd8] sm:$0xff]
        %v2342 = vld [vmem:[%s2322 + $0xe0] sm:$0xff]
        %v2343 = vld [vmem:[%s2322 + $0xf0] sm:$0xff]
        %v2344 = vld [vmem:[%s2322 + $0xf8] sm:$0xff]
        %v2345 = vld [vmem:[%s2322 + $0x108] sm:$0xff]
        %v2346 = vld [vmem:[%s2322 + $0x110] sm:$0xff]
        %v2347 = vld [vmem:[%s2322 + $0x120] sm:$0xff]
        %v2348 = vld [vmem:[%s2322 + $0x128] sm:$0xff]
        %v2349 = vld [vmem:[%s2322 + $0x138] sm:$0xff]
        %v2350 = vld [vmem:[%s2322 + $0x140] sm:$0xff]
        %v2351 = vld [vmem:[%s2322 + $0x150] sm:$0xff]
        %v2352 = vld [vmem:[%s2322 + $0x158] sm:$0xff]
        %v2353 = vld [vmem:[%s2322 + $0x168] sm:$0xff]
        %v2354 = vld [vmem:[%s2322 + $0x170] sm:$0xff]
        %v2355 = vstv %s617
        %v2356 = vmul.f32 %v2355, %v2323
        %v2357 = vmul.f32 %v2355, %v2324
        %v2358 = vmul.f32 %v2355, %v2325
        %v2359 = vmul.f32 %v2355, %v2326
        %v2360 = vmul.f32 %v2355, %v2327
        %v2361 = vmul.f32 %v2355, %v2328
        %v2362 = vmul.f32 %v2355, %v2329
        %v2363 = vmul.f32 %v2355, %v2330
        %v2364 = vmul.f32 %v2355, %v2331
        %v2365 = vmul.f32 %v2355, %v2332
        %v2366 = vmul.f32 %v2355, %v2333
        %v2367 = vmul.f32 %v2355, %v2334
        %v2368 = vmul.f32 %v2355, %v2335
        %v2369 = vmul.f32 %v2355, %v2336
        %v2370 = vmul.f32 %v2355, %v2337
        %v2371 = vmul.f32 %v2355, %v2338
        %v2372 = vmul.f32 %v2355, %v2339
        %v2373 = vmul.f32 %v2355, %v2340
        %v2374 = vmul.f32 %v2355, %v2341
        %v2375 = vmul.f32 %v2355, %v2342
        %v2376 = vmul.f32 %v2355, %v2343
        %v2377 = vmul.f32 %v2355, %v2344
        %v2378 = vmul.f32 %v2355, %v2345
        %v2379 = vmul.f32 %v2355, %v2346
        %v2380 = vmul.f32 %v2355, %v2347
        %v2381 = vmul.f32 %v2355, %v2348
        %v2382 = vmul.f32 %v2355, %v2349
        %v2383 = vmul.f32 %v2355, %v2350
        %v2384 = vmul.f32 %v2355, %v2351
        %v2385 = vmul.f32 %v2355, %v2352
        %v2386 = vmul.f32 %v2355, %v2353
        %v2387 = vmul.f32 %v2355, %v2354
        %v2388 = vadd.f32 %v2290, %v2356
        %v2389 = vadd.f32 %v2291, %v2357
        %v2390 = vadd.f32 %v2292, %v2358
        %v2391 = vadd.f32 %v2293, %v2359
        %v2392 = vadd.f32 %v2294, %v2360
        %v2393 = vadd.f32 %v2295, %v2361
        %v2394 = vadd.f32 %v2296, %v2362
        %v2395 = vadd.f32 %v2297, %v2363
        %v2396 = vadd.f32 %v2298, %v2364
        %v2397 = vadd.f32 %v2299, %v2365
        %v2398 = vadd.f32 %v2300, %v2366
        %v2399 = vadd.f32 %v2301, %v2367
        %v2400 = vadd.f32 %v2302, %v2368
        %v2401 = vadd.f32 %v2303, %v2369
        %v2402 = vadd.f32 %v2304, %v2370
        %v2403 = vadd.f32 %v2305, %v2371
        %v2404 = vadd.f32 %v2306, %v2372
        %v2405 = vadd.f32 %v2307, %v2373
        %v2406 = vadd.f32 %v2308, %v2374
        %v2407 = vadd.f32 %v2309, %v2375
        %v2408 = vadd.f32 %v2310, %v2376
        %v2409 = vadd.f32 %v2311, %v2377
        %v2410 = vadd.f32 %v2312, %v2378
        %v2411 = vadd.f32 %v2313, %v2379
        %v2412 = vadd.f32 %v2314, %v2380
        %v2413 = vadd.f32 %v2315, %v2381
        %v2414 = vadd.f32 %v2316, %v2382
        %v2415 = vadd.f32 %v2317, %v2383
        %v2416 = vadd.f32 %v2318, %v2384
        %v2417 = vadd.f32 %v2319, %v2385
        %v2418 = vadd.f32 %v2320, %v2386
        %v2419 = vadd.f32 %v2321, %v2387
        %v2420 = vld [vmem:[%s2224 + $0x1] sm:$0xff]
        %v2421 = vld [vmem:[%s2224 + $0x9] sm:$0xff]
        %v2422 = vld [vmem:[%s2224 + $0x19] sm:$0xff]
        %v2423 = vld [vmem:[%s2224 + $0x21] sm:$0xff]
        %v2424 = vld [vmem:[%s2224 + $0x31] sm:$0xff]
        %v2425 = vld [vmem:[%s2224 + $0x39] sm:$0xff]
        %v2426 = vld [vmem:[%s2224 + $0x49] sm:$0xff]
        %v2427 = vld [vmem:[%s2224 + $0x51] sm:$0xff]
        %v2428 = vld [vmem:[%s2224 + $0x61] sm:$0xff]
        %v2429 = vld [vmem:[%s2224 + $0x69] sm:$0xff]
        %v2430 = vld [vmem:[%s2224 + $0x79] sm:$0xff]
        %v2431 = vld [vmem:[%s2224 + $0x81] sm:$0xff]
        %v2432 = vld [vmem:[%s2224 + $0x91] sm:$0xff]
        %v2433 = vld [vmem:[%s2224 + $0x99] sm:$0xff]
        %v2434 = vld [vmem:[%s2224 + $0xa9] sm:$0xff]
        %v2435 = vld [vmem:[%s2224 + $0xb1] sm:$0xff]
        %v2436 = vld [vmem:[%s2224 + $0xc1] sm:$0xff]
        %v2437 = vld [vmem:[%s2224 + $0xc9] sm:$0xff]
        %v2438 = vld [vmem:[%s2224 + $0xd9] sm:$0xff]
        %v2439 = vld [vmem:[%s2224 + $0xe1] sm:$0xff]
        %v2440 = vld [vmem:[%s2224 + $0xf1] sm:$0xff]
        %v2441 = vld [vmem:[%s2224 + $0xf9] sm:$0xff]
        %v2442 = vld [vmem:[%s2224 + $0x109] sm:$0xff]
        %v2443 = vld [vmem:[%s2224 + $0x111] sm:$0xff]
        %v2444 = vld [vmem:[%s2224 + $0x121] sm:$0xff]
        %v2445 = vld [vmem:[%s2224 + $0x129] sm:$0xff]
        %v2446 = vld [vmem:[%s2224 + $0x139] sm:$0xff]
        %v2447 = vld [vmem:[%s2224 + $0x141] sm:$0xff]
        %v2448 = vld [vmem:[%s2224 + $0x151] sm:$0xff]
        %v2449 = vld [vmem:[%s2224 + $0x159] sm:$0xff]
        %v2450 = vld [vmem:[%s2224 + $0x169] sm:$0xff]
        %v2451 = vld [vmem:[%s2224 + $0x171] sm:$0xff]
        %v2452 = vstv %s609
        %v2453 = vmul.f32 %v2452, %v2420
        %v2454 = vmul.f32 %v2452, %v2421
        %v2455 = vmul.f32 %v2452, %v2422
        %v2456 = vmul.f32 %v2452, %v2423
        %v2457 = vmul.f32 %v2452, %v2424
        %v2458 = vmul.f32 %v2452, %v2425
        %v2459 = vmul.f32 %v2452, %v2426
        %v2460 = vmul.f32 %v2452, %v2427
        %v2461 = vmul.f32 %v2452, %v2428
        %v2462 = vmul.f32 %v2452, %v2429
        %v2463 = vmul.f32 %v2452, %v2430
        %v2464 = vmul.f32 %v2452, %v2431
        %v2465 = vmul.f32 %v2452, %v2432
        %v2466 = vmul.f32 %v2452, %v2433
        %v2467 = vmul.f32 %v2452, %v2434
        %v2468 = vmul.f32 %v2452, %v2435
        %v2469 = vmul.f32 %v2452, %v2436
        %v2470 = vmul.f32 %v2452, %v2437
        %v2471 = vmul.f32 %v2452, %v2438
        %v2472 = vmul.f32 %v2452, %v2439
        %v2473 = vmul.f32 %v2452, %v2440
        %v2474 = vmul.f32 %v2452, %v2441
        %v2475 = vmul.f32 %v2452, %v2442
        %v2476 = vmul.f32 %v2452, %v2443
        %v2477 = vmul.f32 %v2452, %v2444
        %v2478 = vmul.f32 %v2452, %v2445
        %v2479 = vmul.f32 %v2452, %v2446
        %v2480 = vmul.f32 %v2452, %v2447
        %v2481 = vmul.f32 %v2452, %v2448
        %v2482 = vmul.f32 %v2452, %v2449
        %v2483 = vmul.f32 %v2452, %v2450
        %v2484 = vmul.f32 %v2452, %v2451
        %v2485 = vadd.f32 %v2388, %v2453
        %v2486 = vadd.f32 %v2389, %v2454
        %v2487 = vadd.f32 %v2390, %v2455
        %v2488 = vadd.f32 %v2391, %v2456
        %v2489 = vadd.f32 %v2392, %v2457
        %v2490 = vadd.f32 %v2393, %v2458
        %v2491 = vadd.f32 %v2394, %v2459
        %v2492 = vadd.f32 %v2395, %v2460
        %v2493 = vadd.f32 %v2396, %v2461
        %v2494 = vadd.f32 %v2397, %v2462
        %v2495 = vadd.f32 %v2398, %v2463
        %v2496 = vadd.f32 %v2399, %v2464
        %v2497 = vadd.f32 %v2400, %v2465
        %v2498 = vadd.f32 %v2401, %v2466
        %v2499 = vadd.f32 %v2402, %v2467
        %v2500 = vadd.f32 %v2403, %v2468
        %v2501 = vadd.f32 %v2404, %v2469
        %v2502 = vadd.f32 %v2405, %v2470
        %v2503 = vadd.f32 %v2406, %v2471
        %v2504 = vadd.f32 %v2407, %v2472
        %v2505 = vadd.f32 %v2408, %v2473
        %v2506 = vadd.f32 %v2409, %v2474
        %v2507 = vadd.f32 %v2410, %v2475
        %v2508 = vadd.f32 %v2411, %v2476
        %v2509 = vadd.f32 %v2412, %v2477
        %v2510 = vadd.f32 %v2413, %v2478
        %v2511 = vadd.f32 %v2414, %v2479
        %v2512 = vadd.f32 %v2415, %v2480
        %v2513 = vadd.f32 %v2416, %v2481
        %v2514 = vadd.f32 %v2417, %v2482
        %v2515 = vadd.f32 %v2418, %v2483
        %v2516 = vadd.f32 %v2419, %v2484
        %v2517 = vld [vmem:[%s2322 + $0x1] sm:$0xff]
        %v2518 = vld [vmem:[%s2322 + $0x9] sm:$0xff]
        %v2519 = vld [vmem:[%s2322 + $0x19] sm:$0xff]
        %v2520 = vld [vmem:[%s2322 + $0x21] sm:$0xff]
        %v2521 = vld [vmem:[%s2322 + $0x31] sm:$0xff]
        %v2522 = vld [vmem:[%s2322 + $0x39] sm:$0xff]
        %v2523 = vld [vmem:[%s2322 + $0x49] sm:$0xff]
        %v2524 = vld [vmem:[%s2322 + $0x51] sm:$0xff]
        %v2525 = vld [vmem:[%s2322 + $0x61] sm:$0xff]
        %v2526 = vld [vmem:[%s2322 + $0x69] sm:$0xff]
        %v2527 = vld [vmem:[%s2322 + $0x79] sm:$0xff]
        %v2528 = vld [vmem:[%s2322 + $0x81] sm:$0xff]
        %v2529 = vld [vmem:[%s2322 + $0x91] sm:$0xff]
        %v2530 = vld [vmem:[%s2322 + $0x99] sm:$0xff]
        %v2531 = vld [vmem:[%s2322 + $0xa9] sm:$0xff]
        %v2532 = vld [vmem:[%s2322 + $0xb1] sm:$0xff]
        %v2533 = vld [vmem:[%s2322 + $0xc1] sm:$0xff]
        %v2534 = vld [vmem:[%s2322 + $0xc9] sm:$0xff]
        %v2535 = vld [vmem:[%s2322 + $0xd9] sm:$0xff]
        %v2536 = vld [vmem:[%s2322 + $0xe1] sm:$0xff]
        %v2537 = vld [vmem:[%s2322 + $0xf1] sm:$0xff]
        %v2538 = vld [vmem:[%s2322 + $0xf9] sm:$0xff]
        %v2539 = vld [vmem:[%s2322 + $0x109] sm:$0xff]
        %v2540 = vld [vmem:[%s2322 + $0x111] sm:$0xff]
        %v2541 = vld [vmem:[%s2322 + $0x121] sm:$0xff]
        %v2542 = vld [vmem:[%s2322 + $0x129] sm:$0xff]
        %v2543 = vld [vmem:[%s2322 + $0x139] sm:$0xff]
        %v2544 = vld [vmem:[%s2322 + $0x141] sm:$0xff]
        %v2545 = vld [vmem:[%s2322 + $0x151] sm:$0xff]
        %v2546 = vld [vmem:[%s2322 + $0x159] sm:$0xff]
        %v2547 = vld [vmem:[%s2322 + $0x169] sm:$0xff]
        %v2548 = vld [vmem:[%s2322 + $0x171] sm:$0xff]
        %v2549 = vstv %s618
        %v2550 = vmul.f32 %v2549, %v2517
        %v2551 = vmul.f32 %v2549, %v2518
        %v2552 = vmul.f32 %v2549, %v2519
        %v2553 = vmul.f32 %v2549, %v2520
        %v2554 = vmul.f32 %v2549, %v2521
        %v2555 = vmul.f32 %v2549, %v2522
        %v2556 = vmul.f32 %v2549, %v2523
        %v2557 = vmul.f32 %v2549, %v2524
        %v2558 = vmul.f32 %v2549, %v2525
        %v2559 = vmul.f32 %v2549, %v2526
        %v2560 = vmul.f32 %v2549, %v2527
        %v2561 = vmul.f32 %v2549, %v2528
        %v2562 = vmul.f32 %v2549, %v2529
        %v2563 = vmul.f32 %v2549, %v2530
        %v2564 = vmul.f32 %v2549, %v2531
        %v2565 = vmul.f32 %v2549, %v2532
        %v2566 = vmul.f32 %v2549, %v2533
        %v2567 = vmul.f32 %v2549, %v2534
        %v2568 = vmul.f32 %v2549, %v2535
        %v2569 = vmul.f32 %v2549, %v2536
        %v2570 = vmul.f32 %v2549, %v2537
        %v2571 = vmul.f32 %v2549, %v2538
        %v2572 = vmul.f32 %v2549, %v2539
        %v2573 = vmul.f32 %v2549, %v2540
        %v2574 = vmul.f32 %v2549, %v2541
        %v2575 = vmul.f32 %v2549, %v2542
        %v2576 = vmul.f32 %v2549, %v2543
        %v2577 = vmul.f32 %v2549, %v2544
        %v2578 = vmul.f32 %v2549, %v2545
        %v2579 = vmul.f32 %v2549, %v2546
        %v2580 = vmul.f32 %v2549, %v2547
        %v2581 = vmul.f32 %v2549, %v2548
        %v2582 = vadd.f32 %v2485, %v2550
        %v2583 = vadd.f32 %v2486, %v2551
        %v2584 = vadd.f32 %v2487, %v2552
        %v2585 = vadd.f32 %v2488, %v2553
        %v2586 = vadd.f32 %v2489, %v2554
        %v2587 = vadd.f32 %v2490, %v2555
        %v2588 = vadd.f32 %v2491, %v2556
        %v2589 = vadd.f32 %v2492, %v2557
        %v2590 = vadd.f32 %v2493, %v2558
        %v2591 = vadd.f32 %v2494, %v2559
        %v2592 = vadd.f32 %v2495, %v2560
        %v2593 = vadd.f32 %v2496, %v2561
        %v2594 = vadd.f32 %v2497, %v2562
        %v2595 = vadd.f32 %v2498, %v2563
        %v2596 = vadd.f32 %v2499, %v2564
        %v2597 = vadd.f32 %v2500, %v2565
        %v2598 = vadd.f32 %v2501, %v2566
        %v2599 = vadd.f32 %v2502, %v2567
        %v2600 = vadd.f32 %v2503, %v2568
        %v2601 = vadd.f32 %v2504, %v2569
        %v2602 = vadd.f32 %v2505, %v2570
        %v2603 = vadd.f32 %v2506, %v2571
        %v2604 = vadd.f32 %v2507, %v2572
        %v2605 = vadd.f32 %v2508, %v2573
        %v2606 = vadd.f32 %v2509, %v2574
        %v2607 = vadd.f32 %v2510, %v2575
        %v2608 = vadd.f32 %v2511, %v2576
        %v2609 = vadd.f32 %v2512, %v2577
        %v2610 = vadd.f32 %v2513, %v2578
        %v2611 = vadd.f32 %v2514, %v2579
        %v2612 = vadd.f32 %v2515, %v2580
        %v2613 = vadd.f32 %v2516, %v2581
        %v2614 = vld [vmem:[%s2224 + $0x2] sm:$0xff]
        %v2615 = vld [vmem:[%s2224 + $0xa] sm:$0xff]
        %v2616 = vld [vmem:[%s2224 + $0x1a] sm:$0xff]
        %v2617 = vld [vmem:[%s2224 + $0x22] sm:$0xff]
        %v2618 = vld [vmem:[%s2224 + $0x32] sm:$0xff]
        %v2619 = vld [vmem:[%s2224 + $0x3a] sm:$0xff]
        %v2620 = vld [vmem:[%s2224 + $0x4a] sm:$0xff]
        %v2621 = vld [vmem:[%s2224 + $0x52] sm:$0xff]
        %v2622 = vld [vmem:[%s2224 + $0x62] sm:$0xff]
        %v2623 = vld [vmem:[%s2224 + $0x6a] sm:$0xff]
        %v2624 = vld [vmem:[%s2224 + $0x7a] sm:$0xff]
        %v2625 = vld [vmem:[%s2224 + $0x82] sm:$0xff]
        %v2626 = vld [vmem:[%s2224 + $0x92] sm:$0xff]
        %v2627 = vld [vmem:[%s2224 + $0x9a] sm:$0xff]
        %v2628 = vld [vmem:[%s2224 + $0xaa] sm:$0xff]
        %v2629 = vld [vmem:[%s2224 + $0xb2] sm:$0xff]
        %v2630 = vld [vmem:[%s2224 + $0xc2] sm:$0xff]
        %v2631 = vld [vmem:[%s2224 + $0xca] sm:$0xff]
        %v2632 = vld [vmem:[%s2224 + $0xda] sm:$0xff]
        %v2633 = vld [vmem:[%s2224 + $0xe2] sm:$0xff]
        %v2634 = vld [vmem:[%s2224 + $0xf2] sm:$0xff]
        %v2635 = vld [vmem:[%s2224 + $0xfa] sm:$0xff]
        %v2636 = vld [vmem:[%s2224 + $0x10a] sm:$0xff]
        %v2637 = vld [vmem:[%s2224 + $0x112] sm:$0xff]
        %v2638 = vld [vmem:[%s2224 + $0x122] sm:$0xff]
        %v2639 = vld [vmem:[%s2224 + $0x12a] sm:$0xff]
        %v2640 = vld [vmem:[%s2224 + $0x13a] sm:$0xff]
        %v2641 = vld [vmem:[%s2224 + $0x142] sm:$0xff]
        %v2642 = vld [vmem:[%s2224 + $0x152] sm:$0xff]
        %v2643 = vld [vmem:[%s2224 + $0x15a] sm:$0xff]
        %v2644 = vld [vmem:[%s2224 + $0x16a] sm:$0xff]
        %v2645 = vld [vmem:[%s2224 + $0x172] sm:$0xff]
        %v2646 = vstv %s610
        %v2647 = vmul.f32 %v2646, %v2614
        %v2648 = vmul.f32 %v2646, %v2615
        %v2649 = vmul.f32 %v2646, %v2616
        %v2650 = vmul.f32 %v2646, %v2617
        %v2651 = vmul.f32 %v2646, %v2618
        %v2652 = vmul.f32 %v2646, %v2619
        %v2653 = vmul.f32 %v2646, %v2620
        %v2654 = vmul.f32 %v2646, %v2621
        %v2655 = vmul.f32 %v2646, %v2622
        %v2656 = vmul.f32 %v2646, %v2623
        %v2657 = vmul.f32 %v2646, %v2624
        %v2658 = vmul.f32 %v2646, %v2625
        %v2659 = vmul.f32 %v2646, %v2626
        %v2660 = vmul.f32 %v2646, %v2627
        %v2661 = vmul.f32 %v2646, %v2628
        %v2662 = vmul.f32 %v2646, %v2629
        %v2663 = vmul.f32 %v2646, %v2630
        %v2664 = vmul.f32 %v2646, %v2631
        %v2665 = vmul.f32 %v2646, %v2632
        %v2666 = vmul.f32 %v2646, %v2633
        %v2667 = vmul.f32 %v2646, %v2634
        %v2668 = vmul.f32 %v2646, %v2635
        %v2669 = vmul.f32 %v2646, %v2636
        %v2670 = vmul.f32 %v2646, %v2637
        %v2671 = vmul.f32 %v2646, %v2638
        %v2672 = vmul.f32 %v2646, %v2639
        %v2673 = vmul.f32 %v2646, %v2640
        %v2674 = vmul.f32 %v2646, %v2641
        %v2675 = vmul.f32 %v2646, %v2642
        %v2676 = vmul.f32 %v2646, %v2643
        %v2677 = vmul.f32 %v2646, %v2644
        %v2678 = vmul.f32 %v2646, %v2645
        %v2679 = vadd.f32 %v2582, %v2647
        %v2680 = vadd.f32 %v2583, %v2648
        %v2681 = vadd.f32 %v2584, %v2649
        %v2682 = vadd.f32 %v2585, %v2650
        %v2683 = vadd.f32 %v2586, %v2651
        %v2684 = vadd.f32 %v2587, %v2652
        %v2685 = vadd.f32 %v2588, %v2653
        %v2686 = vadd.f32 %v2589, %v2654
        %v2687 = vadd.f32 %v2590, %v2655
        %v2688 = vadd.f32 %v2591, %v2656
        %v2689 = vadd.f32 %v2592, %v2657
        %v2690 = vadd.f32 %v2593, %v2658
        %v2691 = vadd.f32 %v2594, %v2659
        %v2692 = vadd.f32 %v2595, %v2660
        %v2693 = vadd.f32 %v2596, %v2661
        %v2694 = vadd.f32 %v2597, %v2662
        %v2695 = vadd.f32 %v2598, %v2663
        %v2696 = vadd.f32 %v2599, %v2664
        %v2697 = vadd.f32 %v2600, %v2665
        %v2698 = vadd.f32 %v2601, %v2666
        %v2699 = vadd.f32 %v2602, %v2667
        %v2700 = vadd.f32 %v2603, %v2668
        %v2701 = vadd.f32 %v2604, %v2669
        %v2702 = vadd.f32 %v2605, %v2670
        %v2703 = vadd.f32 %v2606, %v2671
        %v2704 = vadd.f32 %v2607, %v2672
        %v2705 = vadd.f32 %v2608, %v2673
        %v2706 = vadd.f32 %v2609, %v2674
        %v2707 = vadd.f32 %v2610, %v2675
        %v2708 = vadd.f32 %v2611, %v2676
        %v2709 = vadd.f32 %v2612, %v2677
        %v2710 = vadd.f32 %v2613, %v2678
        %v2711 = vld [vmem:[%s2322 + $0x2] sm:$0xff]
        %v2712 = vld [vmem:[%s2322 + $0xa] sm:$0xff]
        %v2713 = vld [vmem:[%s2322 + $0x1a] sm:$0xff]
        %v2714 = vld [vmem:[%s2322 + $0x22] sm:$0xff]
        %v2715 = vld [vmem:[%s2322 + $0x32] sm:$0xff]
        %v2716 = vld [vmem:[%s2322 + $0x3a] sm:$0xff]
        %v2717 = vld [vmem:[%s2322 + $0x4a] sm:$0xff]
        %v2718 = vld [vmem:[%s2322 + $0x52] sm:$0xff]
        %v2719 = vld [vmem:[%s2322 + $0x62] sm:$0xff]
        %v2720 = vld [vmem:[%s2322 + $0x6a] sm:$0xff]
        %v2721 = vld [vmem:[%s2322 + $0x7a] sm:$0xff]
        %v2722 = vld [vmem:[%s2322 + $0x82] sm:$0xff]
        %v2723 = vld [vmem:[%s2322 + $0x92] sm:$0xff]
        %v2724 = vld [vmem:[%s2322 + $0x9a] sm:$0xff]
        %v2725 = vld [vmem:[%s2322 + $0xaa] sm:$0xff]
        %v2726 = vld [vmem:[%s2322 + $0xb2] sm:$0xff]
        %v2727 = vld [vmem:[%s2322 + $0xc2] sm:$0xff]
        %v2728 = vld [vmem:[%s2322 + $0xca] sm:$0xff]
        %v2729 = vld [vmem:[%s2322 + $0xda] sm:$0xff]
        %v2730 = vld [vmem:[%s2322 + $0xe2] sm:$0xff]
        %v2731 = vld [vmem:[%s2322 + $0xf2] sm:$0xff]
        %v2732 = vld [vmem:[%s2322 + $0xfa] sm:$0xff]
        %v2733 = vld [vmem:[%s2322 + $0x10a] sm:$0xff]
        %v2734 = vld [vmem:[%s2322 + $0x112] sm:$0xff]
        %v2735 = vld [vmem:[%s2322 + $0x122] sm:$0xff]
        %v2736 = vld [vmem:[%s2322 + $0x12a] sm:$0xff]
        %v2737 = vld [vmem:[%s2322 + $0x13a] sm:$0xff]
        %v2738 = vld [vmem:[%s2322 + $0x142] sm:$0xff]
        %v2739 = vld [vmem:[%s2322 + $0x152] sm:$0xff]
        %v2740 = vld [vmem:[%s2322 + $0x15a] sm:$0xff]
        %v2741 = vld [vmem:[%s2322 + $0x16a] sm:$0xff]
        %v2742 = vld [vmem:[%s2322 + $0x172] sm:$0xff]
        %v2743 = vstv %s619
        %v2744 = vmul.f32 %v2743, %v2711
        %v2745 = vmul.f32 %v2743, %v2712
        %v2746 = vmul.f32 %v2743, %v2713
        %v2747 = vmul.f32 %v2743, %v2714
        %v2748 = vmul.f32 %v2743, %v2715
        %v2749 = vmul.f32 %v2743, %v2716
        %v2750 = vmul.f32 %v2743, %v2717
        %v2751 = vmul.f32 %v2743, %v2718
        %v2752 = vmul.f32 %v2743, %v2719
        %v2753 = vmul.f32 %v2743, %v2720
        %v2754 = vmul.f32 %v2743, %v2721
        %v2755 = vmul.f32 %v2743, %v2722
        %v2756 = vmul.f32 %v2743, %v2723
        %v2757 = vmul.f32 %v2743, %v2724
        %v2758 = vmul.f32 %v2743, %v2725
        %v2759 = vmul.f32 %v2743, %v2726
        %v2760 = vmul.f32 %v2743, %v2727
        %v2761 = vmul.f32 %v2743, %v2728
        %v2762 = vmul.f32 %v2743, %v2729
        %v2763 = vmul.f32 %v2743, %v2730
        %v2764 = vmul.f32 %v2743, %v2731
        %v2765 = vmul.f32 %v2743, %v2732
        %v2766 = vmul.f32 %v2743, %v2733
        %v2767 = vmul.f32 %v2743, %v2734
        %v2768 = vmul.f32 %v2743, %v2735
        %v2769 = vmul.f32 %v2743, %v2736
        %v2770 = vmul.f32 %v2743, %v2737
        %v2771 = vmul.f32 %v2743, %v2738
        %v2772 = vmul.f32 %v2743, %v2739
        %v2773 = vmul.f32 %v2743, %v2740
        %v2774 = vmul.f32 %v2743, %v2741
        %v2775 = vmul.f32 %v2743, %v2742
        %v2776 = vadd.f32 %v2679, %v2744
        %v2777 = vadd.f32 %v2680, %v2745
        %v2778 = vadd.f32 %v2681, %v2746
        %v2779 = vadd.f32 %v2682, %v2747
        %v2780 = vadd.f32 %v2683, %v2748
        %v2781 = vadd.f32 %v2684, %v2749
        %v2782 = vadd.f32 %v2685, %v2750
        %v2783 = vadd.f32 %v2686, %v2751
        %v2784 = vadd.f32 %v2687, %v2752
        %v2785 = vadd.f32 %v2688, %v2753
        %v2786 = vadd.f32 %v2689, %v2754
        %v2787 = vadd.f32 %v2690, %v2755
        %v2788 = vadd.f32 %v2691, %v2756
        %v2789 = vadd.f32 %v2692, %v2757
        %v2790 = vadd.f32 %v2693, %v2758
        %v2791 = vadd.f32 %v2694, %v2759
        %v2792 = vadd.f32 %v2695, %v2760
        %v2793 = vadd.f32 %v2696, %v2761
        %v2794 = vadd.f32 %v2697, %v2762
        %v2795 = vadd.f32 %v2698, %v2763
        %v2796 = vadd.f32 %v2699, %v2764
        %v2797 = vadd.f32 %v2700, %v2765
        %v2798 = vadd.f32 %v2701, %v2766
        %v2799 = vadd.f32 %v2702, %v2767
        %v2800 = vadd.f32 %v2703, %v2768
        %v2801 = vadd.f32 %v2704, %v2769
        %v2802 = vadd.f32 %v2705, %v2770
        %v2803 = vadd.f32 %v2706, %v2771
        %v2804 = vadd.f32 %v2707, %v2772
        %v2805 = vadd.f32 %v2708, %v2773
        %v2806 = vadd.f32 %v2709, %v2774
        %v2807 = vadd.f32 %v2710, %v2775
        %v2808 = vxor.u32 %v2776, 2147483648
        %v2809 = vxor.u32 %v2777, 2147483648
        %v2810 = vxor.u32 %v2778, 2147483648
        %v2811 = vxor.u32 %v2779, 2147483648
        %v2812 = vxor.u32 %v2780, 2147483648
        %v2813 = vxor.u32 %v2781, 2147483648
        %v2814 = vxor.u32 %v2782, 2147483648
        %v2815 = vxor.u32 %v2783, 2147483648
        %v2816 = vxor.u32 %v2784, 2147483648
        %v2817 = vxor.u32 %v2785, 2147483648
        %v2818 = vxor.u32 %v2786, 2147483648
        %v2819 = vxor.u32 %v2787, 2147483648
        %v2820 = vxor.u32 %v2788, 2147483648
        %v2821 = vxor.u32 %v2789, 2147483648
        %v2822 = vxor.u32 %v2790, 2147483648
        %v2823 = vxor.u32 %v2791, 2147483648
        %v2824 = vxor.u32 %v2792, 2147483648
        %v2825 = vxor.u32 %v2793, 2147483648
        %v2826 = vxor.u32 %v2794, 2147483648
        %v2827 = vxor.u32 %v2795, 2147483648
        %v2828 = vxor.u32 %v2796, 2147483648
        %v2829 = vxor.u32 %v2797, 2147483648
        %v2830 = vxor.u32 %v2798, 2147483648
        %v2831 = vxor.u32 %v2799, 2147483648
        %v2832 = vxor.u32 %v2800, 2147483648
        %v2833 = vxor.u32 %v2801, 2147483648
        %v2834 = vxor.u32 %v2802, 2147483648
        %v2835 = vxor.u32 %v2803, 2147483648
        %v2836 = vxor.u32 %v2804, 2147483648
        %v2837 = vxor.u32 %v2805, 2147483648
        %v2838 = vxor.u32 %v2806, 2147483648
        %v2839 = vxor.u32 %v2807, 2147483648
        %v2840 = vmul.f32 %v2808, 1.442695
        %v2841 = vpow.pop %v2840
        %v2842 = vmul.f32 %v2809, 1.442695
        %v2843 = vpow.pop %v2842
        %v2844 = vmul.f32 %v2810, 1.442695
        %v2845 = vpow.pop %v2844
        %v2846 = vmul.f32 %v2811, 1.442695
        %v2847 = vpow.pop %v2846
        %v2848 = vmul.f32 %v2812, 1.442695
        %v2849 = vpow.pop %v2848
        %v2850 = vmul.f32 %v2813, 1.442695
        %v2851 = vpow.pop %v2850
        %v2852 = vmul.f32 %v2814, 1.442695
        %v2853 = vpow.pop %v2852
        %v2854 = vmul.f32 %v2815, 1.442695
        %v2855 = vpow.pop %v2854
        %v2856 = vmul.f32 %v2816, 1.442695
        %v2857 = vpow.pop %v2856
        %v2858 = vmul.f32 %v2817, 1.442695
        %v2859 = vpow.pop %v2858
        %v2860 = vmul.f32 %v2818, 1.442695
        %v2861 = vpow.pop %v2860
        %v2862 = vmul.f32 %v2819, 1.442695
        %v2863 = vpow.pop %v2862
        %v2864 = vmul.f32 %v2820, 1.442695
        %v2865 = vpow.pop %v2864
        %v2866 = vmul.f32 %v2821, 1.442695
        %v2867 = vpow.pop %v2866
        %v2868 = vmul.f32 %v2822, 1.442695
        %v2869 = vpow.pop %v2868
        %v2870 = vmul.f32 %v2823, 1.442695
        %v2871 = vpow.pop %v2870
        %v2872 = vmul.f32 %v2824, 1.442695
        %v2873 = vpow.pop %v2872
        %v2874 = vmul.f32 %v2825, 1.442695
        %v2875 = vpow.pop %v2874
        %v2876 = vmul.f32 %v2826, 1.442695
        %v2877 = vpow.pop %v2876
        %v2878 = vmul.f32 %v2827, 1.442695
        %v2879 = vpow.pop %v2878
        %v2880 = vmul.f32 %v2828, 1.442695
        %v2881 = vpow.pop %v2880
        %v2882 = vmul.f32 %v2829, 1.442695
        %v2883 = vpow.pop %v2882
        %v2884 = vmul.f32 %v2830, 1.442695
        %v2885 = vpow.pop %v2884
        %v2886 = vmul.f32 %v2831, 1.442695
        %v2887 = vpow.pop %v2886
        %v2888 = vmul.f32 %v2832, 1.442695
        %v2889 = vpow.pop %v2888
        %v2890 = vmul.f32 %v2833, 1.442695
        %v2891 = vpow.pop %v2890
        %v2892 = vmul.f32 %v2834, 1.442695
        %v2893 = vpow.pop %v2892
        %v2894 = vmul.f32 %v2835, 1.442695
        %v2895 = vpow.pop %v2894
        %v2896 = vmul.f32 %v2836, 1.442695
        %v2897 = vpow.pop %v2896
        %v2898 = vmul.f32 %v2837, 1.442695
        %v2899 = vpow.pop %v2898
        %v2900 = vmul.f32 %v2838, 1.442695
        %v2901 = vpow.pop %v2900
        %v2902 = vmul.f32 %v2839, 1.442695
        %v2903 = vpow.pop %v2902
        %v2904 = vadd.f32 %v2841, 1.0
        %v2905 = vadd.f32 %v2843, 1.0
        %v2906 = vadd.f32 %v2845, 1.0
        %v2907 = vadd.f32 %v2847, 1.0
        %v2908 = vadd.f32 %v2849, 1.0
        %v2909 = vadd.f32 %v2851, 1.0
        %v2910 = vadd.f32 %v2853, 1.0
        %v2911 = vadd.f32 %v2855, 1.0
        %v2912 = vadd.f32 %v2857, 1.0
        %v2913 = vadd.f32 %v2859, 1.0
        %v2914 = vadd.f32 %v2861, 1.0
        %v2915 = vadd.f32 %v2863, 1.0
        %v2916 = vadd.f32 %v2865, 1.0
        %v2917 = vadd.f32 %v2867, 1.0
        %v2918 = vadd.f32 %v2869, 1.0
        %v2919 = vadd.f32 %v2871, 1.0
        %v2920 = vadd.f32 %v2873, 1.0
        %v2921 = vadd.f32 %v2875, 1.0
        %v2922 = vadd.f32 %v2877, 1.0
        %v2923 = vadd.f32 %v2879, 1.0
        %v2924 = vadd.f32 %v2881, 1.0
        %v2925 = vadd.f32 %v2883, 1.0
        %v2926 = vadd.f32 %v2885, 1.0
        %v2927 = vadd.f32 %v2887, 1.0
        %v2928 = vadd.f32 %v2889, 1.0
        %v2929 = vadd.f32 %v2891, 1.0
        %v2930 = vadd.f32 %v2893, 1.0
        %v2931 = vadd.f32 %v2895, 1.0
        %v2932 = vadd.f32 %v2897, 1.0
        %v2933 = vadd.f32 %v2899, 1.0
        %v2934 = vadd.f32 %v2901, 1.0
        %v2935 = vadd.f32 %v2903, 1.0
        %v2936 = vrcp.pop %v2904
        %v2937 = vmul.f32 1.0, %v2936
        %v2938 = vrcp.pop %v2905
        %v2939 = vmul.f32 1.0, %v2938
        %v2940 = vrcp.pop %v2906
        %v2941 = vmul.f32 1.0, %v2940
        %v2942 = vrcp.pop %v2907
        %v2943 = vmul.f32 1.0, %v2942
        %v2944 = vrcp.pop %v2908
        %v2945 = vmul.f32 1.0, %v2944
        %v2946 = vrcp.pop %v2909
        %v2947 = vmul.f32 1.0, %v2946
        %v2948 = vrcp.pop %v2910
        %v2949 = vmul.f32 1.0, %v2948
        %v2950 = vrcp.pop %v2911
        %v2951 = vmul.f32 1.0, %v2950
        %v2952 = vrcp.pop %v2912
        %v2953 = vmul.f32 1.0, %v2952
        %v2954 = vrcp.pop %v2913
        %v2955 = vmul.f32 1.0, %v2954
        %v2956 = vrcp.pop %v2914
        %v2957 = vmul.f32 1.0, %v2956
        %v2958 = vrcp.pop %v2915
        %v2959 = vmul.f32 1.0, %v2958
        %v2960 = vrcp.pop %v2916
        %v2961 = vmul.f32 1.0, %v2960
        %v2962 = vrcp.pop %v2917
        %v2963 = vmul.f32 1.0, %v2962
        %v2964 = vrcp.pop %v2918
        %v2965 = vmul.f32 1.0, %v2964
        %v2966 = vrcp.pop %v2919
        %v2967 = vmul.f32 1.0, %v2966
        %v2968 = vrcp.pop %v2920
        %v2969 = vmul.f32 1.0, %v2968
        %v2970 = vrcp.pop %v2921
        %v2971 = vmul.f32 1.0, %v2970
        %v2972 = vrcp.pop %v2922
        %v2973 = vmul.f32 1.0, %v2972
        %v2974 = vrcp.pop %v2923
        %v2975 = vmul.f32 1.0, %v2974
        %v2976 = vrcp.pop %v2924
        %v2977 = vmul.f32 1.0, %v2976
        %v2978 = vrcp.pop %v2925
        %v2979 = vmul.f32 1.0, %v2978
        %v2980 = vrcp.pop %v2926
        %v2981 = vmul.f32 1.0, %v2980
        %v2982 = vrcp.pop %v2927
        %v2983 = vmul.f32 1.0, %v2982
        %v2984 = vrcp.pop %v2928
        %v2985 = vmul.f32 1.0, %v2984
        %v2986 = vrcp.pop %v2929
        %v2987 = vmul.f32 1.0, %v2986
        %v2988 = vrcp.pop %v2930
        %v2989 = vmul.f32 1.0, %v2988
        %v2990 = vrcp.pop %v2931
        %v2991 = vmul.f32 1.0, %v2990
        %v2992 = vrcp.pop %v2932
        %v2993 = vmul.f32 1.0, %v2992
        %v2994 = vrcp.pop %v2933
        %v2995 = vmul.f32 1.0, %v2994
        %v2996 = vrcp.pop %v2934
        %v2997 = vmul.f32 1.0, %v2996
        %v2998 = vrcp.pop %v2935
        %v2999 = vmul.f32 1.0, %v2998
        %v3000 = vld [vmem:[%s226] sm:$0xff]
        %v3001 = vld [vmem:[%s226 + $0x8] sm:$0xff]
        %v3002 = vld [vmem:[%s226 + $0x10] sm:$0xff]
        %v3003 = vld [vmem:[%s226 + $0x18] sm:$0xff]
        %v3004 = vld [vmem:[%s226 + $0x20] sm:$0xff]
        %v3005 = vld [vmem:[%s226 + $0x28] sm:$0xff]
        %v3006 = vld [vmem:[%s226 + $0x30] sm:$0xff]
        %v3007 = vld [vmem:[%s226 + $0x38] sm:$0xff]
        %v3008 = vld [vmem:[%s226 + $0x40] sm:$0xff]
        %v3009 = vld [vmem:[%s226 + $0x48] sm:$0xff]
        %v3010 = vld [vmem:[%s226 + $0x50] sm:$0xff]
        %v3011 = vld [vmem:[%s226 + $0x58] sm:$0xff]
        %v3012 = vld [vmem:[%s226 + $0x60] sm:$0xff]
        %v3013 = vld [vmem:[%s226 + $0x68] sm:$0xff]
        %v3014 = vld [vmem:[%s226 + $0x70] sm:$0xff]
        %v3015 = vld [vmem:[%s226 + $0x78] sm:$0xff]
        %v3016 = vld [vmem:[%s226 + $0x80] sm:$0xff]
        %v3017 = vld [vmem:[%s226 + $0x88] sm:$0xff]
        %v3018 = vld [vmem:[%s226 + $0x90] sm:$0xff]
        %v3019 = vld [vmem:[%s226 + $0x98] sm:$0xff]
        %v3020 = vld [vmem:[%s226 + $0xa0] sm:$0xff]
        %v3021 = vld [vmem:[%s226 + $0xa8] sm:$0xff]
        %v3022 = vld [vmem:[%s226 + $0xb0] sm:$0xff]
        %v3023 = vld [vmem:[%s226 + $0xb8] sm:$0xff]
        %v3024 = vld [vmem:[%s226 + $0xc0] sm:$0xff]
        %v3025 = vld [vmem:[%s226 + $0xc8] sm:$0xff]
        %v3026 = vld [vmem:[%s226 + $0xd0] sm:$0xff]
        %v3027 = vld [vmem:[%s226 + $0xd8] sm:$0xff]
        %v3028 = vld [vmem:[%s226 + $0xe0] sm:$0xff]
        %v3029 = vld [vmem:[%s226 + $0xe8] sm:$0xff]
        %v3030 = vld [vmem:[%s226 + $0xf0] sm:$0xff]
        %v3031 = vld [vmem:[%s226 + $0xf8] sm:$0xff]
        %v3032 = vmul.f32 %v3000, %v737
        %v3033 = vmul.f32 %v3001, %v737
        %v3034 = vmul.f32 %v3002, %v737
        %v3035 = vmul.f32 %v3003, %v737
        %v3036 = vmul.f32 %v3004, %v737
        %v3037 = vmul.f32 %v3005, %v737
        %v3038 = vmul.f32 %v3006, %v737
        %v3039 = vmul.f32 %v3007, %v737
        %v3040 = vmul.f32 %v3008, %v737
        %v3041 = vmul.f32 %v3009, %v737
        %v3042 = vmul.f32 %v3010, %v737
        %v3043 = vmul.f32 %v3011, %v737
        %v3044 = vmul.f32 %v3012, %v737
        %v3045 = vmul.f32 %v3013, %v737
        %v3046 = vmul.f32 %v3014, %v737
        %v3047 = vmul.f32 %v3015, %v737
        %v3048 = vmul.f32 %v3016, %v737
        %v3049 = vmul.f32 %v3017, %v737
        %v3050 = vmul.f32 %v3018, %v737
        %v3051 = vmul.f32 %v3019, %v737
        %v3052 = vmul.f32 %v3020, %v737
        %v3053 = vmul.f32 %v3021, %v737
        %v3054 = vmul.f32 %v3022, %v737
        %v3055 = vmul.f32 %v3023, %v737
        %v3056 = vmul.f32 %v3024, %v737
        %v3057 = vmul.f32 %v3025, %v737
        %v3058 = vmul.f32 %v3026, %v737
        %v3059 = vmul.f32 %v3027, %v737
        %v3060 = vmul.f32 %v3028, %v737
        %v3061 = vmul.f32 %v3029, %v737
        %v3062 = vmul.f32 %v3030, %v737
        %v3063 = vmul.f32 %v3031, %v737
        %v3064 = vmul.f32 %v3032, %v2937
        %v3065 = vmul.f32 %v3033, %v2939
        %v3066 = vmul.f32 %v3034, %v2941
        %v3067 = vmul.f32 %v3035, %v2943
        %v3068 = vmul.f32 %v3036, %v2945
        %v3069 = vmul.f32 %v3037, %v2947
        %v3070 = vmul.f32 %v3038, %v2949
        %v3071 = vmul.f32 %v3039, %v2951
        %v3072 = vmul.f32 %v3040, %v2953
        %v3073 = vmul.f32 %v3041, %v2955
        %v3074 = vmul.f32 %v3042, %v2957
        %v3075 = vmul.f32 %v3043, %v2959
        %v3076 = vmul.f32 %v3044, %v2961
        %v3077 = vmul.f32 %v3045, %v2963
        %v3078 = vmul.f32 %v3046, %v2965
        %v3079 = vmul.f32 %v3047, %v2967
        %v3080 = vmul.f32 %v3048, %v2969
        %v3081 = vmul.f32 %v3049, %v2971
        %v3082 = vmul.f32 %v3050, %v2973
        %v3083 = vmul.f32 %v3051, %v2975
        %v3084 = vmul.f32 %v3052, %v2977
        %v3085 = vmul.f32 %v3053, %v2979
        %v3086 = vmul.f32 %v3054, %v2981
        %v3087 = vmul.f32 %v3055, %v2983
        %v3088 = vmul.f32 %v3056, %v2985
        %v3089 = vmul.f32 %v3057, %v2987
        %v3090 = vmul.f32 %v3058, %v2989
        %v3091 = vmul.f32 %v3059, %v2991
        %v3092 = vmul.f32 %v3060, %v2993
        %v3093 = vmul.f32 %v3061, %v2995
        %v3094 = vmul.f32 %v3062, %v2997
        %v3095 = vmul.f32 %v3063, %v2999
        %3096 = vst.msk [vmem:[%s257] sm:$0xff] %vm290, %v3064
        %3097 = vst.msk [vmem:[%s257 + $0x8] sm:$0xff] %vm290, %v3065
        %3098 = vst.msk [vmem:[%s257 + $0x10] sm:$0xff] %vm290, %v3066
        %3099 = vst.msk [vmem:[%s257 + $0x18] sm:$0xff] %vm290, %v3067
        %3100 = vst.msk [vmem:[%s257 + $0x20] sm:$0xff] %vm290, %v3068
        %3101 = vst.msk [vmem:[%s257 + $0x28] sm:$0xff] %vm290, %v3069
        %3102 = vst.msk [vmem:[%s257 + $0x30] sm:$0xff] %vm290, %v3070
        %3103 = vst.msk [vmem:[%s257 + $0x38] sm:$0xff] %vm290, %v3071
        %3104 = vst.msk [vmem:[%s257 + $0x40] sm:$0xff] %vm290, %v3072
        %3105 = vst.msk [vmem:[%s257 + $0x48] sm:$0xff] %vm290, %v3073
        %3106 = vst.msk [vmem:[%s257 + $0x50] sm:$0xff] %vm290, %v3074
        %3107 = vst.msk [vmem:[%s257 + $0x58] sm:$0xff] %vm290, %v3075
        %3108 = vst.msk [vmem:[%s257 + $0x60] sm:$0xff] %vm290, %v3076
        %3109 = vst.msk [vmem:[%s257 + $0x68] sm:$0xff] %vm290, %v3077
        %3110 = vst.msk [vmem:[%s257 + $0x70] sm:$0xff] %vm290, %v3078
        %3111 = vst.msk [vmem:[%s257 + $0x78] sm:$0xff] %vm290, %v3079
        %3112 = vst.msk [vmem:[%s257 + $0x80] sm:$0xff] %vm290, %v3080
        %3113 = vst.msk [vmem:[%s257 + $0x88] sm:$0xff] %vm290, %v3081
        %3114 = vst.msk [vmem:[%s257 + $0x90] sm:$0xff] %vm290, %v3082
        %3115 = vst.msk [vmem:[%s257 + $0x98] sm:$0xff] %vm290, %v3083
        %3116 = vst.msk [vmem:[%s257 + $0xa0] sm:$0xff] %vm290, %v3084
        %3117 = vst.msk [vmem:[%s257 + $0xa8] sm:$0xff] %vm290, %v3085
        %3118 = vst.msk [vmem:[%s257 + $0xb0] sm:$0xff] %vm290, %v3086
        %3119 = vst.msk [vmem:[%s257 + $0xb8] sm:$0xff] %vm290, %v3087
        %3120 = vst.msk [vmem:[%s257 + $0xc0] sm:$0xff] %vm290, %v3088
        %3121 = vst.msk [vmem:[%s257 + $0xc8] sm:$0xff] %vm290, %v3089
        %3122 = vst.msk [vmem:[%s257 + $0xd0] sm:$0xff] %vm290, %v3090
        %3123 = vst.msk [vmem:[%s257 + $0xd8] sm:$0xff] %vm290, %v3091
        %3124 = vst.msk [vmem:[%s257 + $0xe0] sm:$0xff] %vm290, %v3092
        %3125 = vst.msk [vmem:[%s257 + $0xe8] sm:$0xff] %vm290, %v3093
        %3126 = vst.msk [vmem:[%s257 + $0xf0] sm:$0xff] %vm290, %v3094
        %3127 = vst.msk [vmem:[%s257 + $0xf8] sm:$0xff] %vm290, %v3095
        %s3128 = sand.u32 %s142, 1
        %s3129 = scalar_lea.sflag [#allocation6], %s3128
        %s3130 = sand.u32 %s142, 1
        %s3131 = smul.addr %s3130, 256
        %s3132 = scalar_lea.vmem [#allocation9], %s3131
        // Predicated region
        $region49: #{tpu_custom_call.1} parent=39 // pred_check
          %p3133 = pneg %p152
        $region50: #{tpu_custom_call.1} parent=39 // pred_check_branch
          %3135 = sbr.rel (%p3133) target = $region52
        $region51: #{tpu_custom_call.1} parent=39 // pred_region
          %s3137 = ssub.s32 4096, 4096
          %3138 = vsyncadd %s3129, %s3137
          %s3139 = smul.addr %s24, 32
          %s3140 = smul.addr %s3139, 128
          %s3141 = scalar_lea.hbm %s5, %s3140
          %s3142 = sshll.u32 %s3132, 4
          %s3143 = int_to_ptr.vmem [resolvable:$true] %s3142
          %3148 = dma.vmem_to_hbm [thread:$0]  %s3143, 4096, %s3141, %s3129, 128, 128, 8
        $region52: #{tpu_custom_call.1} parent=39 // pred_fallthru
          _
      $region40: #{tpu_custom_call.1} parent=5 // pred_fallthru
        _
      %p3149 = scmp.le.s32.totalorder 2, %s19
      // Predicated region
      $region53: #{tpu_custom_call.1} parent=5 // pred_check
        %p3150 = pneg %p3149
      $region54: #{tpu_custom_call.1} parent=5 // pred_check_branch
        %3152 = sbr.rel (%p3150) target = $region56
      $region55: #{tpu_custom_call.1} parent=5 // pred_region
        %s3153 = ssub.s32 %s19, 2
        // Predicated region
        $region57: #{tpu_custom_call.1} parent=55 // pred_check
          %p3154 = pneg %p158
        $region58: #{tpu_custom_call.1} parent=55 // pred_check_branch
          %3156 = sbr.rel (%p3154) target = $region60
        $region59: #{tpu_custom_call.1} parent=55 // pred_region
          %s3157 = sand.u32 %s143, 1
          %s3158 = scalar_lea.sflag [#allocation6], %s3157
          %s3159 = sand.u32 %s143, 1
          %s3160 = smul.addr %s3159, 256
          %s3161 = scalar_lea.vmem [#allocation9], %s3160
          %3162 = dma.done %s3158, 4096
        $region60: #{tpu_custom_call.1} parent=55 // pred_fallthru
          _
      $region56: #{tpu_custom_call.1} parent=5 // pred_fallthru
        _
    $region6: #{tpu_custom_call.1} parent=1 // loop_footer
      %s23 = sadd.s32 1, %s19
    $region7: #{tpu_custom_call.1} parent=1 // loop_footer_branch
      %18 = sbr.rel target = $region3
    $region8: #{tpu_custom_call.1} parent=1 // loop_exit
      _
    %3163 = vsyncpa [#allocation5], 1
    %s3164 = scalar_lea.sflag [#allocation5], 1
    %3165 = vsyncpa %s3164, 1
    %3166 = vsyncpa [#allocation6], 1
    %s3167 = scalar_lea.sflag [#allocation6], 1
    %3168 = vsyncpa %s3167, 1
    %3169 = vsyncpa [#allocation7], 1
    %s3170 = scalar_lea.sflag [#allocation7], 1
    %3171 = vsyncpa %s3170, 1

</llo_original>
